<compile_context>
chip_gen: v6e
topology: v6e:2x2x1
jax: 0.10.0
libtpu: 0.0.40
codegen_flags: <defaults>
</compile_context>

<pallas_src>
import jax
import jax.numpy as jnp
from jax.experimental import pallas as pl
from jax.experimental.pallas import tpu as pltpu

LRELU_SLOPE = 0.2
BN_EPS = 1e-5


# ----------------------------- Pallas kernels ------------------------------ #

def _mm_lrelu_kernel(a_ref, w_ref, b_ref, o_ref):
    # o = LeakyReLU(a @ w + b); bf16 matmul inputs, f32 accumulate, f32 epilogue.
    y = jnp.dot(a_ref[...], w_ref[...], preferred_element_type=jnp.float32)
    y = y + b_ref[...]
    y = jnp.maximum(y, LRELU_SLOPE * y)          # LeakyReLU(0.2)
    o_ref[...] = y.astype(o_ref.dtype)


def _mm_bn_lrelu_kernel(a_ref, w_ref, b_ref, g_ref, beta_ref, o_ref):
    # o = LeakyReLU(BN(a @ w + b)); training-mode BN: per-column stats over the
    # full M rows (batch*spatial), biased variance. Epilogue kept in f32.
    y = jnp.dot(a_ref[...], w_ref[...], preferred_element_type=jnp.float32)
    y = y + b_ref[...]
    mu = jnp.mean(y, axis=0, keepdims=True)
    var = jnp.mean((y - mu) ** 2, axis=0, keepdims=True)
    y = g_ref[...] * (y - mu) * jax.lax.rsqrt(var + BN_EPS) + beta_ref[...]
    y = jnp.maximum(y, LRELU_SLOPE * y)
    o_ref[...] = y.astype(o_ref.dtype)


def _fc_fused_kernel(a_ref, w1_ref, b1_ref, g1_ref, beta1_ref,
                     w2_ref, b2_ref, o_ref, acc_ref):
    # Grid axis j tiles fc1's output features (fc2's contraction axis).
    # Each step: y = LeakyReLU(BN1d(a @ w1_tile + b1_tile))   (f32 epilogue)
    #            acc += y @ w2_rows_tile                      (f32 accumulator)
    # Last step: logits = acc + b2  -> lane-dense (M, 128) store.
    j = pl.program_id(0)

    @pl.when(j == 0)
    def _():
        acc_ref[...] = jnp.zeros_like(acc_ref)

    y = jnp.dot(a_ref[...], w1_ref[...], preferred_element_type=jnp.float32)
    y = y + b1_ref[...]
    mu = jnp.mean(y, axis=0, keepdims=True)
    var = jnp.mean((y - mu) ** 2, axis=0, keepdims=True)
    y = g1_ref[...] * (y - mu) * jax.lax.rsqrt(var + BN_EPS) + beta1_ref[...]
    y = jnp.maximum(y, LRELU_SLOPE * y)

    acc_ref[...] += jnp.dot(y.astype(jnp.bfloat16), w2_ref[...],
                            preferred_element_type=jnp.float32)

    @pl.when(j == pl.num_programs(0) - 1)
    def _():
        o_ref[...] = acc_ref[...] + b2_ref[...]


# ----------------------------- Pallas wrappers ------------------------------ #

def conv_mm_lrelu(a, w, b, *, tm=128, tn=128):
    """LeakyReLU(a @ w + b) with an M-tiled 'parallel' grid (no BN)."""
    M, K = a.shape
    N = w.shape[1]
    tm = min(tm, M)
    if M % tm != 0:
        tm = M
    tn = min(tn, N)
    if N % tn != 0:
        tn = N
    grid = (M // tm, N // tn)
    return pl.pallas_call(
        _mm_lrelu_kernel,
        out_shape=jax.ShapeDtypeStruct((M, N), jnp.bfloat16),
        grid=grid,
        in_specs=[
            pl.BlockSpec((tm, K), lambda i, j: (i, 0)),
            pl.BlockSpec((K, tn), lambda i, j: (0, j)),
            pl.BlockSpec((1, tn), lambda i, j: (0, j)),
        ],
        out_specs=pl.BlockSpec((tm, tn), lambda i, j: (i, j)),
        compiler_params=pltpu.CompilerParams(
            dimension_semantics=("parallel", "parallel")),
    )(a, w, b)


def conv_mm_bn_lrelu(a, w, b, g, beta, *, tn=128):
    """LeakyReLU(BN(a @ w + b)); full-M blocks (BN stats need every row)."""
    M, K = a.shape
    N = w.shape[1]
    tn = min(tn, N)
    if N % tn != 0:
        tn = N
    grid = (N // tn,)
    return pl.pallas_call(
        _mm_bn_lrelu_kernel,
        out_shape=jax.ShapeDtypeStruct((M, N), jnp.bfloat16),
        grid=grid,
        in_specs=[
            pl.BlockSpec((M, K), lambda j: (0, 0)),
            pl.BlockSpec((K, tn), lambda j: (0, j)),
            pl.BlockSpec((1, tn), lambda j: (0, j)),
            pl.BlockSpec((1, tn), lambda j: (0, j)),
            pl.BlockSpec((1, tn), lambda j: (0, j)),
        ],
        out_specs=pl.BlockSpec((M, tn), lambda j: (0, j)),
        compiler_params=pltpu.CompilerParams(
            dimension_semantics=("parallel",)),
    )(a, w, b, g, beta)


def fused_fc(a, w1, b1, g1, beta1, w2, b2, *, tn=512):
    """logits = (LeakyReLU(BN1d(a @ w1 + b1))) @ w2 + b2, in ONE pallas_call."""
    M, K1 = a.shape
    N1 = w1.shape[1]
    Nout = w2.shape[1]
    tn = min(tn, N1)
    if N1 % tn != 0:
        tn = N1
    grid = (N1 // tn,)
    return pl.pallas_call(
        _fc_fused_kernel,
        out_shape=jax.ShapeDtypeStruct((M, Nout), jnp.float32),
        grid=grid,
        in_specs=[
            pl.BlockSpec((M, K1), lambda j: (0, 0)),     # activations (full)
            pl.BlockSpec((K1, tn), lambda j: (0, j)),    # fc1 weight tile
            pl.BlockSpec((1, tn), lambda j: (0, j)),     # fc1 bias tile
            pl.BlockSpec((1, tn), lambda j: (0, j)),     # bn1 gamma tile
            pl.BlockSpec((1, tn), lambda j: (0, j)),     # bn1 beta tile
            pl.BlockSpec((tn, Nout), lambda j: (j, 0)),  # fc2 weight row-tile
            pl.BlockSpec((1, Nout), lambda j: (0, 0)),   # fc2 bias
        ],
        out_specs=pl.BlockSpec((M, Nout), lambda j: (0, 0)),
        scratch_shapes=[pltpu.VMEM((M, Nout), jnp.float32)],
        compiler_params=pltpu.CompilerParams(
            dimension_semantics=("arbitrary",)),         # accumulator axis
    )(a, w1, b1, g1, beta1, w2, b2)


# ------------------------------- JAX glue ---------------------------------- #

def im2col(x_nhwc, kh, kw, stride, pad):
    """Extract conv patches -> (B*OH*OW, KH*KW*C); patch order (kh, kw, c)."""
    x = jnp.pad(x_nhwc, ((0, 0), (pad, pad), (pad, pad), (0, 0)))
    B, H, W, C = x.shape
    oh = (H - kh) // stride + 1
    ow = (W - kw) // stride + 1
    cols = []
    for i in range(kh):
        for j in range(kw):
            cols.append(x[:, i:i + stride * oh:stride, j:j + stride * ow:stride, :])
    p = jnp.stack(cols, axis=3)                       # (B, oh, ow, kh*kw, C)
    return p.reshape(B * oh * ow, kh * kw * C), (B, oh, ow)


def conv_weight_to_matrix(w_oihw):
    """(OC, C, KH, KW) -> (KH*KW*C, OC), matching im2col patch ordering."""
    oc = w_oihw.shape[0]
    return jnp.transpose(w_oihw, (0, 2, 3, 1)).reshape(oc, -1).T


def init_params(key, input_dim=1, output_dim=1, input_size=16,
                len_discrete_code=10, len_continuous_code=2):
    """PyTorch-layout parameters (same shapes/order as the nn.Module)."""
    ks = jax.random.split(key, 6)
    feat = 128 * (input_size // 4) * (input_size // 4)
    out_total = output_dim + len_continuous_code + len_discrete_code
    f32 = jnp.float32
    return {
        "conv1_w": 0.02 * jax.random.normal(ks[0], (64, input_dim, 4, 4), f32),
        "conv1_b": jnp.zeros((64,), f32),
        "conv2_w": 0.02 * jax.random.normal(ks[1], (128, 64, 4, 4), f32),
        "conv2_b": jnp.zeros((128,), f32),
        "bn2_g": 1.0 + 0.02 * jax.random.normal(ks[2], (128,), f32),
        "bn2_b": jnp.zeros((128,), f32),
        "fc1_w": 0.02 * jax.random.normal(ks[3], (feat, 1024), f32),
        "fc1_b": jnp.zeros((1024,), f32),
        "bn1_g": 1.0 + 0.02 * jax.random.normal(ks[4], (1024,), f32),
        "bn1_b": jnp.zeros((1024,), f32),
        "fc2_w": 0.02 * jax.random.normal(ks[5], (feat and 1024, out_total), f32),
        "fc2_b": jnp.zeros((out_total,), f32),
    }


def prepare_params(params, *, input_size=16, output_dim=1,
                   len_discrete_code=10, len_continuous_code=2):
    """One-time conversion to Pallas-friendly layout:
       - conv1 OC zero-padded 64->128 (lane-dense stores); conv2 in-ch padded to match
       - fc1 weight rows permuted from PyTorch (C,H,W)-flatten to NHWC (H,W,C)-flatten
       - fc2 output zero-padded 13->128 (lane-dense stores); logits sliced outside
       - matmul operands cast to bf16 (f32 accumulation in-kernel); BN params stay f32
    """
    bf16, f32 = jnp.bfloat16, jnp.float32
    oc1, oc1_pad = params["conv1_w"].shape[0], 128

    conv1_w = jnp.pad(params["conv1_w"],
                      ((0, oc1_pad - oc1), (0, 0), (0, 0), (0, 0)))
    conv1_b = jnp.pad(params["conv1_b"], (0, oc1_pad - oc1))
    conv2_w = jnp.pad(params["conv2_w"],
                      ((0, 0), (0, oc1_pad - oc1), (0, 0), (0, 0)))

    # fc1 row permutation: NHWC flat index (h,w,c) -> PyTorch CHW flat index.
    s4 = input_size // 4
    c2 = 128
    perm = jnp.arange(c2 * s4 * s4).reshape(c2, s4, s4).transpose(1, 2, 0).reshape(-1)
    fc1_w = params["fc1_w"][perm]

    n_out = output_dim + len_continuous_code + len_discrete_code
    n_pad = 128
    fc2_w = jnp.pad(params["fc2_w"], ((0, 0), (0, n_pad - n_out)))
    fc2_b = jnp.pad(params["fc2_b"], (0, n_pad - n_out))

    return {
        "conv1_wm": conv_weight_to_matrix(conv1_w).astype(bf16),   # (16*Cin, 128)
        "conv1_b": conv1_b.reshape(1, -1).astype(f32),
        "conv2_wm": conv_weight_to_matrix(conv2_w).astype(bf16),   # (2048, 128)
        "conv2_b": params["conv2_b"].reshape(1, -1).astype(f32),
        "bn2_g": params["bn2_g"].reshape(1, -1).astype(f32),
        "bn2_b": params["bn2_b"].reshape(1, -1).astype(f32),
        "fc1_w": fc1_w.astype(bf16),                               # (feat, 1024)
        "fc1_b": params["fc1_b"].reshape(1, -1).astype(f32),
        "bn1_g": params["bn1_g"].reshape(1, -1).astype(f32),
        "bn1_b": params["bn1_b"].reshape(1, -1).astype(f32),
        "fc2_w": fc2_w.astype(bf16),                               # (1024, 128)
        "fc2_b": fc2_b.reshape(1, -1).astype(f32),
    }


def discriminator_forward(prep, x_nchw, *, output_dim=1,
                          len_discrete_code=10, len_continuous_code=2):
    B = x_nchw.shape[0]
    x = jnp.transpose(x_nchw, (0, 2, 3, 1)).astype(jnp.bfloat16)   # NCHW -> NHWC

    # conv1 (Cin->64, zero-padded to 128, k4 s2 p1) + LeakyReLU(0.2)
    cols1, (_, oh1, ow1) = im2col(x, 4, 4, 2, 1)
    y1 = conv_mm_lrelu(cols1, prep["conv1_wm"], prep["conv1_b"], tm=64)
    y1 = y1.reshape(B, oh1, ow1, prep["conv1_wm"].shape[1])

    # conv2 (128->128, k4 s2 p1) + BatchNorm2d(128) + LeakyReLU(0.2)
    cols2, (_, oh2, ow2) = im2col(y1, 4, 4, 2, 1)
    y2 = conv_mm_bn_lrelu(cols2, prep["conv2_wm"], prep["conv2_b"],
                          prep["bn2_g"], prep["bn2_b"])

    # NHWC flatten; fc1 weight rows were permuted once to match (no transpose).
    y2 = y2.reshape(B, oh2 * ow2 * y2.shape[-1])

    # fc1 + BatchNorm1d(1024) + LeakyReLU(0.2) + fc2 -- one fused pallas_call.
    logits = fused_fc(y2, prep["fc1_w"], prep["fc1_b"],
                      prep["bn1_g"], prep["bn1_b"],
                      prep["fc2_w"], prep["fc2_b"], tn=512)

    n_out = output_dim + len_continuous_code + len_discrete_code
    logits = logits[:, :n_out]                       # drop zero-padded columns

    # matches PyTorch exactly: a = sigmoid(x[:, output_dim]) (column index 1)
    a = jax.nn.sigmoid(logits[:, output_dim])
    b = logits[:, output_dim:output_dim + len_continuous_code]
    c = logits[:, output_dim + len_continuous_code:]
    return a, b, c


if __name__ == "__main__":
    key = jax.random.PRNGKey(0)
    kx, kp = jax.random.split(key)

    B, input_dim, input_size = 2, 1, 16
    x = jax.random.normal(kx, (B, input_dim, input_size, input_size), jnp.float32)
    params = init_params(kp, input_dim=input_dim, input_size=input_size)
    prep = prepare_params(params, input_size=input_size)

    fwd = jax.jit(discriminator_forward)
    a, b, c = fwd(prep, x)
    jax.block_until_ready((a, b, c))

    assert a.shape == (B,), a.shape
    assert b.shape == (B, 2), b.shape
    assert c.shape == (B, 10), c.shape
    assert bool(jnp.all(jnp.isfinite(a)))
    assert bool(jnp.all(jnp.isfinite(b)))
    assert bool(jnp.all(jnp.isfinite(c)))
    print("KERNEL_OK")
</pallas_src>

<mosaic_0001>
module attributes {stable_mosaic.version = 11 : i64} {
  func.func @_mm_lrelu_kernel(%arg0: i32, %arg1: i32, %arg2: memref<64x16xbf16, #tpu.memory_space<vmem>>, %arg3: memref<16x128xbf16, #tpu.memory_space<vmem>>, %arg4: memref<1x128xf32, #tpu.memory_space<vmem>>, %arg5: memref<64x128xbf16, #tpu.memory_space<vmem>>) attributes {dimension_semantics = [#tpu.dimension_semantics<parallel>, #tpu.dimension_semantics<parallel>], iteration_bounds = array<i64: 2, 1>, scalar_prefetch = 0 : i64, scratch_operands = 0 : i64, tpu.core_type = #tpu.core_type<tc>, window_params = [{transform_indices = @transform_0, window_bounds = array<i64: 64, 16>}, {transform_indices = @transform_1, window_bounds = array<i64: 16, 128>}, {transform_indices = @transform_2, window_bounds = array<i64: 1, 128>}, {transform_indices = @transform_3, window_bounds = array<i64: 64, 128>}]} {
    %c0 = arith.constant 0 : index
    %c0_0 = arith.constant 0 : index
    %0 = vector.load %arg2[%c0, %c0_0] : memref<64x16xbf16, #tpu.memory_space<vmem>>, vector<64x16xbf16>
    %c0_1 = arith.constant 0 : index
    %c0_2 = arith.constant 0 : index
    %1 = vector.load %arg3[%c0_1, %c0_2] : memref<16x128xbf16, #tpu.memory_space<vmem>>, vector<16x128xbf16>
    %cst = arith.constant dense<0.000000e+00> : vector<64x128xf32>
    %2 = tpu.matmul %0, %1, %cst {dimension_numbers = #tpu.dot_dimension_numbers<[1], [0], [0], [1], [0, 0, 1, 1], [], []>} : vector<64x16xbf16>, vector<16x128xbf16>, vector<64x128xf32> -> vector<64x128xf32>
    %c0_3 = arith.constant 0 : index
    %c0_4 = arith.constant 0 : index
    %3 = vector.load %arg4[%c0_3, %c0_4] : memref<1x128xf32, #tpu.memory_space<vmem>>, vector<1x128xf32>
    %4 = vector.broadcast %3 : vector<1x128xf32> to vector<64x128xf32>
    %5 = arith.addf %2, %4 : vector<64x128xf32>
    %cst_5 = arith.constant 2.000000e-01 : f32
    %6 = vector.broadcast %cst_5 : f32 to vector<64x128xf32>
    %7 = arith.mulf %6, %5 : vector<64x128xf32>
    %8 = arith.maximumf %5, %7 : vector<64x128xf32>
    %9 = arith.truncf %8 : vector<64x128xf32> to vector<64x128xbf16>
    %c0_6 = arith.constant 0 : index
    %c0_7 = arith.constant 0 : index
    %10 = vector.load %arg5[%c0_6, %c0_7] : memref<64x128xbf16, #tpu.memory_space<vmem>>, vector<64x128xbf16>
    tpu.vector_store %arg5[%c0_6, %c0_7], %9 {strides = array<i32>} : memref<64x128xbf16, #tpu.memory_space<vmem>>, vector<64x128xbf16>,
    return
  }
  func.func @transform_0(%arg0: i32, %arg1: i32) -> (i32, i32) {
    %c0_i32 = arith.constant 0 : i32
    %c0_i32_0 = arith.constant 0 : i32
    return %arg0, %c0_i32 : i32, i32
  }
  func.func @transform_1(%arg0: i32, %arg1: i32) -> (i32, i32) {
    %c0_i32 = arith.constant 0 : i32
    %c0_i32_0 = arith.constant 0 : i32
    return %c0_i32, %arg1 : i32, i32
  }
  func.func @transform_2(%arg0: i32, %arg1: i32) -> (i32, i32) {
    %c0_i32 = arith.constant 0 : i32
    %c0_i32_0 = arith.constant 0 : i32
    return %c0_i32, %arg1 : i32, i32
  }
  func.func @transform_3(%arg0: i32, %arg1: i32) -> (i32, i32) {
    %c0_i32 = arith.constant 0 : i32
    return %arg0, %arg1 : i32, i32
  }
}

module attributes {stable_mosaic.version = 11 : i64} {
  func.func @_mm_bn_lrelu_kernel(%arg0: i32, %arg1: memref<32x2048xbf16, #tpu.memory_space<vmem>>, %arg2: memref<2048x128xbf16, #tpu.memory_space<vmem>>, %arg3: memref<1x128xf32, #tpu.memory_space<vmem>>, %arg4: memref<1x128xf32, #tpu.memory_space<vmem>>, %arg5: memref<1x128xf32, #tpu.memory_space<vmem>>, %arg6: memref<32x128xbf16, #tpu.memory_space<vmem>>) attributes {dimension_semantics = [#tpu.dimension_semantics<parallel>], iteration_bounds = array<i64: 1>, scalar_prefetch = 0 : i64, scratch_operands = 0 : i64, tpu.core_type = #tpu.core_type<tc>, window_params = [{pipeline_mode = #tpu.pipeline_mode<synchronous>, transform_indices = @transform_0, window_bounds = array<i64: 32, 2048>}, {transform_indices = @transform_1, window_bounds = array<i64: 2048, 128>}, {transform_indices = @transform_2, window_bounds = array<i64: 1, 128>}, {transform_indices = @transform_3, window_bounds = array<i64: 1, 128>}, {transform_indices = @transform_4, window_bounds = array<i64: 1, 128>}, {transform_indices = @transform_5, window_bounds = array<i64: 32, 128>}]} {
    %c0 = arith.constant 0 : index
    %c0_0 = arith.constant 0 : index
    %0 = vector.load %arg1[%c0, %c0_0] : memref<32x2048xbf16, #tpu.memory_space<vmem>>, vector<32x2048xbf16>
    %c0_1 = arith.constant 0 : index
    %c0_2 = arith.constant 0 : index
    %1 = vector.load %arg2[%c0_1, %c0_2] : memref<2048x128xbf16, #tpu.memory_space<vmem>>, vector<2048x128xbf16>
    %cst = arith.constant dense<0.000000e+00> : vector<32x128xf32>
    %2 = tpu.matmul %0, %1, %cst {dimension_numbers = #tpu.dot_dimension_numbers<[1], [0], [0], [1], [0, 0, 1, 1], [], []>} : vector<32x2048xbf16>, vector<2048x128xbf16>, vector<32x128xf32> -> vector<32x128xf32>
    %c0_3 = arith.constant 0 : index
    %c0_4 = arith.constant 0 : index
    %3 = vector.load %arg3[%c0_3, %c0_4] : memref<1x128xf32, #tpu.memory_space<vmem>>, vector<1x128xf32>
    %4 = vector.broadcast %3 : vector<1x128xf32> to vector<32x128xf32>
    %5 = arith.addf %2, %4 : vector<32x128xf32>
    %cst_5 = arith.constant dense<0.000000e+00> : vector<128xf32>
    %6 = vector.multi_reduction <add>, %5, %cst_5 [0] : vector<32x128xf32> to vector<128xf32>
    %7 = vector.shape_cast %6 : vector<128xf32> to vector<1x128xf32>
    %cst_6 = arith.constant 3.200000e+01 : f32
    %8 = vector.broadcast %cst_6 : f32 to vector<1x128xf32>
    %9 = arith.divf %7, %8 : vector<1x128xf32>
    %10 = vector.broadcast %9 : vector<1x128xf32> to vector<32x128xf32>
    %11 = arith.subf %5, %10 : vector<32x128xf32>
    %12 = arith.mulf %11, %11 : vector<32x128xf32>
    %cst_7 = arith.constant dense<0.000000e+00> : vector<128xf32>
    %13 = vector.multi_reduction <add>, %12, %cst_7 [0] : vector<32x128xf32> to vector<128xf32>
    %14 = vector.shape_cast %13 : vector<128xf32> to vector<1x128xf32>
    %cst_8 = arith.constant 3.200000e+01 : f32
    %15 = vector.broadcast %cst_8 : f32 to vector<1x128xf32>
    %16 = arith.divf %14, %15 : vector<1x128xf32>
    %c0_9 = arith.constant 0 : index
    %c0_10 = arith.constant 0 : index
    %17 = vector.load %arg4[%c0_9, %c0_10] : memref<1x128xf32, #tpu.memory_space<vmem>>, vector<1x128xf32>
    %18 = vector.broadcast %9 : vector<1x128xf32> to vector<32x128xf32>
    %19 = arith.subf %5, %18 : vector<32x128xf32>
    %20 = vector.broadcast %17 : vector<1x128xf32> to vector<32x128xf32>
    %21 = arith.mulf %20, %19 : vector<32x128xf32>
    %cst_11 = arith.constant 9.99999974E-6 : f32
    %22 = vector.broadcast %cst_11 : f32 to vector<1x128xf32>
    %23 = arith.addf %16, %22 : vector<1x128xf32>
    %24 = math.rsqrt %23 : vector<1x128xf32>
    %25 = vector.broadcast %24 : vector<1x128xf32> to vector<32x128xf32>
    %26 = arith.mulf %21, %25 : vector<32x128xf32>
    %c0_12 = arith.constant 0 : index
    %c0_13 = arith.constant 0 : index
    %27 = vector.load %arg5[%c0_12, %c0_13] : memref<1x128xf32, #tpu.memory_space<vmem>>, vector<1x128xf32>
    %28 = vector.broadcast %27 : vector<1x128xf32> to vector<32x128xf32>
    %29 = arith.addf %26, %28 : vector<32x128xf32>
    %cst_14 = arith.constant 2.000000e-01 : f32
    %30 = vector.broadcast %cst_14 : f32 to vector<32x128xf32>
    %31 = arith.mulf %30, %29 : vector<32x128xf32>
    %32 = arith.maximumf %29, %31 : vector<32x128xf32>
    %33 = arith.truncf %32 : vector<32x128xf32> to vector<32x128xbf16>
    %c0_15 = arith.constant 0 : index
    %c0_16 = arith.constant 0 : index
    %34 = vector.load %arg6[%c0_15, %c0_16] : memref<32x128xbf16, #tpu.memory_space<vmem>>, vector<32x128xbf16>
    tpu.vector_store %arg6[%c0_15, %c0_16], %33 {strides = array<i32>} : memref<32x128xbf16, #tpu.memory_space<vmem>>, vector<32x128xbf16>,
    return
  }
  func.func @transform_0(%arg0: i32) -> (i32, i32) {
    %c0_i32 = arith.constant 0 : i32
    %c0_i32_0 = arith.constant 0 : i32
    %c0_i32_1 = arith.constant 0 : i32
    return %c0_i32, %c0_i32_0 : i32, i32
  }
  func.func @transform_1(%arg0: i32) -> (i32, i32) {
    %c0_i32 = arith.constant 0 : i32
    %c0_i32_0 = arith.constant 0 : i32
    return %c0_i32, %arg0 : i32, i32
  }
  func.func @transform_2(%arg0: i32) -> (i32, i32) {
    %c0_i32 = arith.constant 0 : i32
    %c0_i32_0 = arith.constant 0 : i32
    return %c0_i32, %arg0 : i32, i32
  }
  func.func @transform_3(%arg0: i32) -> (i32, i32) {
    %c0_i32 = arith.constant 0 : i32
    %c0_i32_0 = arith.constant 0 : i32
    return %c0_i32, %arg0 : i32, i32
  }
  func.func @transform_4(%arg0: i32) -> (i32, i32) {
    %c0_i32 = arith.constant 0 : i32
    %c0_i32_0 = arith.constant 0 : i32
    return %c0_i32, %arg0 : i32, i32
  }
  func.func @transform_5(%arg0: i32) -> (i32, i32) {
    %c0_i32 = arith.constant 0 : i32
    %c0_i32_0 = arith.constant 0 : i32
    return %c0_i32, %arg0 : i32, i32
  }
}

module attributes {stable_mosaic.version = 11 : i64} {
  func.func @_fc_fused_kernel(%arg0: i32, %arg1: memref<2x2048xbf16, #tpu.memory_space<vmem>>, %arg2: memref<2048x512xbf16, #tpu.memory_space<vmem>>, %arg3: memref<1x512xf32, #tpu.memory_space<vmem>>, %arg4: memref<1x512xf32, #tpu.memory_space<vmem>>, %arg5: memref<1x512xf32, #tpu.memory_space<vmem>>, %arg6: memref<512x128xbf16, #tpu.memory_space<vmem>>, %arg7: memref<1x128xf32, #tpu.memory_space<vmem>>, %arg8: memref<2x128xf32, #tpu.memory_space<vmem>>, %arg9: memref<2x128xf32, #tpu.memory_space<vmem>>) attributes {dimension_semantics = [#tpu.dimension_semantics<arbitrary>], iteration_bounds = array<i64: 2>, scalar_prefetch = 0 : i64, scratch_operands = 1 : i64, tpu.core_type = #tpu.core_type<tc>, window_params = [{pipeline_mode = #tpu.pipeline_mode<synchronous>, transform_indices = @transform_0, window_bounds = array<i64: 2, 2048>}, {transform_indices = @transform_1, window_bounds = array<i64: 2048, 512>}, {transform_indices = @transform_2, window_bounds = array<i64: 1, 512>}, {transform_indices = @transform_3, window_bounds = array<i64: 1, 512>}, {transform_indices = @transform_4, window_bounds = array<i64: 1, 512>}, {transform_indices = @transform_5, window_bounds = array<i64: 512, 128>}, {pipeline_mode = #tpu.pipeline_mode<synchronous>, transform_indices = @transform_6, window_bounds = array<i64: 1, 128>}, {pipeline_mode = #tpu.pipeline_mode<synchronous>, transform_indices = @transform_7, window_bounds = array<i64: 2, 128>}]} {
    %c0_i32 = arith.constant 0 : i32
    %0 = arith.cmpi eq, %arg0, %c0_i32 : i32
    %1 = arith.extui %0 : i1 to i32
    %c0_i32_0 = arith.constant 0 : i32
    %2 = arith.cmpi ne, %1, %c0_i32_0 : i32
    scf.if %2 {
      %cst_24 = arith.constant 0.000000e+00 : f32
      %45 = vector.broadcast %cst_24 : f32 to vector<2x128xf32>
      %c0_25 = arith.constant 0 : index
      %c0_26 = arith.constant 0 : index
      %46 = vector.load %arg9[%c0_25, %c0_26] : memref<2x128xf32, #tpu.memory_space<vmem>>, vector<2x128xf32>
      tpu.vector_store %arg9[%c0_25, %c0_26], %45 {strides = array<i32>} : memref<2x128xf32, #tpu.memory_space<vmem>>, vector<2x128xf32>,
    } else {
    }
    %c0 = arith.constant 0 : index
    %c0_1 = arith.constant 0 : index
    %3 = vector.load %arg1[%c0, %c0_1] : memref<2x2048xbf16, #tpu.memory_space<vmem>>, vector<2x2048xbf16>
    %c0_2 = arith.constant 0 : index
    %c0_3 = arith.constant 0 : index
    %4 = vector.load %arg2[%c0_2, %c0_3] : memref<2048x512xbf16, #tpu.memory_space<vmem>>, vector<2048x512xbf16>
    %cst = arith.constant dense<0.000000e+00> : vector<2x512xf32>
    %5 = tpu.matmul %3, %4, %cst {dimension_numbers = #tpu.dot_dimension_numbers<[1], [0], [0], [1], [0, 0, 1, 1], [], []>} : vector<2x2048xbf16>, vector<2048x512xbf16>, vector<2x512xf32> -> vector<2x512xf32>
    %c0_4 = arith.constant 0 : index
    %c0_5 = arith.constant 0 : index
    %6 = vector.load %arg3[%c0_4, %c0_5] : memref<1x512xf32, #tpu.memory_space<vmem>>, vector<1x512xf32>
    %7 = vector.broadcast %6 : vector<1x512xf32> to vector<2x512xf32>
    %8 = arith.addf %5, %7 : vector<2x512xf32>
    %cst_6 = arith.constant dense<0.000000e+00> : vector<512xf32>
    %9 = vector.multi_reduction <add>, %8, %cst_6 [0] : vector<2x512xf32> to vector<512xf32>
    %10 = vector.shape_cast %9 : vector<512xf32> to vector<1x512xf32>
    %cst_7 = arith.constant 2.000000e+00 : f32
    %11 = vector.broadcast %cst_7 : f32 to vector<1x512xf32>
    %12 = arith.divf %10, %11 : vector<1x512xf32>
    %13 = vector.broadcast %12 : vector<1x512xf32> to vector<2x512xf32>
    %14 = arith.subf %8, %13 : vector<2x512xf32>
    %15 = arith.mulf %14, %14 : vector<2x512xf32>
    %cst_8 = arith.constant dense<0.000000e+00> : vector<512xf32>
    %16 = vector.multi_reduction <add>, %15, %cst_8 [0] : vector<2x512xf32> to vector<512xf32>
    %17 = vector.shape_cast %16 : vector<512xf32> to vector<1x512xf32>
    %cst_9 = arith.constant 2.000000e+00 : f32
    %18 = vector.broadcast %cst_9 : f32 to vector<1x512xf32>
    %19 = arith.divf %17, %18 : vector<1x512xf32>
    %c0_10 = arith.constant 0 : index
    %c0_11 = arith.constant 0 : index
    %20 = vector.load %arg4[%c0_10, %c0_11] : memref<1x512xf32, #tpu.memory_space<vmem>>, vector<1x512xf32>
    %21 = vector.broadcast %12 : vector<1x512xf32> to vector<2x512xf32>
    %22 = arith.subf %8, %21 : vector<2x512xf32>
    %23 = vector.broadcast %20 : vector<1x512xf32> to vector<2x512xf32>
    %24 = arith.mulf %23, %22 : vector<2x512xf32>
    %cst_12 = arith.constant 9.99999974E-6 : f32
    %25 = vector.broadcast %cst_12 : f32 to vector<1x512xf32>
    %26 = arith.addf %19, %25 : vector<1x512xf32>
    %27 = math.rsqrt %26 : vector<1x512xf32>
    %28 = vector.broadcast %27 : vector<1x512xf32> to vector<2x512xf32>
    %29 = arith.mulf %24, %28 : vector<2x512xf32>
    %c0_13 = arith.constant 0 : index
    %c0_14 = arith.constant 0 : index
    %30 = vector.load %arg5[%c0_13, %c0_14] : memref<1x512xf32, #tpu.memory_space<vmem>>, vector<1x512xf32>
    %31 = vector.broadcast %30 : vector<1x512xf32> to vector<2x512xf32>
    %32 = arith.addf %29, %31 : vector<2x512xf32>
    %cst_15 = arith.constant 2.000000e-01 : f32
    %33 = vector.broadcast %cst_15 : f32 to vector<2x512xf32>
    %34 = arith.mulf %33, %32 : vector<2x512xf32>
    %35 = arith.maximumf %32, %34 : vector<2x512xf32>
    %c0_16 = arith.constant 0 : index
    %c0_17 = arith.constant 0 : index
    %36 = vector.load %arg9[%c0_16, %c0_17] : memref<2x128xf32, #tpu.memory_space<vmem>>, vector<2x128xf32>
    %37 = arith.truncf %35 : vector<2x512xf32> to vector<2x512xbf16>
    %c0_18 = arith.constant 0 : index
    %c0_19 = arith.constant 0 : index
    %38 = vector.load %arg6[%c0_18, %c0_19] : memref<512x128xbf16, #tpu.memory_space<vmem>>, vector<512x128xbf16>
    %cst_20 = arith.constant dense<0.000000e+00> : vector<2x128xf32>
    %39 = tpu.matmul %37, %38, %cst_20 {dimension_numbers = #tpu.dot_dimension_numbers<[1], [0], [0], [1], [0, 0, 1, 1], [], []>} : vector<2x512xbf16>, vector<512x128xbf16>, vector<2x128xf32> -> vector<2x128xf32>
    %40 = arith.addf %36, %39 : vector<2x128xf32>
    %c0_21 = arith.constant 0 : index
    %c0_22 = arith.constant 0 : index
    %41 = vector.load %arg9[%c0_21, %c0_22] : memref<2x128xf32, #tpu.memory_space<vmem>>, vector<2x128xf32>
    tpu.vector_store %arg9[%c0_21, %c0_22], %40 {strides = array<i32>} : memref<2x128xf32, #tpu.memory_space<vmem>>, vector<2x128xf32>,
    %c1_i32 = arith.constant 1 : i32
    %42 = arith.cmpi eq, %arg0, %c1_i32 : i32
    %43 = arith.extui %42 : i1 to i32
    %c0_i32_23 = arith.constant 0 : i32
    %44 = arith.cmpi ne, %43, %c0_i32_23 : i32
    scf.if %44 {
      %c0_24 = arith.constant 0 : index
      %c0_25 = arith.constant 0 : index
      %45 = vector.load %arg9[%c0_24, %c0_25] : memref<2x128xf32, #tpu.memory_space<vmem>>, vector<2x128xf32>
      %c0_26 = arith.constant 0 : index
      %c0_27 = arith.constant 0 : index
      %46 = vector.load %arg7[%c0_26, %c0_27] : memref<1x128xf32, #tpu.memory_space<vmem>>, vector<1x128xf32>
      %47 = vector.broadcast %46 : vector<1x128xf32> to vector<2x128xf32>
      %48 = arith.addf %45, %47 : vector<2x128xf32>
      %c0_28 = arith.constant 0 : index
      %c0_29 = arith.constant 0 : index
      %49 = vector.load %arg8[%c0_28, %c0_29] : memref<2x128xf32, #tpu.memory_space<vmem>>, vector<2x128xf32>
      tpu.vector_store %arg8[%c0_28, %c0_29], %48 {strides = array<i32>} : memref<2x128xf32, #tpu.memory_space<vmem>>, vector<2x128xf32>,
    } else {
    }
    return
  }
  func.func @transform_0(%arg0: i32) -> (i32, i32) {
    %c0_i32 = arith.constant 0 : i32
    %c0_i32_0 = arith.constant 0 : i32
    %c0_i32_1 = arith.constant 0 : i32
    return %c0_i32, %c0_i32_0 : i32, i32
  }
  func.func @transform_1(%arg0: i32) -> (i32, i32) {
    %c0_i32 = arith.constant 0 : i32
    %c0_i32_0 = arith.constant 0 : i32
    return %c0_i32, %arg0 : i32, i32
  }
  func.func @transform_2(%arg0: i32) -> (i32, i32) {
    %c0_i32 = arith.constant 0 : i32
    %c0_i32_0 = arith.constant 0 : i32
    return %c0_i32, %arg0 : i32, i32
  }
  func.func @transform_3(%arg0: i32) -> (i32, i32) {
    %c0_i32 = arith.constant 0 : i32
    %c0_i32_0 = arith.constant 0 : i32
    return %c0_i32, %arg0 : i32, i32
  }
  func.func @transform_4(%arg0: i32) -> (i32, i32) {
    %c0_i32 = arith.constant 0 : i32
    %c0_i32_0 = arith.constant 0 : i32
    return %c0_i32, %arg0 : i32, i32
  }
  func.func @transform_5(%arg0: i32) -> (i32, i32) {
    %c0_i32 = arith.constant 0 : i32
    %c0_i32_0 = arith.constant 0 : i32
    return %arg0, %c0_i32 : i32, i32
  }
  func.func @transform_6(%arg0: i32) -> (i32, i32) {
    %c0_i32 = arith.constant 0 : i32
    %c0_i32_0 = arith.constant 0 : i32
    %c0_i32_1 = arith.constant 0 : i32
    return %c0_i32, %c0_i32_0 : i32, i32
  }
  func.func @transform_7(%arg0: i32) -> (i32, i32) {
    %c0_i32 = arith.constant 0 : i32
    %c0_i32_0 = arith.constant 0 : i32
    %c0_i32_1 = arith.constant 0 : i32
    return %c0_i32, %c0_i32_0 : i32, i32
  }
}

</mosaic_0001>

<llo_original>
// kernel: discriminator_forward.3
$region0: #{discriminator_forward.3}
  #allocation0 [shape = 'u32[]', space=smem, size = 0x4, offset = 0x4, fixed_abs, tag = 'smem constant byte address 0x4 - core index']
  #allocation1 [shape = 'u32[144,128]{1,0:T(1,128)}', space=vmem, size = 0x12000, scoped, tag = 'internal scratch']
  %s0 = inlined_call_operand.vmem [shape: bf16[128,16], index: 0, kind: input, shape index: {}]
  %s1 = inlined_call_operand.hbm [shape: bf16[16,128], index: 1, kind: input, shape index: {}]
  %s2 = inlined_call_operand.hbm [shape: f32[1,128], index: 2, kind: input, shape index: {}]
  %s3 = inlined_call_operand.vmem [shape: bf16[128,128], index: 3, kind: output, shape index: {}]
  %s4 = sld [smem:[#allocation0]]
  $region53: #{discriminator_forward.3} parent=0
    _
  %s6 = ssub.s32 1, %s4
  %s7 = scalar_select 0, %s6, %s4
  $region1: #{discriminator_forward.3} parent=0
    #allocation2 [shape = 'u8[4096]{0}', space=vmem, size = 0x1000, scoped, tag = 'input window, operand 1, single buffered']
    #allocation3 [shape = 's32[2]{0}', space=sflag, size = 0x8, scoped, tag = 'scoped memory for discriminator_forward.3']
    #allocation4 [shape = 'u8[512]{0}', space=vmem, size = 0x400, scoped, tag = 'input window, operand 2, single buffered']
    #allocation5 [shape = 's32[1]{0}', space=sflag, size = 0x4, scoped, tag = 'scoped memory for discriminator_forward.3']
    %8 = vsyncpa [#allocation3], 0
    %9 = vsyncpa [#allocation5], 0
    loop: start=0, step=1, limit=4
    $region2: #{discriminator_forward.3} parent=1 // loop_pre_header
      _
    $region3: #{discriminator_forward.3} parent=1 // loop_header
      %s11 = sphi 0, %s15
      %p12 = scmp.ge.s32.totalorder %s11, 4
      %s18 = sphi 0, %s30
      %s19 = sphi 0, %s26
      %s20 = sphi 0, %s18
      %s21 = sphi 0, %s19
      %s22 = sphi 0, %s20
      %s23 = sphi 0, %s21
      %s33 = sphi 0, %s35
      %s36 = sphi 0, %s33
      %s37 = sphi 0, %s36
      %s53 = sphi 0, %s37
      %s59 = sphi 0, %s61
      %s62 = sphi 0, %s59
      %s63 = sphi 0, %s62
      %s79 = sphi 0, %s63
      %s85 = sphi 0, %s87
      %s88 = sphi 0, %s85
      %s89 = sphi 0, %s88
      %s105 = sphi 0, %s89
      %s113 = sphi 0, %s115
      %s116 = sphi 0, %s113
      %s117 = sphi 0, %s116
      %s133 = sphi 0, %s117
    $region4: #{discriminator_forward.3} parent=1 // loop_header_branch
      %14 = sbr.rel (%p12) target = $region8
    $region5: #{discriminator_forward.3} parent=1 // loop_body
      %s16 = ssub.s32 %s11, 1
      %s17 = ssub.s32 %s11, 2
      %s24 = sadd.s32 1, %s19
      %p25 = scmp.ge.s32.totalorder %s24, 1
      %s26 = scalar_select %p25, 0, %s24
      %s27 = sadd.s32 1, %s18
      %s28 = scalar_select %p25, %s27, %s18
      %p29 = scmp.ge.s32.totalorder %s28, 2
      %s30 = scalar_select %p29, 0, %s28
      %s31 = ssub.s32 %s18, %s30
      %p32 = scmp.eq.s32.totalorder %s31, 0
      %s34 = sadd.s32 %s33, 1
      %s35 = scalar_select %p32, %s33, %s34
      %p38 = pneg %p32
      %p39 = scmp.eq.s32.totalorder %s11, 1
      %p40 = por %p38, %p39
      %p41 = scmp.ne.s32.totalorder %s33, %s36
      %p42 = scmp.eq.s32.totalorder %s11, 0
      %p43 = por %p41, %p42
      %p44 = scmp.ne.s32.totalorder %s33, %s36
      %p45 = scmp.eq.s32.totalorder %s16, 1
      %p46 = por %p44, %p45
      %p47 = scmp.ne.s32.totalorder %s36, %s37
      %p48 = scmp.eq.s32.totalorder %s16, 0
      %p49 = por %p47, %p48
      %p50 = scmp.ne.s32.totalorder %s36, %s37
      %p51 = scmp.eq.s32.totalorder %s17, 1
      %p52 = por %p50, %p51
      %p54 = scmp.ne.s32.totalorder %s37, %s53
      %p55 = scmp.eq.s32.totalorder %s17, 0
      %p56 = por %p54, %p55
      %s57 = ssub.s32 %s19, %s26
      %p58 = scmp.eq.s32.totalorder %s57, 0
      %s60 = sadd.s32 %s59, 1
      %s61 = scalar_select %p58, %s59, %s60
      %p64 = pneg %p58
      %p65 = scmp.eq.s32.totalorder %s11, 1
      %p66 = por %p64, %p65
      %p67 = scmp.ne.s32.totalorder %s59, %s62
      %p68 = scmp.eq.s32.totalorder %s11, 0
      %p69 = por %p67, %p68
      %p70 = scmp.ne.s32.totalorder %s59, %s62
      %p71 = scmp.eq.s32.totalorder %s16, 1
      %p72 = por %p70, %p71
      %p73 = scmp.ne.s32.totalorder %s62, %s63
      %p74 = scmp.eq.s32.totalorder %s16, 0
      %p75 = por %p73, %p74
      %p76 = scmp.ne.s32.totalorder %s62, %s63
      %p77 = scmp.eq.s32.totalorder %s17, 1
      %p78 = por %p76, %p77
      %p80 = scmp.ne.s32.totalorder %s63, %s79
      %p81 = scmp.eq.s32.totalorder %s17, 0
      %p82 = por %p80, %p81
      %s83 = ssub.s32 %s19, %s26
      %p84 = scmp.eq.s32.totalorder %s83, 0
      %s86 = sadd.s32 %s85, 1
      %s87 = scalar_select %p84, %s85, %s86
      %p90 = pneg %p84
      %p91 = scmp.eq.s32.totalorder %s11, 1
      %p92 = por %p90, %p91
      %p93 = scmp.ne.s32.totalorder %s85, %s88
      %p94 = scmp.eq.s32.totalorder %s11, 0
      %p95 = por %p93, %p94
      %p96 = scmp.ne.s32.totalorder %s85, %s88
      %p97 = scmp.eq.s32.totalorder %s16, 1
      %p98 = por %p96, %p97
      %p99 = scmp.ne.s32.totalorder %s88, %s89
      %p100 = scmp.eq.s32.totalorder %s16, 0
      %p101 = por %p99, %p100
      %p102 = scmp.ne.s32.totalorder %s88, %s89
      %p103 = scmp.eq.s32.totalorder %s17, 1
      %p104 = por %p102, %p103
      %p106 = scmp.ne.s32.totalorder %s89, %s105
      %p107 = scmp.eq.s32.totalorder %s17, 0
      %p108 = por %p106, %p107
      %s109 = ssub.s32 %s18, %s30
      %s110 = ssub.s32 %s19, %s26
      %s111 = sor.u32 %s109, %s110
      %p112 = scmp.eq.s32.totalorder %s111, 0
      %s114 = sadd.s32 %s113, 1
      %s115 = scalar_select %p112, %s113, %s114
      %p118 = pneg %p112
      %p119 = scmp.eq.s32.totalorder %s11, 1
      %p120 = por %p118, %p119
      %p121 = scmp.ne.s32.totalorder %s113, %s116
      %p122 = scmp.eq.s32.totalorder %s11, 0
      %p123 = por %p121, %p122
      %p124 = scmp.ne.s32.totalorder %s113, %s116
      %p125 = scmp.eq.s32.totalorder %s16, 1
      %p126 = por %p124, %p125
      %p127 = scmp.ne.s32.totalorder %s116, %s117
      %p128 = scmp.eq.s32.totalorder %s16, 0
      %p129 = por %p127, %p128
      %p130 = scmp.ne.s32.totalorder %s116, %s117
      %p131 = scmp.eq.s32.totalorder %s17, 1
      %p132 = por %p130, %p131
      %p134 = scmp.ne.s32.totalorder %s117, %s133
      %p135 = scmp.eq.s32.totalorder %s17, 0
      %p136 = por %p134, %p135
      %p137 = scmp.le.s32.totalorder 1, %s11
      %p138 = scmp.lt.s32.totalorder %s11, 3
      %p139 = pnand %p137, %p138
      %p140 = pneg %p139
      // Predicated region
      $region9: #{discriminator_forward.3} parent=5 // pred_check
        _
      $region10: #{discriminator_forward.3} parent=5 // pred_check_branch
        %142 = sbr.rel (%p139) target = $region12
      $region11: #{discriminator_forward.3} parent=5 // pred_region
        %s143 = ssub.s32 %s11, 1
        // Predicated region
        $region13: #{discriminator_forward.3} parent=11 // pred_check
          %p144 = pneg %p75
        $region14: #{discriminator_forward.3} parent=11 // pred_check_branch
          %146 = sbr.rel (%p144) target = $region16
        $region15: #{discriminator_forward.3} parent=11 // pred_region
          %s148 = ssub.s32 128, 128
          %149 = vsyncadd [#allocation3], %s148
          %s150 = smul.addr %s21, 64
          %s151 = scalar_lea.hbm %s1, %s150
          %s152 = sshll.u32 [#allocation2], 4
          %s153 = int_to_ptr.vmem [resolvable:$true] %s152
          %158 = dma.hbm_to_vmem [thread:$0]  %s151, 128, %s153, [#allocation3], 64, 64, 4
        $region16: #{discriminator_forward.3} parent=11 // pred_fallthru
          _
        // Predicated region
        $region17: #{discriminator_forward.3} parent=11 // pred_check
          %p159 = pneg %p101
        $region18: #{discriminator_forward.3} parent=11 // pred_check_branch
          %161 = sbr.rel (%p159) target = $region20
        $region19: #{discriminator_forward.3} parent=11 // pred_region
          %s163 = ssub.s32 16, 16
          %164 = vsyncadd [#allocation5], %s163
          %s165 = smul.addr %s21, 16
          %s166 = scalar_lea.hbm %s2, %s165
          %s168 = sshll.u32 [#allocation4], 4
          %s169 = int_to_ptr.vmem [resolvable:$true] %s168
          %171 = dma.hbm_to_vmem [thread:$0]  %s166, 16, %s169, [#allocation5]
        $region20: #{discriminator_forward.3} parent=11 // pred_fallthru
          _
      $region12: #{discriminator_forward.3} parent=5 // pred_fallthru
        _
      %p172 = scmp.lt.s32.totalorder %s11, 2
      // Predicated region
      $region21: #{discriminator_forward.3} parent=5 // pred_check
        %p173 = pneg %p172
      $region22: #{discriminator_forward.3} parent=5 // pred_check_branch
        %175 = sbr.rel (%p173) target = $region24
      $region23: #{discriminator_forward.3} parent=5 // pred_region
        // Predicated region
        $region25: #{discriminator_forward.3} parent=23 // pred_check
          %p176 = pneg %p43
        $region26: #{discriminator_forward.3} parent=23 // pred_check_branch
          %178 = sbr.rel (%p176) target = $region28
        $region27: #{discriminator_forward.3} parent=23 // pred_region
          %s179 = smul.u32 8, %s18
          %p180 = scmp.lt.s32.totalorder %s179, 15
          %s181 = scalar_select %p180, %s179, 15
          %s182 = smul.addr %s181, 4
          %s183 = scalar_lea.vmem %s0, %s182
          %s184 = smul.u32 8, %s18
        $region28: #{discriminator_forward.3} parent=23 // pred_fallthru
          _
      $region24: #{discriminator_forward.3} parent=5 // pred_fallthru
        _
      %p185 = scmp.le.s32.totalorder 1, %s11
      %p186 = scmp.lt.s32.totalorder %s11, 3
      %p187 = pnand %p185, %p186
      %p188 = pneg %p187
      // Predicated region
      $region29: #{discriminator_forward.3} parent=5 // pred_check
        _
      $region30: #{discriminator_forward.3} parent=5 // pred_check_branch
        %190 = sbr.rel (%p187) target = $region32
      $region31: #{discriminator_forward.3} parent=5 // pred_region
        %s191 = ssub.s32 %s11, 1
        // Predicated region
        $region33: #{discriminator_forward.3} parent=31 // pred_check
          %p192 = pneg %p75
        $region34: #{discriminator_forward.3} parent=31 // pred_check_branch
          %194 = sbr.rel (%p192) target = $region36
        $region35: #{discriminator_forward.3} parent=31 // pred_region
          %195 = dma.done [#allocation3], 128
        $region36: #{discriminator_forward.3} parent=31 // pred_fallthru
          _
        // Predicated region
        $region37: #{discriminator_forward.3} parent=31 // pred_check
          %p196 = pneg %p101
        $region38: #{discriminator_forward.3} parent=31 // pred_check_branch
          %198 = sbr.rel (%p196) target = $region40
        $region39: #{discriminator_forward.3} parent=31 // pred_region
          %199 = dma.done [#allocation5], 16
        $region40: #{discriminator_forward.3} parent=31 // pred_fallthru
          _
        %s200 = smul.u32 8, %s20
        %p201 = scmp.lt.s32.totalorder %s200, 15
        %s202 = scalar_select %p201, %s200, 15
        %s203 = smul.addr %s202, 4
        %s204 = scalar_lea.vmem %s0, %s203
        %p205 = pneg %p49
        %p206 = pneg %p46
        %p207 = pneg %p75
        %p208 = pneg %p72
        %p209 = pneg %p101
        %p210 = pneg %p98
        %p211 = pneg %p129
        %p212 = pneg %p126
        %s213 = smul.u32 8, %s20
        %p214 = scmp.lt.s32.totalorder %s213, 15
        %s215 = scalar_select %p214, %s213, 15
        %p216 = scmp.lt.s32.totalorder %s21, 0
        %s217 = scalar_select %p216, %s21, 0
        %s218 = sadd.s32 %s217, %s215
        %s219 = smul.addr %s218, 4
        %s220 = scalar_lea.vmem %s3, %s219
        %s221 = smul.u32 8, %s20
        %p222 = scmp.lt.s32.totalorder %s221, 15
        %s223 = scalar_select %p222, %s221, 15
        %s224 = smul.addr %s223, 4
        %s225 = scalar_lea.vmem %s0, %s224
        %s226 = smul.u32 8, %s20
        %s227 = smul.u32 8, %s20
        %p228 = scmp.lt.s32.totalorder %s227, 15
        %s229 = scalar_select %p228, %s227, 15
        %p230 = scmp.lt.s32.totalorder %s21, 0
        %s231 = scalar_select %p230, %s21, 0
        %s232 = sadd.s32 %s231, %s229
        %s233 = smul.addr %s232, 4
        %s234 = scalar_lea.vmem %s3, %s233
        %s235 = smul.u32 8, %s20
        %v237 = vld [vmem:[%s225] sm:$0xf]
        %v238 = vld [vmem:[%s225 + $0x4] sm:$0xf]
        %v239 = vld [vmem:[%s225 + $0x8] sm:$0xf]
        %v240 = vld [vmem:[%s225 + $0xc] sm:$0xf]
        %v241 = vld [vmem:[%s225 + $0x10] sm:$0xf]
        %v242 = vld [vmem:[%s225 + $0x14] sm:$0xf]
        %v243 = vld [vmem:[%s225 + $0x18] sm:$0xf]
        %v244 = vld [vmem:[%s225 + $0x1c] sm:$0xf]
        %v245 = vld [vmem:[#allocation2] sm:$0xf]
        %v246 = vld [vmem:[#allocation2 + $0x4] sm:$0xf]
        %v247 = vld [vmem:[#allocation4] sm:$0x1]
        %v249 = vlaneseq
        %v250 = vshrl.u32 %v249, 7
        %v251 = vsub.s32 0, %v250
        %v252 = vrot.slane %v247, %v251
        %v262 = vunpack.c.l.b16 %v237
        %v263 = vunpack.c.l.b16 %v238
        %v264 = vunpack.c.l.b16 %v239
        %v265 = vunpack.c.l.b16 %v240
        %v266 = vunpack.c.l.b16 %v241
        %v267 = vunpack.c.l.b16 %v242
        %v268 = vunpack.c.l.b16 %v243
        %v269 = vunpack.c.l.b16 %v244
        %v270 = vpack.c.b16 %v263, %v262
        %v271 = vpack.c.b16 %v265, %v264
        %v272 = vpack.c.b16 %v267, %v266
        %v273 = vpack.c.b16 %v269, %v268
        %v276 = vunpack.c.l.b16 %v245
        %v277 = vunpack.c.l.b16 %v246
        %v278 = vpack.c.b16 %v277, %v276
        %vm280 = vcmask 130048
        %v282 = vsel %vm280, %v270, 0
        %v285 = vsel %vm280, %v271, 0
        %v288 = vsel %vm280, %v272, 0
        %v291 = vsel %vm280, %v273, 0
        %293 = vmatprep.subr.bf16.mxu0 0
        %294 = vmatpush1.bf16.msra.mxu0 0
        %295 = vmatprep.subr.bf16.mxu0 0
        %296 = vmatpush1.bf16.msra.mxu0 0
        %297 = vmatprep.subr.bf16.mxu0 0
        %298 = vmatpush1.bf16.msra.mxu0 0
        %299 = vmatprep.subr.bf16.mxu0 0
        %300 = vmatpush1.bf16.msra.mxu0 0
        %301 = vmatprep.subr.bf16.mxu0 0
        %302 = vmatpush1.bf16.msra.mxu0 0
        %303 = vmatprep.subr.bf16.mxu0 0
        %304 = vmatpush1.bf16.msra.mxu0 0
        %305 = vmatprep.subr.bf16.mxu0 0
        %306 = vmatpush1.bf16.msra.mxu0 0
        %307 = vmatprep.subr.bf16.mxu0 0
        %308 = vmatpush1.bf16.msra.mxu0 %v278
        %309 = vmatprep.subr.bf16.mxu0 0
        %310 = vmatpush2.bf16.msra.mxu0 0
        %311 = vmatprep.subr.bf16.mxu0 0
        %312 = vmatpush2.bf16.msra.mxu0 0
        %313 = vmatprep.subr.bf16.mxu0 0
        %314 = vmatpush2.bf16.msra.mxu0 0
        %315 = vmatprep.subr.bf16.mxu0 0
        %316 = vmatpush2.bf16.msra.mxu0 0
        %317 = vmatprep.subr.bf16.mxu0 0
        %318 = vmatpush2.bf16.msra.mxu0 0
        %319 = vmatprep.subr.bf16.mxu0 0
        %320 = vmatpush2.bf16.msra.mxu0 0
        %321 = vmatprep.subr.bf16.mxu0 0
        %322 = vmatpush2.bf16.msra.mxu0 0
        %323 = vmatprep.subr.bf16.mxu0 0
        %324 = vmatpush2.bf16.msra.mxu0 0
        %325 = vmatprep.mubr.bf16.mxu0 0
        %326 = vmatmul.mubr.bf16.gmra.mxu0 %v282
        %v327 = vpop.f32.mrf.mxu0
        %v328 = vadd.f32 %v252, %v327
        %v329 = vpop.f32.mrf.mxu0
        %v330 = vpop.f32.mrf.mxu0
        %v331 = vadd.f32 %v252, %v330
        %v332 = vpop.f32.mrf.mxu0
        %333 = vmatprep.mubr.bf16.mxu0 0
        %334 = vmatmul.mubr.bf16.gmra.mxu0 %v285
        %v335 = vpop.f32.mrf.mxu0
        %v336 = vadd.f32 %v252, %v335
        %v337 = vpop.f32.mrf.mxu0
        %v338 = vpop.f32.mrf.mxu0
        %v339 = vadd.f32 %v252, %v338
        %v340 = vpop.f32.mrf.mxu0
        %341 = vmatprep.mubr.bf16.mxu0 0
        %342 = vmatmul.mubr.bf16.gmra.mxu0 %v288
        %v343 = vpop.f32.mrf.mxu0
        %v344 = vadd.f32 %v252, %v343
        %v345 = vpop.f32.mrf.mxu0
        %v346 = vpop.f32.mrf.mxu0
        %v347 = vadd.f32 %v252, %v346
        %v348 = vpop.f32.mrf.mxu0
        %349 = vmatprep.mubr.bf16.mxu0 0
        %350 = vmatmul.mubr.bf16.gmra.mxu0 %v291
        %v351 = vpop.f32.mrf.mxu0
        %v352 = vadd.f32 %v252, %v351
        %v353 = vpop.f32.mrf.mxu0
        %v354 = vpop.f32.mrf.mxu0
        %v355 = vadd.f32 %v252, %v354
        %v356 = vpop.f32.mrf.mxu0
        %357 = vdwg.mxu0
        %v358 = vmul.f32 %v328, 0.2
        %v359 = vmul.f32 %v331, 0.2
        %v360 = vmul.f32 %v336, 0.2
        %v361 = vmul.f32 %v339, 0.2
        %v362 = vmul.f32 %v344, 0.2
        %v363 = vmul.f32 %v347, 0.2
        %v364 = vmul.f32 %v352, 0.2
        %v365 = vmul.f32 %v355, 0.2
        %v366 = vmax.f32 %v328, %v358
        %v367 = vmax.f32 %v331, %v359
        %v368 = vmax.f32 %v336, %v360
        %v369 = vmax.f32 %v339, %v361
        %v370 = vmax.f32 %v344, %v362
        %v371 = vmax.f32 %v347, %v363
        %v372 = vmax.f32 %v352, %v364
        %v373 = vmax.f32 %v355, %v365
        %v374 = vpack.c.bf16 %v367, %v366
        %v375 = vpack.c.bf16 %v369, %v368
        %v376 = vpack.c.bf16 %v371, %v370
        %v377 = vpack.c.bf16 %v373, %v372
        %v382 = vunpack.c.l.b16 %v374
        %v383 = vunpack.c.h.b16 %v374
        %v384 = vunpack.c.l.b16 %v375
        %v385 = vunpack.c.h.b16 %v375
        %v386 = vunpack.c.l.b16 %v376
        %v387 = vunpack.c.h.b16 %v376
        %v388 = vunpack.c.l.b16 %v377
        %v389 = vunpack.c.h.b16 %v377
        %v390 = vpack.c.b16 %v382, %v382
        %v391 = vpack.c.b16 %v383, %v383
        %v392 = vpack.c.b16 %v384, %v384
        %v393 = vpack.c.b16 %v385, %v385
        %v394 = vpack.c.b16 %v386, %v386
        %v395 = vpack.c.b16 %v387, %v387
        %v396 = vpack.c.b16 %v388, %v388
        %v397 = vpack.c.b16 %v389, %v389
        %406 = vst [vmem:[%s234] sm:$0xf] %v390
        %407 = vst [vmem:[%s234 + $0x4] sm:$0xf] %v391
        %408 = vst [vmem:[%s234 + $0x8] sm:$0xf] %v392
        %409 = vst [vmem:[%s234 + $0xc] sm:$0xf] %v393
        %410 = vst [vmem:[%s234 + $0x10] sm:$0xf] %v394
        %411 = vst [vmem:[%s234 + $0x14] sm:$0xf] %v395
        %412 = vst [vmem:[%s234 + $0x18] sm:$0xf] %v396
        %413 = vst [vmem:[%s234 + $0x1c] sm:$0xf] %v397
        %s414 = smul.u32 8, %s20
        %p415 = scmp.lt.s32.totalorder %s414, 15
        %s416 = scalar_select %p415, %s414, 15
        %p417 = scmp.lt.s32.totalorder %s21, 0
        %s418 = scalar_select %p417, %s21, 0
        %s419 = sadd.s32 %s418, %s416
        %s420 = smul.addr %s419, 4
        %s421 = scalar_lea.vmem %s3, %s420
        // Predicated region
        $region41: #{discriminator_forward.3} parent=31 // pred_check
          %p422 = pneg %p126
        $region42: #{discriminator_forward.3} parent=31 // pred_check_branch
          %424 = sbr.rel (%p422) target = $region44
        $region43: #{discriminator_forward.3} parent=31 // pred_region
          %s425 = smul.u32 8, %s20
        $region44: #{discriminator_forward.3} parent=31 // pred_fallthru
          _
      $region32: #{discriminator_forward.3} parent=5 // pred_fallthru
        _
      %p426 = scmp.le.s32.totalorder 2, %s11
      // Predicated region
      $region45: #{discriminator_forward.3} parent=5 // pred_check
        %p427 = pneg %p426
      $region46: #{discriminator_forward.3} parent=5 // pred_check_branch
        %429 = sbr.rel (%p427) target = $region48
      $region47: #{discriminator_forward.3} parent=5 // pred_region
        %s430 = ssub.s32 %s11, 2
        // Predicated region
        $region49: #{discriminator_forward.3} parent=47 // pred_check
          %p431 = pneg %p132
        $region50: #{discriminator_forward.3} parent=47 // pred_check_branch
          %433 = sbr.rel (%p431) target = $region52
        $region51: #{discriminator_forward.3} parent=47 // pred_region
          %s434 = smul.u32 8, %s22
          %p435 = scmp.lt.s32.totalorder %s434, 15
          %s436 = scalar_select %p435, %s434, 15
          %p437 = scmp.lt.s32.totalorder %s23, 0
          %s438 = scalar_select %p437, %s23, 0
          %s439 = sadd.s32 %s438, %s436
          %s440 = smul.addr %s439, 4
          %s441 = scalar_lea.vmem %s3, %s440
        $region52: #{discriminator_forward.3} parent=47 // pred_fallthru
          _
      $region48: #{discriminator_forward.3} parent=5 // pred_fallthru
        _
    $region6: #{discriminator_forward.3} parent=1 // loop_footer
      %s15 = sadd.s32 1, %s11
    $region7: #{discriminator_forward.3} parent=1 // loop_footer_branch
      %10 = sbr.rel target = $region3
    $region8: #{discriminator_forward.3} parent=1 // loop_exit
      _
    %442 = vsyncpa [#allocation3], 1
    %s443 = scalar_lea.sflag [#allocation3], 1
    %444 = vsyncpa %s443, 1
    %445 = vsyncpa [#allocation5], 1

// kernel: discriminator_forward.4
$region0: #{discriminator_forward.4}
  #allocation0 [shape = 'u32[]', space=smem, size = 0x4, offset = 0x4, fixed_abs, tag = 'smem constant byte address 0x4 - core index']
  #allocation1 [shape = 'u32[144,128]{1,0:T(1,128)}', space=vmem, size = 0x12000, scoped, tag = 'internal scratch']
  %s0 = inlined_call_operand.vmem [shape: bf16[32,2048], index: 0, kind: input, shape index: {}]
  %s1 = inlined_call_operand.hbm [shape: bf16[2048,128], index: 1, kind: input, shape index: {}]
  %s2 = inlined_call_operand.hbm [shape: f32[1,128], index: 2, kind: input, shape index: {}]
  %s3 = inlined_call_operand.hbm [shape: f32[1,128], index: 3, kind: input, shape index: {}]
  %s4 = inlined_call_operand.hbm [shape: f32[1,128], index: 4, kind: input, shape index: {}]
  %s5 = inlined_call_operand.vmem [shape: bf16[32,128], index: 5, kind: output, shape index: {}]
  %s6 = sld [smem:[#allocation0]]
  $region46: #{discriminator_forward.4} parent=0
    _
  %s8 = ssub.s32 1, %s6
  %s9 = scalar_select 0, %s8, %s6
  $region1: #{discriminator_forward.4} parent=0
    #allocation2 [shape = 'u8[524288]{0}', space=vmem, size = 0x80000, scoped, tag = 'input window, operand 1, single buffered']
    #allocation3 [shape = 's32[1]{0}', space=sflag, size = 0x4, scoped, tag = 'scoped memory for discriminator_forward.4']
    #allocation4 [shape = 'u8[512]{0}', space=vmem, size = 0x400, scoped, tag = 'input window, operand 2, single buffered']
    #allocation5 [shape = 's32[1]{0}', space=sflag, size = 0x4, scoped, tag = 'scoped memory for discriminator_forward.4']
    #allocation6 [shape = 'u8[512]{0}', space=vmem, size = 0x400, scoped, tag = 'input window, operand 3, single buffered']
    #allocation7 [shape = 'u8[512]{0}', space=vmem, size = 0x400, scoped, tag = 'input window, operand 4, single buffered']
    #allocation8 [shape = 's32[1]{0}', space=sflag, size = 0x4, scoped, tag = 'scoped memory for discriminator_forward.4']
    %10 = vsyncpa [#allocation3], 0
    %11 = vsyncpa [#allocation5], 0
    %12 = vsyncpa [#allocation8], 0
    // Predicated region
    $region2: #{discriminator_forward.4} parent=1 // pred_check
      _
    $region3: #{discriminator_forward.4} parent=1 // pred_check_branch
      %14 = sbr.rel (0) target = $region5
    $region4: #{discriminator_forward.4} parent=1 // pred_region
      _
    $region5: #{discriminator_forward.4} parent=1 // pred_fallthru
      _
    // Predicated region
    $region6: #{discriminator_forward.4} parent=1 // pred_check
      _
    $region7: #{discriminator_forward.4} parent=1 // pred_check_branch
      %16 = sbr.rel (0) target = $region9
    $region8: #{discriminator_forward.4} parent=1 // pred_region
      %s18 = ssub.s32 16384, 16384
      %19 = vsyncadd [#allocation3], %s18
      %s20 = sshll.u32 [#allocation2], 4
      %s21 = int_to_ptr.vmem [resolvable:$true] %s20
      %26 = dma.hbm_to_vmem [thread:$0]  %s1, 16384, %s21, [#allocation3], 64, 64, 4
    $region9: #{discriminator_forward.4} parent=1 // pred_fallthru
      _
    // Predicated region
    $region10: #{discriminator_forward.4} parent=1 // pred_check
      _
    $region11: #{discriminator_forward.4} parent=1 // pred_check_branch
      %28 = sbr.rel (0) target = $region13
    $region12: #{discriminator_forward.4} parent=1 // pred_region
      %s30 = ssub.s32 16, 16
      %31 = vsyncadd [#allocation5], %s30
      %s33 = sshll.u32 [#allocation4], 4
      %s34 = int_to_ptr.vmem [resolvable:$true] %s33
      %36 = dma.hbm_to_vmem [thread:$0]  %s2, 16, %s34, [#allocation5]
    $region13: #{discriminator_forward.4} parent=1 // pred_fallthru
      _
    // Predicated region
    $region14: #{discriminator_forward.4} parent=1 // pred_check
      _
    $region15: #{discriminator_forward.4} parent=1 // pred_check_branch
      %38 = sbr.rel (0) target = $region17
    $region16: #{discriminator_forward.4} parent=1 // pred_region
      %s40 = ssub.s32 16, 16
      %41 = vsyncadd [#allocation5], %s40
      %s43 = sshll.u32 [#allocation6], 4
      %s44 = int_to_ptr.vmem [resolvable:$true] %s43
      %46 = dma.hbm_to_vmem [thread:$0]  %s3, 16, %s44, [#allocation5]
    $region17: #{discriminator_forward.4} parent=1 // pred_fallthru
      _
    // Predicated region
    $region18: #{discriminator_forward.4} parent=1 // pred_check
      _
    $region19: #{discriminator_forward.4} parent=1 // pred_check_branch
      %48 = sbr.rel (0) target = $region21
    $region20: #{discriminator_forward.4} parent=1 // pred_region
      %s50 = ssub.s32 16, 16
      %51 = vsyncadd [#allocation8], %s50
      %s53 = sshll.u32 [#allocation7], 4
      %s54 = int_to_ptr.vmem [resolvable:$true] %s53
      %56 = dma.hbm_to_vmem [thread:$0]  %s4, 16, %s54, [#allocation8]
    $region21: #{discriminator_forward.4} parent=1 // pred_fallthru
      _
    // Predicated region
    $region22: #{discriminator_forward.4} parent=1 // pred_check
      _
    $region23: #{discriminator_forward.4} parent=1 // pred_check_branch
      %58 = sbr.rel (0) target = $region25
    $region24: #{discriminator_forward.4} parent=1 // pred_region
      %59 = dma.done [#allocation3], 16384
    $region25: #{discriminator_forward.4} parent=1 // pred_fallthru
      _
    // Predicated region
    $region26: #{discriminator_forward.4} parent=1 // pred_check
      _
    $region27: #{discriminator_forward.4} parent=1 // pred_check_branch
      %61 = sbr.rel (0) target = $region29
    $region28: #{discriminator_forward.4} parent=1 // pred_region
      %62 = dma.done [#allocation5], 16
    $region29: #{discriminator_forward.4} parent=1 // pred_fallthru
      _
    // Predicated region
    $region30: #{discriminator_forward.4} parent=1 // pred_check
      _
    $region31: #{discriminator_forward.4} parent=1 // pred_check_branch
      %64 = sbr.rel (0) target = $region33
    $region32: #{discriminator_forward.4} parent=1 // pred_region
      %65 = dma.done [#allocation5], 16
    $region33: #{discriminator_forward.4} parent=1 // pred_fallthru
      _
    // Predicated region
    $region34: #{discriminator_forward.4} parent=1 // pred_check
      _
    $region35: #{discriminator_forward.4} parent=1 // pred_check_branch
      %67 = sbr.rel (0) target = $region37
    $region36: #{discriminator_forward.4} parent=1 // pred_region
      %68 = dma.done [#allocation8], 16
    $region37: #{discriminator_forward.4} parent=1 // pred_fallthru
      _
    %v70 = vld [vmem:[%s0] sm:$0xff]
    %v71 = vld [vmem:[%s0 + $0x8] sm:$0xff]
    %v72 = vld [vmem:[%s0 + $0x10] sm:$0xff]
    %v73 = vld [vmem:[%s0 + $0x18] sm:$0xff]
    %v74 = vld [vmem:[%s0 + $0x20] sm:$0xff]
    %v75 = vld [vmem:[%s0 + $0x28] sm:$0xff]
    %v76 = vld [vmem:[%s0 + $0x30] sm:$0xff]
    %v77 = vld [vmem:[%s0 + $0x38] sm:$0xff]
    %v78 = vld [vmem:[%s0 + $0x40] sm:$0xff]
    %v79 = vld [vmem:[%s0 + $0x48] sm:$0xff]
    %v80 = vld [vmem:[%s0 + $0x50] sm:$0xff]
    %v81 = vld [vmem:[%s0 + $0x58] sm:$0xff]
    %v82 = vld [vmem:[%s0 + $0x60] sm:$0xff]
    %v83 = vld [vmem:[%s0 + $0x68] sm:$0xff]
    %v84 = vld [vmem:[%s0 + $0x70] sm:$0xff]
    %v85 = vld [vmem:[%s0 + $0x78] sm:$0xff]
    %v86 = vld [vmem:[%s0 + $0x80] sm:$0xff]
    %v87 = vld [vmem:[%s0 + $0x88] sm:$0xff]
    %v88 = vld [vmem:[%s0 + $0x90] sm:$0xff]
    %v89 = vld [vmem:[%s0 + $0x98] sm:$0xff]
    %v90 = vld [vmem:[%s0 + $0xa0] sm:$0xff]
    %v91 = vld [vmem:[%s0 + $0xa8] sm:$0xff]
    %v92 = vld [vmem:[%s0 + $0xb0] sm:$0xff]
    %v93 = vld [vmem:[%s0 + $0xb8] sm:$0xff]
    %v94 = vld [vmem:[%s0 + $0xc0] sm:$0xff]
    %v95 = vld [vmem:[%s0 + $0xc8] sm:$0xff]
    %v96 = vld [vmem:[%s0 + $0xd0] sm:$0xff]
    %v97 = vld [vmem:[%s0 + $0xd8] sm:$0xff]
    %v98 = vld [vmem:[%s0 + $0xe0] sm:$0xff]
    %v99 = vld [vmem:[%s0 + $0xe8] sm:$0xff]
    %v100 = vld [vmem:[%s0 + $0xf0] sm:$0xff]
    %v101 = vld [vmem:[%s0 + $0xf8] sm:$0xff]
    %v102 = vld [vmem:[#allocation2] sm:$0xf]
    %v103 = vld [vmem:[#allocation2 + $0x4] sm:$0xf]
    %v104 = vld [vmem:[#allocation2 + $0x8] sm:$0xf]
    %v105 = vld [vmem:[#allocation2 + $0xc] sm:$0xf]
    %v106 = vld [vmem:[#allocation2 + $0x10] sm:$0xf]
    %v107 = vld [vmem:[#allocation2 + $0x14] sm:$0xf]
    %v108 = vld [vmem:[#allocation2 + $0x18] sm:$0xf]
    %v109 = vld [vmem:[#allocation2 + $0x1c] sm:$0xf]
    %v110 = vld [vmem:[#allocation2 + $0x20] sm:$0xf]
    %v111 = vld [vmem:[#allocation2 + $0x24] sm:$0xf]
    %v112 = vld [vmem:[#allocation2 + $0x28] sm:$0xf]
    %v113 = vld [vmem:[#allocation2 + $0x2c] sm:$0xf]
    %v114 = vld [vmem:[#allocation2 + $0x30] sm:$0xf]
    %v115 = vld [vmem:[#allocation2 + $0x34] sm:$0xf]
    %v116 = vld [vmem:[#allocation2 + $0x38] sm:$0xf]
    %v117 = vld [vmem:[#allocation2 + $0x3c] sm:$0xf]
    %v118 = vld [vmem:[#allocation2 + $0x40] sm:$0xf]
    %v119 = vld [vmem:[#allocation2 + $0x44] sm:$0xf]
    %v120 = vld [vmem:[#allocation2 + $0x48] sm:$0xf]
    %v121 = vld [vmem:[#allocation2 + $0x4c] sm:$0xf]
    %v122 = vld [vmem:[#allocation2 + $0x50] sm:$0xf]
    %v123 = vld [vmem:[#allocation2 + $0x54] sm:$0xf]
    %v124 = vld [vmem:[#allocation2 + $0x58] sm:$0xf]
    %v125 = vld [vmem:[#allocation2 + $0x5c] sm:$0xf]
    %v126 = vld [vmem:[#allocation2 + $0x60] sm:$0xf]
    %v127 = vld [vmem:[#allocation2 + $0x64] sm:$0xf]
    %v128 = vld [vmem:[#allocation2 + $0x68] sm:$0xf]
    %v129 = vld [vmem:[#allocation2 + $0x6c] sm:$0xf]
    %v130 = vld [vmem:[#allocation2 + $0x70] sm:$0xf]
    %v131 = vld [vmem:[#allocation2 + $0x74] sm:$0xf]
    %v132 = vld [vmem:[#allocation2 + $0x78] sm:$0xf]
    %v133 = vld [vmem:[#allocation2 + $0x7c] sm:$0xf]
    %v134 = vld [vmem:[#allocation2 + $0x80] sm:$0xf]
    %v135 = vld [vmem:[#allocation2 + $0x84] sm:$0xf]
    %v136 = vld [vmem:[#allocation2 + $0x88] sm:$0xf]
    %v137 = vld [vmem:[#allocation2 + $0x8c] sm:$0xf]
    %v138 = vld [vmem:[#allocation2 + $0x90] sm:$0xf]
    %v139 = vld [vmem:[#allocation2 + $0x94] sm:$0xf]
    %v140 = vld [vmem:[#allocation2 + $0x98] sm:$0xf]
    %v141 = vld [vmem:[#allocation2 + $0x9c] sm:$0xf]
    %v142 = vld [vmem:[#allocation2 + $0xa0] sm:$0xf]
    %v143 = vld [vmem:[#allocation2 + $0xa4] sm:$0xf]
    %v144 = vld [vmem:[#allocation2 + $0xa8] sm:$0xf]
    %v145 = vld [vmem:[#allocation2 + $0xac] sm:$0xf]
    %v146 = vld [vmem:[#allocation2 + $0xb0] sm:$0xf]
    %v147 = vld [vmem:[#allocation2 + $0xb4] sm:$0xf]
    %v148 = vld [vmem:[#allocation2 + $0xb8] sm:$0xf]
    %v149 = vld [vmem:[#allocation2 + $0xbc] sm:$0xf]
    %v150 = vld [vmem:[#allocation2 + $0xc0] sm:$0xf]
    %v151 = vld [vmem:[#allocation2 + $0xc4] sm:$0xf]
    %v152 = vld [vmem:[#allocation2 + $0xc8] sm:$0xf]
    %v153 = vld [vmem:[#allocation2 + $0xcc] sm:$0xf]
    %v154 = vld [vmem:[#allocation2 + $0xd0] sm:$0xf]
    %v155 = vld [vmem:[#allocation2 + $0xd4] sm:$0xf]
    %v156 = vld [vmem:[#allocation2 + $0xd8] sm:$0xf]
    %v157 = vld [vmem:[#allocation2 + $0xdc] sm:$0xf]
    %v158 = vld [vmem:[#allocation2 + $0xe0] sm:$0xf]
    %v159 = vld [vmem:[#allocation2 + $0xe4] sm:$0xf]
    %v160 = vld [vmem:[#allocation2 + $0xe8] sm:$0xf]
    %v161 = vld [vmem:[#allocation2 + $0xec] sm:$0xf]
    %v162 = vld [vmem:[#allocation2 + $0xf0] sm:$0xf]
    %v163 = vld [vmem:[#allocation2 + $0xf4] sm:$0xf]
    %v164 = vld [vmem:[#allocation2 + $0xf8] sm:$0xf]
    %v165 = vld [vmem:[#allocation2 + $0xfc] sm:$0xf]
    %v166 = vld [vmem:[#allocation2 + $0x100] sm:$0xf]
    %v167 = vld [vmem:[#allocation2 + $0x104] sm:$0xf]
    %v168 = vld [vmem:[#allocation2 + $0x108] sm:$0xf]
    %v169 = vld [vmem:[#allocation2 + $0x10c] sm:$0xf]
    %v170 = vld [vmem:[#allocation2 + $0x110] sm:$0xf]
    %v171 = vld [vmem:[#allocation2 + $0x114] sm:$0xf]
    %v172 = vld [vmem:[#allocation2 + $0x118] sm:$0xf]
    %v173 = vld [vmem:[#allocation2 + $0x11c] sm:$0xf]
    %v174 = vld [vmem:[#allocation2 + $0x120] sm:$0xf]
    %v175 = vld [vmem:[#allocation2 + $0x124] sm:$0xf]
    %v176 = vld [vmem:[#allocation2 + $0x128] sm:$0xf]
    %v177 = vld [vmem:[#allocation2 + $0x12c] sm:$0xf]
    %v178 = vld [vmem:[#allocation2 + $0x130] sm:$0xf]
    %v179 = vld [vmem:[#allocation2 + $0x134] sm:$0xf]
    %v180 = vld [vmem:[#allocation2 + $0x138] sm:$0xf]
    %v181 = vld [vmem:[#allocation2 + $0x13c] sm:$0xf]
    %v182 = vld [vmem:[#allocation2 + $0x140] sm:$0xf]
    %v183 = vld [vmem:[#allocation2 + $0x144] sm:$0xf]
    %v184 = vld [vmem:[#allocation2 + $0x148] sm:$0xf]
    %v185 = vld [vmem:[#allocation2 + $0x14c] sm:$0xf]
    %v186 = vld [vmem:[#allocation2 + $0x150] sm:$0xf]
    %v187 = vld [vmem:[#allocation2 + $0x154] sm:$0xf]
    %v188 = vld [vmem:[#allocation2 + $0x158] sm:$0xf]
    %v189 = vld [vmem:[#allocation2 + $0x15c] sm:$0xf]
    %v190 = vld [vmem:[#allocation2 + $0x160] sm:$0xf]
    %v191 = vld [vmem:[#allocation2 + $0x164] sm:$0xf]
    %v192 = vld [vmem:[#allocation2 + $0x168] sm:$0xf]
    %v193 = vld [vmem:[#allocation2 + $0x16c] sm:$0xf]
    %v194 = vld [vmem:[#allocation2 + $0x170] sm:$0xf]
    %v195 = vld [vmem:[#allocation2 + $0x174] sm:$0xf]
    %v196 = vld [vmem:[#allocation2 + $0x178] sm:$0xf]
    %v197 = vld [vmem:[#allocation2 + $0x17c] sm:$0xf]
    %v198 = vld [vmem:[#allocation2 + $0x180] sm:$0xf]
    %v199 = vld [vmem:[#allocation2 + $0x184] sm:$0xf]
    %v200 = vld [vmem:[#allocation2 + $0x188] sm:$0xf]
    %v201 = vld [vmem:[#allocation2 + $0x18c] sm:$0xf]
    %v202 = vld [vmem:[#allocation2 + $0x190] sm:$0xf]
    %v203 = vld [vmem:[#allocation2 + $0x194] sm:$0xf]
    %v204 = vld [vmem:[#allocation2 + $0x198] sm:$0xf]
    %v205 = vld [vmem:[#allocation2 + $0x19c] sm:$0xf]
    %v206 = vld [vmem:[#allocation2 + $0x1a0] sm:$0xf]
    %v207 = vld [vmem:[#allocation2 + $0x1a4] sm:$0xf]
    %v208 = vld [vmem:[#allocation2 + $0x1a8] sm:$0xf]
    %v209 = vld [vmem:[#allocation2 + $0x1ac] sm:$0xf]
    %v210 = vld [vmem:[#allocation2 + $0x1b0] sm:$0xf]
    %v211 = vld [vmem:[#allocation2 + $0x1b4] sm:$0xf]
    %v212 = vld [vmem:[#allocation2 + $0x1b8] sm:$0xf]
    %v213 = vld [vmem:[#allocation2 + $0x1bc] sm:$0xf]
    %v214 = vld [vmem:[#allocation2 + $0x1c0] sm:$0xf]
    %v215 = vld [vmem:[#allocation2 + $0x1c4] sm:$0xf]
    %v216 = vld [vmem:[#allocation2 + $0x1c8] sm:$0xf]
    %v217 = vld [vmem:[#allocation2 + $0x1cc] sm:$0xf]
    %v218 = vld [vmem:[#allocation2 + $0x1d0] sm:$0xf]
    %v219 = vld [vmem:[#allocation2 + $0x1d4] sm:$0xf]
    %v220 = vld [vmem:[#allocation2 + $0x1d8] sm:$0xf]
    %v221 = vld [vmem:[#allocation2 + $0x1dc] sm:$0xf]
    %v222 = vld [vmem:[#allocation2 + $0x1e0] sm:$0xf]
    %v223 = vld [vmem:[#allocation2 + $0x1e4] sm:$0xf]
    %v224 = vld [vmem:[#allocation2 + $0x1e8] sm:$0xf]
    %v225 = vld [vmem:[#allocation2 + $0x1ec] sm:$0xf]
    %v226 = vld [vmem:[#allocation2 + $0x1f0] sm:$0xf]
    %v227 = vld [vmem:[#allocation2 + $0x1f4] sm:$0xf]
    %v228 = vld [vmem:[#allocation2 + $0x1f8] sm:$0xf]
    %v229 = vld [vmem:[#allocation2 + $0x1fc] sm:$0xf]
    %v230 = vld [vmem:[#allocation2 + $0x200] sm:$0xf]
    %v231 = vld [vmem:[#allocation2 + $0x204] sm:$0xf]
    %v232 = vld [vmem:[#allocation2 + $0x208] sm:$0xf]
    %v233 = vld [vmem:[#allocation2 + $0x20c] sm:$0xf]
    %v234 = vld [vmem:[#allocation2 + $0x210] sm:$0xf]
    %v235 = vld [vmem:[#allocation2 + $0x214] sm:$0xf]
    %v236 = vld [vmem:[#allocation2 + $0x218] sm:$0xf]
    %v237 = vld [vmem:[#allocation2 + $0x21c] sm:$0xf]
    %v238 = vld [vmem:[#allocation2 + $0x220] sm:$0xf]
    %v239 = vld [vmem:[#allocation2 + $0x224] sm:$0xf]
    %v240 = vld [vmem:[#allocation2 + $0x228] sm:$0xf]
    %v241 = vld [vmem:[#allocation2 + $0x22c] sm:$0xf]
    %v242 = vld [vmem:[#allocation2 + $0x230] sm:$0xf]
    %v243 = vld [vmem:[#allocation2 + $0x234] sm:$0xf]
    %v244 = vld [vmem:[#allocation2 + $0x238] sm:$0xf]
    %v245 = vld [vmem:[#allocation2 + $0x23c] sm:$0xf]
    %v246 = vld [vmem:[#allocation2 + $0x240] sm:$0xf]
    %v247 = vld [vmem:[#allocation2 + $0x244] sm:$0xf]
    %v248 = vld [vmem:[#allocation2 + $0x248] sm:$0xf]
    %v249 = vld [vmem:[#allocation2 + $0x24c] sm:$0xf]
    %v250 = vld [vmem:[#allocation2 + $0x250] sm:$0xf]
    %v251 = vld [vmem:[#allocation2 + $0x254] sm:$0xf]
    %v252 = vld [vmem:[#allocation2 + $0x258] sm:$0xf]
    %v253 = vld [vmem:[#allocation2 + $0x25c] sm:$0xf]
    %v254 = vld [vmem:[#allocation2 + $0x260] sm:$0xf]
    %v255 = vld [vmem:[#allocation2 + $0x264] sm:$0xf]
    %v256 = vld [vmem:[#allocation2 + $0x268] sm:$0xf]
    %v257 = vld [vmem:[#allocation2 + $0x26c] sm:$0xf]
    %v258 = vld [vmem:[#allocation2 + $0x270] sm:$0xf]
    %v259 = vld [vmem:[#allocation2 + $0x274] sm:$0xf]
    %v260 = vld [vmem:[#allocation2 + $0x278] sm:$0xf]
    %v261 = vld [vmem:[#allocation2 + $0x27c] sm:$0xf]
    %v262 = vld [vmem:[#allocation2 + $0x280] sm:$0xf]
    %v263 = vld [vmem:[#allocation2 + $0x284] sm:$0xf]
    %v264 = vld [vmem:[#allocation2 + $0x288] sm:$0xf]
    %v265 = vld [vmem:[#allocation2 + $0x28c] sm:$0xf]
    %v266 = vld [vmem:[#allocation2 + $0x290] sm:$0xf]
    %v267 = vld [vmem:[#allocation2 + $0x294] sm:$0xf]
    %v268 = vld [vmem:[#allocation2 + $0x298] sm:$0xf]
    %v269 = vld [vmem:[#allocation2 + $0x29c] sm:$0xf]
    %v270 = vld [vmem:[#allocation2 + $0x2a0] sm:$0xf]
    %v271 = vld [vmem:[#allocation2 + $0x2a4] sm:$0xf]
    %v272 = vld [vmem:[#allocation2 + $0x2a8] sm:$0xf]
    %v273 = vld [vmem:[#allocation2 + $0x2ac] sm:$0xf]
    %v274 = vld [vmem:[#allocation2 + $0x2b0] sm:$0xf]
    %v275 = vld [vmem:[#allocation2 + $0x2b4] sm:$0xf]
    %v276 = vld [vmem:[#allocation2 + $0x2b8] sm:$0xf]
    %v277 = vld [vmem:[#allocation2 + $0x2bc] sm:$0xf]
    %v278 = vld [vmem:[#allocation2 + $0x2c0] sm:$0xf]
    %v279 = vld [vmem:[#allocation2 + $0x2c4] sm:$0xf]
    %v280 = vld [vmem:[#allocation2 + $0x2c8] sm:$0xf]
    %v281 = vld [vmem:[#allocation2 + $0x2cc] sm:$0xf]
    %v282 = vld [vmem:[#allocation2 + $0x2d0] sm:$0xf]
    %v283 = vld [vmem:[#allocation2 + $0x2d4] sm:$0xf]
    %v284 = vld [vmem:[#allocation2 + $0x2d8] sm:$0xf]
    %v285 = vld [vmem:[#allocation2 + $0x2dc] sm:$0xf]
    %v286 = vld [vmem:[#allocation2 + $0x2e0] sm:$0xf]
    %v287 = vld [vmem:[#allocation2 + $0x2e4] sm:$0xf]
    %v288 = vld [vmem:[#allocation2 + $0x2e8] sm:$0xf]
    %v289 = vld [vmem:[#allocation2 + $0x2ec] sm:$0xf]
    %v290 = vld [vmem:[#allocation2 + $0x2f0] sm:$0xf]
    %v291 = vld [vmem:[#allocation2 + $0x2f4] sm:$0xf]
    %v292 = vld [vmem:[#allocation2 + $0x2f8] sm:$0xf]
    %v293 = vld [vmem:[#allocation2 + $0x2fc] sm:$0xf]
    %v294 = vld [vmem:[#allocation2 + $0x300] sm:$0xf]
    %v295 = vld [vmem:[#allocation2 + $0x304] sm:$0xf]
    %v296 = vld [vmem:[#allocation2 + $0x308] sm:$0xf]
    %v297 = vld [vmem:[#allocation2 + $0x30c] sm:$0xf]
    %v298 = vld [vmem:[#allocation2 + $0x310] sm:$0xf]
    %v299 = vld [vmem:[#allocation2 + $0x314] sm:$0xf]
    %v300 = vld [vmem:[#allocation2 + $0x318] sm:$0xf]
    %v301 = vld [vmem:[#allocation2 + $0x31c] sm:$0xf]
    %v302 = vld [vmem:[#allocation2 + $0x320] sm:$0xf]
    %v303 = vld [vmem:[#allocation2 + $0x324] sm:$0xf]
    %v304 = vld [vmem:[#allocation2 + $0x328] sm:$0xf]
    %v305 = vld [vmem:[#allocation2 + $0x32c] sm:$0xf]
    %v306 = vld [vmem:[#allocation2 + $0x330] sm:$0xf]
    %v307 = vld [vmem:[#allocation2 + $0x334] sm:$0xf]
    %v308 = vld [vmem:[#allocation2 + $0x338] sm:$0xf]
    %v309 = vld [vmem:[#allocation2 + $0x33c] sm:$0xf]
    %v310 = vld [vmem:[#allocation2 + $0x340] sm:$0xf]
    %v311 = vld [vmem:[#allocation2 + $0x344] sm:$0xf]
    %v312 = vld [vmem:[#allocation2 + $0x348] sm:$0xf]
    %v313 = vld [vmem:[#allocation2 + $0x34c] sm:$0xf]
    %v314 = vld [vmem:[#allocation2 + $0x350] sm:$0xf]
    %v315 = vld [vmem:[#allocation2 + $0x354] sm:$0xf]
    %v316 = vld [vmem:[#allocation2 + $0x358] sm:$0xf]
    %v317 = vld [vmem:[#allocation2 + $0x35c] sm:$0xf]
    %v318 = vld [vmem:[#allocation2 + $0x360] sm:$0xf]
    %v319 = vld [vmem:[#allocation2 + $0x364] sm:$0xf]
    %v320 = vld [vmem:[#allocation2 + $0x368] sm:$0xf]
    %v321 = vld [vmem:[#allocation2 + $0x36c] sm:$0xf]
    %v322 = vld [vmem:[#allocation2 + $0x370] sm:$0xf]
    %v323 = vld [vmem:[#allocation2 + $0x374] sm:$0xf]
    %v324 = vld [vmem:[#allocation2 + $0x378] sm:$0xf]
    %v325 = vld [vmem:[#allocation2 + $0x37c] sm:$0xf]
    %v326 = vld [vmem:[#allocation2 + $0x380] sm:$0xf]
    %v327 = vld [vmem:[#allocation2 + $0x384] sm:$0xf]
    %v328 = vld [vmem:[#allocation2 + $0x388] sm:$0xf]
    %v329 = vld [vmem:[#allocation2 + $0x38c] sm:$0xf]
    %v330 = vld [vmem:[#allocation2 + $0x390] sm:$0xf]
    %v331 = vld [vmem:[#allocation2 + $0x394] sm:$0xf]
    %v332 = vld [vmem:[#allocation2 + $0x398] sm:$0xf]
    %v333 = vld [vmem:[#allocation2 + $0x39c] sm:$0xf]
    %v334 = vld [vmem:[#allocation2 + $0x3a0] sm:$0xf]
    %v335 = vld [vmem:[#allocation2 + $0x3a4] sm:$0xf]
    %v336 = vld [vmem:[#allocation2 + $0x3a8] sm:$0xf]
    %v337 = vld [vmem:[#allocation2 + $0x3ac] sm:$0xf]
    %v338 = vld [vmem:[#allocation2 + $0x3b0] sm:$0xf]
    %v339 = vld [vmem:[#allocation2 + $0x3b4] sm:$0xf]
    %v340 = vld [vmem:[#allocation2 + $0x3b8] sm:$0xf]
    %v341 = vld [vmem:[#allocation2 + $0x3bc] sm:$0xf]
    %v342 = vld [vmem:[#allocation2 + $0x3c0] sm:$0xf]
    %v343 = vld [vmem:[#allocation2 + $0x3c4] sm:$0xf]
    %v344 = vld [vmem:[#allocation2 + $0x3c8] sm:$0xf]
    %v345 = vld [vmem:[#allocation2 + $0x3cc] sm:$0xf]
    %v346 = vld [vmem:[#allocation2 + $0x3d0] sm:$0xf]
    %v347 = vld [vmem:[#allocation2 + $0x3d4] sm:$0xf]
    %v348 = vld [vmem:[#allocation2 + $0x3d8] sm:$0xf]
    %v349 = vld [vmem:[#allocation2 + $0x3dc] sm:$0xf]
    %v350 = vld [vmem:[#allocation2 + $0x3e0] sm:$0xf]
    %v351 = vld [vmem:[#allocation2 + $0x3e4] sm:$0xf]
    %v352 = vld [vmem:[#allocation2 + $0x3e8] sm:$0xf]
    %v353 = vld [vmem:[#allocation2 + $0x3ec] sm:$0xf]
    %v354 = vld [vmem:[#allocation2 + $0x3f0] sm:$0xf]
    %v355 = vld [vmem:[#allocation2 + $0x3f4] sm:$0xf]
    %v356 = vld [vmem:[#allocation2 + $0x3f8] sm:$0xf]
    %v357 = vld [vmem:[#allocation2 + $0x3fc] sm:$0xf]
    %v358 = vld [vmem:[#allocation4] sm:$0x1]
    %v360 = vlaneseq
    %v361 = vshrl.u32 %v360, 7
    %v362 = vsub.s32 0, %v361
    %v363 = vrot.slane %v358, %v362
    %v397 = vunpack.c.l.b16 %v70
    %v398 = vunpack.c.h.b16 %v70
    %v399 = vunpack.c.l.b16 %v71
    %v400 = vunpack.c.h.b16 %v71
    %v401 = vunpack.c.l.b16 %v72
    %v402 = vunpack.c.h.b16 %v72
    %v403 = vunpack.c.l.b16 %v73
    %v404 = vunpack.c.h.b16 %v73
    %v405 = vunpack.c.l.b16 %v74
    %v406 = vunpack.c.h.b16 %v74
    %v407 = vunpack.c.l.b16 %v75
    %v408 = vunpack.c.h.b16 %v75
    %v409 = vunpack.c.l.b16 %v76
    %v410 = vunpack.c.h.b16 %v76
    %v411 = vunpack.c.l.b16 %v77
    %v412 = vunpack.c.h.b16 %v77
    %v413 = vunpack.c.l.b16 %v78
    %v414 = vunpack.c.h.b16 %v78
    %v415 = vunpack.c.l.b16 %v79
    %v416 = vunpack.c.h.b16 %v79
    %v417 = vunpack.c.l.b16 %v80
    %v418 = vunpack.c.h.b16 %v80
    %v419 = vunpack.c.l.b16 %v81
    %v420 = vunpack.c.h.b16 %v81
    %v421 = vunpack.c.l.b16 %v82
    %v422 = vunpack.c.h.b16 %v82
    %v423 = vunpack.c.l.b16 %v83
    %v424 = vunpack.c.h.b16 %v83
    %v425 = vunpack.c.l.b16 %v84
    %v426 = vunpack.c.h.b16 %v84
    %v427 = vunpack.c.l.b16 %v85
    %v428 = vunpack.c.h.b16 %v85
    %v429 = vunpack.c.l.b16 %v86
    %v430 = vunpack.c.h.b16 %v86
    %v431 = vunpack.c.l.b16 %v87
    %v432 = vunpack.c.h.b16 %v87
    %v433 = vunpack.c.l.b16 %v88
    %v434 = vunpack.c.h.b16 %v88
    %v435 = vunpack.c.l.b16 %v89
    %v436 = vunpack.c.h.b16 %v89
    %v437 = vunpack.c.l.b16 %v90
    %v438 = vunpack.c.h.b16 %v90
    %v439 = vunpack.c.l.b16 %v91
    %v440 = vunpack.c.h.b16 %v91
    %v441 = vunpack.c.l.b16 %v92
    %v442 = vunpack.c.h.b16 %v92
    %v443 = vunpack.c.l.b16 %v93
    %v444 = vunpack.c.h.b16 %v93
    %v445 = vunpack.c.l.b16 %v94
    %v446 = vunpack.c.h.b16 %v94
    %v447 = vunpack.c.l.b16 %v95
    %v448 = vunpack.c.h.b16 %v95
    %v449 = vunpack.c.l.b16 %v96
    %v450 = vunpack.c.h.b16 %v96
    %v451 = vunpack.c.l.b16 %v97
    %v452 = vunpack.c.h.b16 %v97
    %v453 = vunpack.c.l.b16 %v98
    %v454 = vunpack.c.h.b16 %v98
    %v455 = vunpack.c.l.b16 %v99
    %v456 = vunpack.c.h.b16 %v99
    %v457 = vunpack.c.l.b16 %v100
    %v458 = vunpack.c.h.b16 %v100
    %v459 = vunpack.c.l.b16 %v101
    %v460 = vunpack.c.h.b16 %v101
    %v461 = vpack.c.b16 %v413, %v397
    %v462 = vpack.c.b16 %v414, %v398
    %v463 = vpack.c.b16 %v415, %v399
    %v464 = vpack.c.b16 %v416, %v400
    %v465 = vpack.c.b16 %v417, %v401
    %v466 = vpack.c.b16 %v418, %v402
    %v467 = vpack.c.b16 %v419, %v403
    %v468 = vpack.c.b16 %v420, %v404
    %v469 = vpack.c.b16 %v421, %v405
    %v470 = vpack.c.b16 %v422, %v406
    %v471 = vpack.c.b16 %v423, %v407
    %v472 = vpack.c.b16 %v424, %v408
    %v473 = vpack.c.b16 %v425, %v409
    %v474 = vpack.c.b16 %v426, %v410
    %v475 = vpack.c.b16 %v427, %v411
    %v476 = vpack.c.b16 %v428, %v412
    %v477 = vpack.c.b16 %v445, %v429
    %v478 = vpack.c.b16 %v446, %v430
    %v479 = vpack.c.b16 %v447, %v431
    %v480 = vpack.c.b16 %v448, %v432
    %v481 = vpack.c.b16 %v449, %v433
    %v482 = vpack.c.b16 %v450, %v434
    %v483 = vpack.c.b16 %v451, %v435
    %v484 = vpack.c.b16 %v452, %v436
    %v485 = vpack.c.b16 %v453, %v437
    %v486 = vpack.c.b16 %v454, %v438
    %v487 = vpack.c.b16 %v455, %v439
    %v488 = vpack.c.b16 %v456, %v440
    %v489 = vpack.c.b16 %v457, %v441
    %v490 = vpack.c.b16 %v458, %v442
    %v491 = vpack.c.b16 %v459, %v443
    %v492 = vpack.c.b16 %v460, %v444
    %v781 = vunpack.c.l.b16 %v102
    %v782 = vunpack.c.l.b16 %v103
    %v783 = vunpack.c.l.b16 %v104
    %v784 = vunpack.c.l.b16 %v105
    %v785 = vunpack.c.l.b16 %v106
    %v786 = vunpack.c.l.b16 %v107
    %v787 = vunpack.c.l.b16 %v108
    %v788 = vunpack.c.l.b16 %v109
    %v789 = vunpack.c.l.b16 %v110
    %v790 = vunpack.c.l.b16 %v111
    %v791 = vunpack.c.l.b16 %v112
    %v792 = vunpack.c.l.b16 %v113
    %v793 = vunpack.c.l.b16 %v114
    %v794 = vunpack.c.l.b16 %v115
    %v795 = vunpack.c.l.b16 %v116
    %v796 = vunpack.c.l.b16 %v117
    %v797 = vunpack.c.l.b16 %v118
    %v798 = vunpack.c.l.b16 %v119
    %v799 = vunpack.c.l.b16 %v120
    %v800 = vunpack.c.l.b16 %v121
    %v801 = vunpack.c.l.b16 %v122
    %v802 = vunpack.c.l.b16 %v123
    %v803 = vunpack.c.l.b16 %v124
    %v804 = vunpack.c.l.b16 %v125
    %v805 = vunpack.c.l.b16 %v126
    %v806 = vunpack.c.l.b16 %v127
    %v807 = vunpack.c.l.b16 %v128
    %v808 = vunpack.c.l.b16 %v129
    %v809 = vunpack.c.l.b16 %v130
    %v810 = vunpack.c.l.b16 %v131
    %v811 = vunpack.c.l.b16 %v132
    %v812 = vunpack.c.l.b16 %v133
    %v813 = vunpack.c.l.b16 %v134
    %v814 = vunpack.c.l.b16 %v135
    %v815 = vunpack.c.l.b16 %v136
    %v816 = vunpack.c.l.b16 %v137
    %v817 = vunpack.c.l.b16 %v138
    %v818 = vunpack.c.l.b16 %v139
    %v819 = vunpack.c.l.b16 %v140
    %v820 = vunpack.c.l.b16 %v141
    %v821 = vunpack.c.l.b16 %v142
    %v822 = vunpack.c.l.b16 %v143
    %v823 = vunpack.c.l.b16 %v144
    %v824 = vunpack.c.l.b16 %v145
    %v825 = vunpack.c.l.b16 %v146
    %v826 = vunpack.c.l.b16 %v147
    %v827 = vunpack.c.l.b16 %v148
    %v828 = vunpack.c.l.b16 %v149
    %v829 = vunpack.c.l.b16 %v150
    %v830 = vunpack.c.l.b16 %v151
    %v831 = vunpack.c.l.b16 %v152
    %v832 = vunpack.c.l.b16 %v153
    %v833 = vunpack.c.l.b16 %v154
    %v834 = vunpack.c.l.b16 %v155
    %v835 = vunpack.c.l.b16 %v156
    %v836 = vunpack.c.l.b16 %v157
    %v837 = vunpack.c.l.b16 %v158
    %v838 = vunpack.c.l.b16 %v159
    %v839 = vunpack.c.l.b16 %v160
    %v840 = vunpack.c.l.b16 %v161
    %v841 = vunpack.c.l.b16 %v162
    %v842 = vunpack.c.l.b16 %v163
    %v843 = vunpack.c.l.b16 %v164
    %v844 = vunpack.c.l.b16 %v165
    %v845 = vunpack.c.l.b16 %v166
    %v846 = vunpack.c.l.b16 %v167
    %v847 = vunpack.c.l.b16 %v168
    %v848 = vunpack.c.l.b16 %v169
    %v849 = vunpack.c.l.b16 %v170
    %v850 = vunpack.c.l.b16 %v171
    %v851 = vunpack.c.l.b16 %v172
    %v852 = vunpack.c.l.b16 %v173
    %v853 = vunpack.c.l.b16 %v174
    %v854 = vunpack.c.l.b16 %v175
    %v855 = vunpack.c.l.b16 %v176
    %v856 = vunpack.c.l.b16 %v177
    %v857 = vunpack.c.l.b16 %v178
    %v858 = vunpack.c.l.b16 %v179
    %v859 = vunpack.c.l.b16 %v180
    %v860 = vunpack.c.l.b16 %v181
    %v861 = vunpack.c.l.b16 %v182
    %v862 = vunpack.c.l.b16 %v183
    %v863 = vunpack.c.l.b16 %v184
    %v864 = vunpack.c.l.b16 %v185
    %v865 = vunpack.c.l.b16 %v186
    %v866 = vunpack.c.l.b16 %v187
    %v867 = vunpack.c.l.b16 %v188
    %v868 = vunpack.c.l.b16 %v189
    %v869 = vunpack.c.l.b16 %v190
    %v870 = vunpack.c.l.b16 %v191
    %v871 = vunpack.c.l.b16 %v192
    %v872 = vunpack.c.l.b16 %v193
    %v873 = vunpack.c.l.b16 %v194
    %v874 = vunpack.c.l.b16 %v195
    %v875 = vunpack.c.l.b16 %v196
    %v876 = vunpack.c.l.b16 %v197
    %v877 = vunpack.c.l.b16 %v198
    %v878 = vunpack.c.l.b16 %v199
    %v879 = vunpack.c.l.b16 %v200
    %v880 = vunpack.c.l.b16 %v201
    %v881 = vunpack.c.l.b16 %v202
    %v882 = vunpack.c.l.b16 %v203
    %v883 = vunpack.c.l.b16 %v204
    %v884 = vunpack.c.l.b16 %v205
    %v885 = vunpack.c.l.b16 %v206
    %v886 = vunpack.c.l.b16 %v207
    %v887 = vunpack.c.l.b16 %v208
    %v888 = vunpack.c.l.b16 %v209
    %v889 = vunpack.c.l.b16 %v210
    %v890 = vunpack.c.l.b16 %v211
    %v891 = vunpack.c.l.b16 %v212
    %v892 = vunpack.c.l.b16 %v213
    %v893 = vunpack.c.l.b16 %v214
    %v894 = vunpack.c.l.b16 %v215
    %v895 = vunpack.c.l.b16 %v216
    %v896 = vunpack.c.l.b16 %v217
    %v897 = vunpack.c.l.b16 %v218
    %v898 = vunpack.c.l.b16 %v219
    %v899 = vunpack.c.l.b16 %v220
    %v900 = vunpack.c.l.b16 %v221
    %v901 = vunpack.c.l.b16 %v222
    %v902 = vunpack.c.l.b16 %v223
    %v903 = vunpack.c.l.b16 %v224
    %v904 = vunpack.c.l.b16 %v225
    %v905 = vunpack.c.l.b16 %v226
    %v906 = vunpack.c.l.b16 %v227
    %v907 = vunpack.c.l.b16 %v228
    %v908 = vunpack.c.l.b16 %v229
    %v909 = vunpack.c.l.b16 %v230
    %v910 = vunpack.c.l.b16 %v231
    %v911 = vunpack.c.l.b16 %v232
    %v912 = vunpack.c.l.b16 %v233
    %v913 = vunpack.c.l.b16 %v234
    %v914 = vunpack.c.l.b16 %v235
    %v915 = vunpack.c.l.b16 %v236
    %v916 = vunpack.c.l.b16 %v237
    %v917 = vunpack.c.l.b16 %v238
    %v918 = vunpack.c.l.b16 %v239
    %v919 = vunpack.c.l.b16 %v240
    %v920 = vunpack.c.l.b16 %v241
    %v921 = vunpack.c.l.b16 %v242
    %v922 = vunpack.c.l.b16 %v243
    %v923 = vunpack.c.l.b16 %v244
    %v924 = vunpack.c.l.b16 %v245
    %v925 = vunpack.c.l.b16 %v246
    %v926 = vunpack.c.l.b16 %v247
    %v927 = vunpack.c.l.b16 %v248
    %v928 = vunpack.c.l.b16 %v249
    %v929 = vunpack.c.l.b16 %v250
    %v930 = vunpack.c.l.b16 %v251
    %v931 = vunpack.c.l.b16 %v252
    %v932 = vunpack.c.l.b16 %v253
    %v933 = vunpack.c.l.b16 %v254
    %v934 = vunpack.c.l.b16 %v255
    %v935 = vunpack.c.l.b16 %v256
    %v936 = vunpack.c.l.b16 %v257
    %v937 = vunpack.c.l.b16 %v258
    %v938 = vunpack.c.l.b16 %v259
    %v939 = vunpack.c.l.b16 %v260
    %v940 = vunpack.c.l.b16 %v261
    %v941 = vunpack.c.l.b16 %v262
    %v942 = vunpack.c.l.b16 %v263
    %v943 = vunpack.c.l.b16 %v264
    %v944 = vunpack.c.l.b16 %v265
    %v945 = vunpack.c.l.b16 %v266
    %v946 = vunpack.c.l.b16 %v267
    %v947 = vunpack.c.l.b16 %v268
    %v948 = vunpack.c.l.b16 %v269
    %v949 = vunpack.c.l.b16 %v270
    %v950 = vunpack.c.l.b16 %v271
    %v951 = vunpack.c.l.b16 %v272
    %v952 = vunpack.c.l.b16 %v273
    %v953 = vunpack.c.l.b16 %v274
    %v954 = vunpack.c.l.b16 %v275
    %v955 = vunpack.c.l.b16 %v276
    %v956 = vunpack.c.l.b16 %v277
    %v957 = vunpack.c.l.b16 %v278
    %v958 = vunpack.c.l.b16 %v279
    %v959 = vunpack.c.l.b16 %v280
    %v960 = vunpack.c.l.b16 %v281
    %v961 = vunpack.c.l.b16 %v282
    %v962 = vunpack.c.l.b16 %v283
    %v963 = vunpack.c.l.b16 %v284
    %v964 = vunpack.c.l.b16 %v285
    %v965 = vunpack.c.l.b16 %v286
    %v966 = vunpack.c.l.b16 %v287
    %v967 = vunpack.c.l.b16 %v288
    %v968 = vunpack.c.l.b16 %v289
    %v969 = vunpack.c.l.b16 %v290
    %v970 = vunpack.c.l.b16 %v291
    %v971 = vunpack.c.l.b16 %v292
    %v972 = vunpack.c.l.b16 %v293
    %v973 = vunpack.c.l.b16 %v294
    %v974 = vunpack.c.l.b16 %v295
    %v975 = vunpack.c.l.b16 %v296
    %v976 = vunpack.c.l.b16 %v297
    %v977 = vunpack.c.l.b16 %v298
    %v978 = vunpack.c.l.b16 %v299
    %v979 = vunpack.c.l.b16 %v300
    %v980 = vunpack.c.l.b16 %v301
    %v981 = vunpack.c.l.b16 %v302
    %v982 = vunpack.c.l.b16 %v303
    %v983 = vunpack.c.l.b16 %v304
    %v984 = vunpack.c.l.b16 %v305
    %v985 = vunpack.c.l.b16 %v306
    %v986 = vunpack.c.l.b16 %v307
    %v987 = vunpack.c.l.b16 %v308
    %v988 = vunpack.c.l.b16 %v309
    %v989 = vunpack.c.l.b16 %v310
    %v990 = vunpack.c.l.b16 %v311
    %v991 = vunpack.c.l.b16 %v312
    %v992 = vunpack.c.l.b16 %v313
    %v993 = vunpack.c.l.b16 %v314
    %v994 = vunpack.c.l.b16 %v315
    %v995 = vunpack.c.l.b16 %v316
    %v996 = vunpack.c.l.b16 %v317
    %v997 = vunpack.c.l.b16 %v318
    %v998 = vunpack.c.l.b16 %v319
    %v999 = vunpack.c.l.b16 %v320
    %v1000 = vunpack.c.l.b16 %v321
    %v1001 = vunpack.c.l.b16 %v322
    %v1002 = vunpack.c.l.b16 %v323
    %v1003 = vunpack.c.l.b16 %v324
    %v1004 = vunpack.c.l.b16 %v325
    %v1005 = vunpack.c.l.b16 %v326
    %v1006 = vunpack.c.l.b16 %v327
    %v1007 = vunpack.c.l.b16 %v328
    %v1008 = vunpack.c.l.b16 %v329
    %v1009 = vunpack.c.l.b16 %v330
    %v1010 = vunpack.c.l.b16 %v331
    %v1011 = vunpack.c.l.b16 %v332
    %v1012 = vunpack.c.l.b16 %v333
    %v1013 = vunpack.c.l.b16 %v334
    %v1014 = vunpack.c.l.b16 %v335
    %v1015 = vunpack.c.l.b16 %v336
    %v1016 = vunpack.c.l.b16 %v337
    %v1017 = vunpack.c.l.b16 %v338
    %v1018 = vunpack.c.l.b16 %v339
    %v1019 = vunpack.c.l.b16 %v340
    %v1020 = vunpack.c.l.b16 %v341
    %v1021 = vunpack.c.l.b16 %v342
    %v1022 = vunpack.c.l.b16 %v343
    %v1023 = vunpack.c.l.b16 %v344
    %v1024 = vunpack.c.l.b16 %v345
    %v1025 = vunpack.c.l.b16 %v346
    %v1026 = vunpack.c.l.b16 %v347
    %v1027 = vunpack.c.l.b16 %v348
    %v1028 = vunpack.c.l.b16 %v349
    %v1029 = vunpack.c.l.b16 %v350
    %v1030 = vunpack.c.l.b16 %v351
    %v1031 = vunpack.c.l.b16 %v352
    %v1032 = vunpack.c.l.b16 %v353
    %v1033 = vunpack.c.l.b16 %v354
    %v1034 = vunpack.c.l.b16 %v355
    %v1035 = vunpack.c.l.b16 %v356
    %v1036 = vunpack.c.l.b16 %v357
    %v1037 = vpack.c.b16 %v782, %v781
    %v1038 = vpack.c.b16 %v784, %v783
    %v1039 = vpack.c.b16 %v786, %v785
    %v1040 = vpack.c.b16 %v788, %v787
    %v1041 = vpack.c.b16 %v790, %v789
    %v1042 = vpack.c.b16 %v792, %v791
    %v1043 = vpack.c.b16 %v794, %v793
    %v1044 = vpack.c.b16 %v796, %v795
    %v1045 = vpack.c.b16 %v798, %v797
    %v1046 = vpack.c.b16 %v800, %v799
    %v1047 = vpack.c.b16 %v802, %v801
    %v1048 = vpack.c.b16 %v804, %v803
    %v1049 = vpack.c.b16 %v806, %v805
    %v1050 = vpack.c.b16 %v808, %v807
    %v1051 = vpack.c.b16 %v810, %v809
    %v1052 = vpack.c.b16 %v812, %v811
    %v1053 = vpack.c.b16 %v814, %v813
    %v1054 = vpack.c.b16 %v816, %v815
    %v1055 = vpack.c.b16 %v818, %v817
    %v1056 = vpack.c.b16 %v820, %v819
    %v1057 = vpack.c.b16 %v822, %v821
    %v1058 = vpack.c.b16 %v824, %v823
    %v1059 = vpack.c.b16 %v826, %v825
    %v1060 = vpack.c.b16 %v828, %v827
    %v1061 = vpack.c.b16 %v830, %v829
    %v1062 = vpack.c.b16 %v832, %v831
    %v1063 = vpack.c.b16 %v834, %v833
    %v1064 = vpack.c.b16 %v836, %v835
    %v1065 = vpack.c.b16 %v838, %v837
    %v1066 = vpack.c.b16 %v840, %v839
    %v1067 = vpack.c.b16 %v842, %v841
    %v1068 = vpack.c.b16 %v844, %v843
    %v1069 = vpack.c.b16 %v846, %v845
    %v1070 = vpack.c.b16 %v848, %v847
    %v1071 = vpack.c.b16 %v850, %v849
    %v1072 = vpack.c.b16 %v852, %v851
    %v1073 = vpack.c.b16 %v854, %v853
    %v1074 = vpack.c.b16 %v856, %v855
    %v1075 = vpack.c.b16 %v858, %v857
    %v1076 = vpack.c.b16 %v860, %v859
    %v1077 = vpack.c.b16 %v862, %v861
    %v1078 = vpack.c.b16 %v864, %v863
    %v1079 = vpack.c.b16 %v866, %v865
    %v1080 = vpack.c.b16 %v868, %v867
    %v1081 = vpack.c.b16 %v870, %v869
    %v1082 = vpack.c.b16 %v872, %v871
    %v1083 = vpack.c.b16 %v874, %v873
    %v1084 = vpack.c.b16 %v876, %v875
    %v1085 = vpack.c.b16 %v878, %v877
    %v1086 = vpack.c.b16 %v880, %v879
    %v1087 = vpack.c.b16 %v882, %v881
    %v1088 = vpack.c.b16 %v884, %v883
    %v1089 = vpack.c.b16 %v886, %v885
    %v1090 = vpack.c.b16 %v888, %v887
    %v1091 = vpack.c.b16 %v890, %v889
    %v1092 = vpack.c.b16 %v892, %v891
    %v1093 = vpack.c.b16 %v894, %v893
    %v1094 = vpack.c.b16 %v896, %v895
    %v1095 = vpack.c.b16 %v898, %v897
    %v1096 = vpack.c.b16 %v900, %v899
    %v1097 = vpack.c.b16 %v902, %v901
    %v1098 = vpack.c.b16 %v904, %v903
    %v1099 = vpack.c.b16 %v906, %v905
    %v1100 = vpack.c.b16 %v908, %v907
    %v1101 = vpack.c.b16 %v910, %v909
    %v1102 = vpack.c.b16 %v912, %v911
    %v1103 = vpack.c.b16 %v914, %v913
    %v1104 = vpack.c.b16 %v916, %v915
    %v1105 = vpack.c.b16 %v918, %v917
    %v1106 = vpack.c.b16 %v920, %v919
    %v1107 = vpack.c.b16 %v922, %v921
    %v1108 = vpack.c.b16 %v924, %v923
    %v1109 = vpack.c.b16 %v926, %v925
    %v1110 = vpack.c.b16 %v928, %v927
    %v1111 = vpack.c.b16 %v930, %v929
    %v1112 = vpack.c.b16 %v932, %v931
    %v1113 = vpack.c.b16 %v934, %v933
    %v1114 = vpack.c.b16 %v936, %v935
    %v1115 = vpack.c.b16 %v938, %v937
    %v1116 = vpack.c.b16 %v940, %v939
    %v1117 = vpack.c.b16 %v942, %v941
    %v1118 = vpack.c.b16 %v944, %v943
    %v1119 = vpack.c.b16 %v946, %v945
    %v1120 = vpack.c.b16 %v948, %v947
    %v1121 = vpack.c.b16 %v950, %v949
    %v1122 = vpack.c.b16 %v952, %v951
    %v1123 = vpack.c.b16 %v954, %v953
    %v1124 = vpack.c.b16 %v956, %v955
    %v1125 = vpack.c.b16 %v958, %v957
    %v1126 = vpack.c.b16 %v960, %v959
    %v1127 = vpack.c.b16 %v962, %v961
    %v1128 = vpack.c.b16 %v964, %v963
    %v1129 = vpack.c.b16 %v966, %v965
    %v1130 = vpack.c.b16 %v968, %v967
    %v1131 = vpack.c.b16 %v970, %v969
    %v1132 = vpack.c.b16 %v972, %v971
    %v1133 = vpack.c.b16 %v974, %v973
    %v1134 = vpack.c.b16 %v976, %v975
    %v1135 = vpack.c.b16 %v978, %v977
    %v1136 = vpack.c.b16 %v980, %v979
    %v1137 = vpack.c.b16 %v982, %v981
    %v1138 = vpack.c.b16 %v984, %v983
    %v1139 = vpack.c.b16 %v986, %v985
    %v1140 = vpack.c.b16 %v988, %v987
    %v1141 = vpack.c.b16 %v990, %v989
    %v1142 = vpack.c.b16 %v992, %v991
    %v1143 = vpack.c.b16 %v994, %v993
    %v1144 = vpack.c.b16 %v996, %v995
    %v1145 = vpack.c.b16 %v998, %v997
    %v1146 = vpack.c.b16 %v1000, %v999
    %v1147 = vpack.c.b16 %v1002, %v1001
    %v1148 = vpack.c.b16 %v1004, %v1003
    %v1149 = vpack.c.b16 %v1006, %v1005
    %v1150 = vpack.c.b16 %v1008, %v1007
    %v1151 = vpack.c.b16 %v1010, %v1009
    %v1152 = vpack.c.b16 %v1012, %v1011
    %v1153 = vpack.c.b16 %v1014, %v1013
    %v1154 = vpack.c.b16 %v1016, %v1015
    %v1155 = vpack.c.b16 %v1018, %v1017
    %v1156 = vpack.c.b16 %v1020, %v1019
    %v1157 = vpack.c.b16 %v1022, %v1021
    %v1158 = vpack.c.b16 %v1024, %v1023
    %v1159 = vpack.c.b16 %v1026, %v1025
    %v1160 = vpack.c.b16 %v1028, %v1027
    %v1161 = vpack.c.b16 %v1030, %v1029
    %v1162 = vpack.c.b16 %v1032, %v1031
    %v1163 = vpack.c.b16 %v1034, %v1033
    %v1164 = vpack.c.b16 %v1036, %v1035
    %1293 = vmatprep.subr.bf16.mxu0 0
    %1294 = vmatpush1.bf16.msra.mxu0 %v1044
    %1295 = vmatprep.subr.bf16.mxu0 0
    %1296 = vmatpush1.bf16.msra.mxu0 %v1043
    %1297 = vmatprep.subr.bf16.mxu0 0
    %1298 = vmatpush1.bf16.msra.mxu0 %v1042
    %1299 = vmatprep.subr.bf16.mxu0 0
    %1300 = vmatpush1.bf16.msra.mxu0 %v1041
    %1301 = vmatprep.subr.bf16.mxu0 0
    %1302 = vmatpush1.bf16.msra.mxu0 %v1040
    %1303 = vmatprep.subr.bf16.mxu0 0
    %1304 = vmatpush1.bf16.msra.mxu0 %v1039
    %1305 = vmatprep.subr.bf16.mxu0 0
    %1306 = vmatpush1.bf16.msra.mxu0 %v1038
    %1307 = vmatprep.subr.bf16.mxu0 0
    %1308 = vmatpush1.bf16.msra.mxu0 %v1037
    %1309 = vmatprep.subr.bf16.mxu0 0
    %1310 = vmatpush2.bf16.msra.mxu0 %v1052
    %1311 = vmatprep.subr.bf16.mxu0 0
    %1312 = vmatpush2.bf16.msra.mxu0 %v1051
    %1313 = vmatprep.subr.bf16.mxu0 0
    %1314 = vmatpush2.bf16.msra.mxu0 %v1050
    %1315 = vmatprep.subr.bf16.mxu0 0
    %1316 = vmatpush2.bf16.msra.mxu0 %v1049
    %1317 = vmatprep.subr.bf16.mxu0 0
    %1318 = vmatpush2.bf16.msra.mxu0 %v1048
    %1319 = vmatprep.subr.bf16.mxu0 0
    %1320 = vmatpush2.bf16.msra.mxu0 %v1047
    %1321 = vmatprep.subr.bf16.mxu0 0
    %1322 = vmatpush2.bf16.msra.mxu0 %v1046
    %1323 = vmatprep.subr.bf16.mxu0 0
    %1324 = vmatpush2.bf16.msra.mxu0 %v1045
    %1325 = vmatprep.mubr.bf16.mxu0 %v462
    %1326 = vmatmul.mubr.bf16.gmra.mxu0 %v461
    %v1327 = vpop.f32.mrf.mxu0
    %v1328 = vadd.f32 %v363, %v1327
    %v1329 = vpop.f32.mrf.mxu0
    %v1330 = vpop.f32.mrf.mxu0
    %v1331 = vadd.f32 %v363, %v1330
    %v1332 = vpop.f32.mrf.mxu0
    %1333 = vmatprep.mubr.bf16.mxu0 %v478
    %1334 = vmatmul.mubr.bf16.gmra.mxu0 %v477
    %v1335 = vpop.f32.mrf.mxu0
    %v1336 = vadd.f32 %v363, %v1335
    %v1337 = vpop.f32.mrf.mxu0
    %v1338 = vpop.f32.mrf.mxu0
    %v1339 = vadd.f32 %v363, %v1338
    %v1340 = vpop.f32.mrf.mxu0
    %1341 = vdwg.mxu0
    %1342 = vmatprep.subr.bf16.mxu0 0
    %1343 = vmatpush1.bf16.msra.mxu0 %v1060
    %1344 = vmatprep.subr.bf16.mxu0 0
    %1345 = vmatpush1.bf16.msra.mxu0 %v1059
    %1346 = vmatprep.subr.bf16.mxu0 0
    %1347 = vmatpush1.bf16.msra.mxu0 %v1058
    %1348 = vmatprep.subr.bf16.mxu0 0
    %1349 = vmatpush1.bf16.msra.mxu0 %v1057
    %1350 = vmatprep.subr.bf16.mxu0 0
    %1351 = vmatpush1.bf16.msra.mxu0 %v1056
    %1352 = vmatprep.subr.bf16.mxu0 0
    %1353 = vmatpush1.bf16.msra.mxu0 %v1055
    %1354 = vmatprep.subr.bf16.mxu0 0
    %1355 = vmatpush1.bf16.msra.mxu0 %v1054
    %1356 = vmatprep.subr.bf16.mxu0 0
    %1357 = vmatpush1.bf16.msra.mxu0 %v1053
    %1358 = vmatprep.subr.bf16.mxu0 0
    %1359 = vmatpush2.bf16.msra.mxu0 %v1068
    %1360 = vmatprep.subr.bf16.mxu0 0
    %1361 = vmatpush2.bf16.msra.mxu0 %v1067
    %1362 = vmatprep.subr.bf16.mxu0 0
    %1363 = vmatpush2.bf16.msra.mxu0 %v1066
    %1364 = vmatprep.subr.bf16.mxu0 0
    %1365 = vmatpush2.bf16.msra.mxu0 %v1065
    %1366 = vmatprep.subr.bf16.mxu0 0
    %1367 = vmatpush2.bf16.msra.mxu0 %v1064
    %1368 = vmatprep.subr.bf16.mxu0 0
    %1369 = vmatpush2.bf16.msra.mxu0 %v1063
    %1370 = vmatprep.subr.bf16.mxu0 0
    %1371 = vmatpush2.bf16.msra.mxu0 %v1062
    %1372 = vmatprep.subr.bf16.mxu0 0
    %1373 = vmatpush2.bf16.msra.mxu0 %v1061
    %1374 = vmatprep.mubr.bf16.mxu0 %v464
    %1375 = vmatmul.mubr.bf16.gmra.mxu0 %v463
    %v1376 = vpop.f32.mrf.mxu0
    %v1377 = vadd.f32 %v1328, %v1376
    %v1378 = vpop.f32.mrf.mxu0
    %v1379 = vpop.f32.mrf.mxu0
    %v1380 = vadd.f32 %v1331, %v1379
    %v1381 = vpop.f32.mrf.mxu0
    %1382 = vmatprep.mubr.bf16.mxu0 %v480
    %1383 = vmatmul.mubr.bf16.gmra.mxu0 %v479
    %v1384 = vpop.f32.mrf.mxu0
    %v1385 = vadd.f32 %v1336, %v1384
    %v1386 = vpop.f32.mrf.mxu0
    %v1387 = vpop.f32.mrf.mxu0
    %v1388 = vadd.f32 %v1339, %v1387
    %v1389 = vpop.f32.mrf.mxu0
    %1390 = vdwg.mxu0
    %1391 = vmatprep.subr.bf16.mxu0 0
    %1392 = vmatpush1.bf16.msra.mxu0 %v1076
    %1393 = vmatprep.subr.bf16.mxu0 0
    %1394 = vmatpush1.bf16.msra.mxu0 %v1075
    %1395 = vmatprep.subr.bf16.mxu0 0
    %1396 = vmatpush1.bf16.msra.mxu0 %v1074
    %1397 = vmatprep.subr.bf16.mxu0 0
    %1398 = vmatpush1.bf16.msra.mxu0 %v1073
    %1399 = vmatprep.subr.bf16.mxu0 0
    %1400 = vmatpush1.bf16.msra.mxu0 %v1072
    %1401 = vmatprep.subr.bf16.mxu0 0
    %1402 = vmatpush1.bf16.msra.mxu0 %v1071
    %1403 = vmatprep.subr.bf16.mxu0 0
    %1404 = vmatpush1.bf16.msra.mxu0 %v1070
    %1405 = vmatprep.subr.bf16.mxu0 0
    %1406 = vmatpush1.bf16.msra.mxu0 %v1069
    %1407 = vmatprep.subr.bf16.mxu0 0
    %1408 = vmatpush2.bf16.msra.mxu0 %v1084
    %1409 = vmatprep.subr.bf16.mxu0 0
    %1410 = vmatpush2.bf16.msra.mxu0 %v1083
    %1411 = vmatprep.subr.bf16.mxu0 0
    %1412 = vmatpush2.bf16.msra.mxu0 %v1082
    %1413 = vmatprep.subr.bf16.mxu0 0
    %1414 = vmatpush2.bf16.msra.mxu0 %v1081
    %1415 = vmatprep.subr.bf16.mxu0 0
    %1416 = vmatpush2.bf16.msra.mxu0 %v1080
    %1417 = vmatprep.subr.bf16.mxu0 0
    %1418 = vmatpush2.bf16.msra.mxu0 %v1079
    %1419 = vmatprep.subr.bf16.mxu0 0
    %1420 = vmatpush2.bf16.msra.mxu0 %v1078
    %1421 = vmatprep.subr.bf16.mxu0 0
    %1422 = vmatpush2.bf16.msra.mxu0 %v1077
    %1423 = vmatprep.mubr.bf16.mxu0 %v466
    %1424 = vmatmul.mubr.bf16.gmra.mxu0 %v465
    %v1425 = vpop.f32.mrf.mxu0
    %v1426 = vadd.f32 %v1377, %v1425
    %v1427 = vpop.f32.mrf.mxu0
    %v1428 = vpop.f32.mrf.mxu0
    %v1429 = vadd.f32 %v1380, %v1428
    %v1430 = vpop.f32.mrf.mxu0
    %1431 = vmatprep.mubr.bf16.mxu0 %v482
    %1432 = vmatmul.mubr.bf16.gmra.mxu0 %v481
    %v1433 = vpop.f32.mrf.mxu0
    %v1434 = vadd.f32 %v1385, %v1433
    %v1435 = vpop.f32.mrf.mxu0
    %v1436 = vpop.f32.mrf.mxu0
    %v1437 = vadd.f32 %v1388, %v1436
    %v1438 = vpop.f32.mrf.mxu0
    %1439 = vdwg.mxu0
    %1440 = vmatprep.subr.bf16.mxu0 0
    %1441 = vmatpush1.bf16.msra.mxu0 %v1092
    %1442 = vmatprep.subr.bf16.mxu0 0
    %1443 = vmatpush1.bf16.msra.mxu0 %v1091
    %1444 = vmatprep.subr.bf16.mxu0 0
    %1445 = vmatpush1.bf16.msra.mxu0 %v1090
    %1446 = vmatprep.subr.bf16.mxu0 0
    %1447 = vmatpush1.bf16.msra.mxu0 %v1089
    %1448 = vmatprep.subr.bf16.mxu0 0
    %1449 = vmatpush1.bf16.msra.mxu0 %v1088
    %1450 = vmatprep.subr.bf16.mxu0 0
    %1451 = vmatpush1.bf16.msra.mxu0 %v1087
    %1452 = vmatprep.subr.bf16.mxu0 0
    %1453 = vmatpush1.bf16.msra.mxu0 %v1086
    %1454 = vmatprep.subr.bf16.mxu0 0
    %1455 = vmatpush1.bf16.msra.mxu0 %v1085
    %1456 = vmatprep.subr.bf16.mxu0 0
    %1457 = vmatpush2.bf16.msra.mxu0 %v1100
    %1458 = vmatprep.subr.bf16.mxu0 0
    %1459 = vmatpush2.bf16.msra.mxu0 %v1099
    %1460 = vmatprep.subr.bf16.mxu0 0
    %1461 = vmatpush2.bf16.msra.mxu0 %v1098
    %1462 = vmatprep.subr.bf16.mxu0 0
    %1463 = vmatpush2.bf16.msra.mxu0 %v1097
    %1464 = vmatprep.subr.bf16.mxu0 0
    %1465 = vmatpush2.bf16.msra.mxu0 %v1096
    %1466 = vmatprep.subr.bf16.mxu0 0
    %1467 = vmatpush2.bf16.msra.mxu0 %v1095
    %1468 = vmatprep.subr.bf16.mxu0 0
    %1469 = vmatpush2.bf16.msra.mxu0 %v1094
    %1470 = vmatprep.subr.bf16.mxu0 0
    %1471 = vmatpush2.bf16.msra.mxu0 %v1093
    %1472 = vmatprep.mubr.bf16.mxu0 %v468
    %1473 = vmatmul.mubr.bf16.gmra.mxu0 %v467
    %v1474 = vpop.f32.mrf.mxu0
    %v1475 = vadd.f32 %v1426, %v1474
    %v1476 = vpop.f32.mrf.mxu0
    %v1477 = vpop.f32.mrf.mxu0
    %v1478 = vadd.f32 %v1429, %v1477
    %v1479 = vpop.f32.mrf.mxu0
    %1480 = vmatprep.mubr.bf16.mxu0 %v484
    %1481 = vmatmul.mubr.bf16.gmra.mxu0 %v483
    %v1482 = vpop.f32.mrf.mxu0
    %v1483 = vadd.f32 %v1434, %v1482
    %v1484 = vpop.f32.mrf.mxu0
    %v1485 = vpop.f32.mrf.mxu0
    %v1486 = vadd.f32 %v1437, %v1485
    %v1487 = vpop.f32.mrf.mxu0
    %1488 = vdwg.mxu0
    %1489 = vmatprep.subr.bf16.mxu0 0
    %1490 = vmatpush1.bf16.msra.mxu0 %v1108
    %1491 = vmatprep.subr.bf16.mxu0 0
    %1492 = vmatpush1.bf16.msra.mxu0 %v1107
    %1493 = vmatprep.subr.bf16.mxu0 0
    %1494 = vmatpush1.bf16.msra.mxu0 %v1106
    %1495 = vmatprep.subr.bf16.mxu0 0
    %1496 = vmatpush1.bf16.msra.mxu0 %v1105
    %1497 = vmatprep.subr.bf16.mxu0 0
    %1498 = vmatpush1.bf16.msra.mxu0 %v1104
    %1499 = vmatprep.subr.bf16.mxu0 0
    %1500 = vmatpush1.bf16.msra.mxu0 %v1103
    %1501 = vmatprep.subr.bf16.mxu0 0
    %1502 = vmatpush1.bf16.msra.mxu0 %v1102
    %1503 = vmatprep.subr.bf16.mxu0 0
    %1504 = vmatpush1.bf16.msra.mxu0 %v1101
    %1505 = vmatprep.subr.bf16.mxu0 0
    %1506 = vmatpush2.bf16.msra.mxu0 %v1116
    %1507 = vmatprep.subr.bf16.mxu0 0
    %1508 = vmatpush2.bf16.msra.mxu0 %v1115
    %1509 = vmatprep.subr.bf16.mxu0 0
    %1510 = vmatpush2.bf16.msra.mxu0 %v1114
    %1511 = vmatprep.subr.bf16.mxu0 0
    %1512 = vmatpush2.bf16.msra.mxu0 %v1113
    %1513 = vmatprep.subr.bf16.mxu0 0
    %1514 = vmatpush2.bf16.msra.mxu0 %v1112
    %1515 = vmatprep.subr.bf16.mxu0 0
    %1516 = vmatpush2.bf16.msra.mxu0 %v1111
    %1517 = vmatprep.subr.bf16.mxu0 0
    %1518 = vmatpush2.bf16.msra.mxu0 %v1110
    %1519 = vmatprep.subr.bf16.mxu0 0
    %1520 = vmatpush2.bf16.msra.mxu0 %v1109
    %1521 = vmatprep.mubr.bf16.mxu0 %v470
    %1522 = vmatmul.mubr.bf16.gmra.mxu0 %v469
    %v1523 = vpop.f32.mrf.mxu0
    %v1524 = vadd.f32 %v1475, %v1523
    %v1525 = vpop.f32.mrf.mxu0
    %v1526 = vpop.f32.mrf.mxu0
    %v1527 = vadd.f32 %v1478, %v1526
    %v1528 = vpop.f32.mrf.mxu0
    %1529 = vmatprep.mubr.bf16.mxu0 %v486
    %1530 = vmatmul.mubr.bf16.gmra.mxu0 %v485
    %v1531 = vpop.f32.mrf.mxu0
    %v1532 = vadd.f32 %v1483, %v1531
    %v1533 = vpop.f32.mrf.mxu0
    %v1534 = vpop.f32.mrf.mxu0
    %v1535 = vadd.f32 %v1486, %v1534
    %v1536 = vpop.f32.mrf.mxu0
    %1537 = vdwg.mxu0
    %1538 = vmatprep.subr.bf16.mxu0 0
    %1539 = vmatpush1.bf16.msra.mxu0 %v1124
    %1540 = vmatprep.subr.bf16.mxu0 0
    %1541 = vmatpush1.bf16.msra.mxu0 %v1123
    %1542 = vmatprep.subr.bf16.mxu0 0
    %1543 = vmatpush1.bf16.msra.mxu0 %v1122
    %1544 = vmatprep.subr.bf16.mxu0 0
    %1545 = vmatpush1.bf16.msra.mxu0 %v1121
    %1546 = vmatprep.subr.bf16.mxu0 0
    %1547 = vmatpush1.bf16.msra.mxu0 %v1120
    %1548 = vmatprep.subr.bf16.mxu0 0
    %1549 = vmatpush1.bf16.msra.mxu0 %v1119
    %1550 = vmatprep.subr.bf16.mxu0 0
    %1551 = vmatpush1.bf16.msra.mxu0 %v1118
    %1552 = vmatprep.subr.bf16.mxu0 0
    %1553 = vmatpush1.bf16.msra.mxu0 %v1117
    %1554 = vmatprep.subr.bf16.mxu0 0
    %1555 = vmatpush2.bf16.msra.mxu0 %v1132
    %1556 = vmatprep.subr.bf16.mxu0 0
    %1557 = vmatpush2.bf16.msra.mxu0 %v1131
    %1558 = vmatprep.subr.bf16.mxu0 0
    %1559 = vmatpush2.bf16.msra.mxu0 %v1130
    %1560 = vmatprep.subr.bf16.mxu0 0
    %1561 = vmatpush2.bf16.msra.mxu0 %v1129
    %1562 = vmatprep.subr.bf16.mxu0 0
    %1563 = vmatpush2.bf16.msra.mxu0 %v1128
    %1564 = vmatprep.subr.bf16.mxu0 0
    %1565 = vmatpush2.bf16.msra.mxu0 %v1127
    %1566 = vmatprep.subr.bf16.mxu0 0
    %1567 = vmatpush2.bf16.msra.mxu0 %v1126
    %1568 = vmatprep.subr.bf16.mxu0 0
    %1569 = vmatpush2.bf16.msra.mxu0 %v1125
    %1570 = vmatprep.mubr.bf16.mxu0 %v472
    %1571 = vmatmul.mubr.bf16.gmra.mxu0 %v471
    %v1572 = vpop.f32.mrf.mxu0
    %v1573 = vadd.f32 %v1524, %v1572
    %v1574 = vpop.f32.mrf.mxu0
    %v1575 = vpop.f32.mrf.mxu0
    %v1576 = vadd.f32 %v1527, %v1575
    %v1577 = vpop.f32.mrf.mxu0
    %1578 = vmatprep.mubr.bf16.mxu0 %v488
    %1579 = vmatmul.mubr.bf16.gmra.mxu0 %v487
    %v1580 = vpop.f32.mrf.mxu0
    %v1581 = vadd.f32 %v1532, %v1580
    %v1582 = vpop.f32.mrf.mxu0
    %v1583 = vpop.f32.mrf.mxu0
    %v1584 = vadd.f32 %v1535, %v1583
    %v1585 = vpop.f32.mrf.mxu0
    %1586 = vdwg.mxu0
    %1587 = vmatprep.subr.bf16.mxu0 0
    %1588 = vmatpush1.bf16.msra.mxu0 %v1140
    %1589 = vmatprep.subr.bf16.mxu0 0
    %1590 = vmatpush1.bf16.msra.mxu0 %v1139
    %1591 = vmatprep.subr.bf16.mxu0 0
    %1592 = vmatpush1.bf16.msra.mxu0 %v1138
    %1593 = vmatprep.subr.bf16.mxu0 0
    %1594 = vmatpush1.bf16.msra.mxu0 %v1137
    %1595 = vmatprep.subr.bf16.mxu0 0
    %1596 = vmatpush1.bf16.msra.mxu0 %v1136
    %1597 = vmatprep.subr.bf16.mxu0 0
    %1598 = vmatpush1.bf16.msra.mxu0 %v1135
    %1599 = vmatprep.subr.bf16.mxu0 0
    %1600 = vmatpush1.bf16.msra.mxu0 %v1134
    %1601 = vmatprep.subr.bf16.mxu0 0
    %1602 = vmatpush1.bf16.msra.mxu0 %v1133
    %1603 = vmatprep.subr.bf16.mxu0 0
    %1604 = vmatpush2.bf16.msra.mxu0 %v1148
    %1605 = vmatprep.subr.bf16.mxu0 0
    %1606 = vmatpush2.bf16.msra.mxu0 %v1147
    %1607 = vmatprep.subr.bf16.mxu0 0
    %1608 = vmatpush2.bf16.msra.mxu0 %v1146
    %1609 = vmatprep.subr.bf16.mxu0 0
    %1610 = vmatpush2.bf16.msra.mxu0 %v1145
    %1611 = vmatprep.subr.bf16.mxu0 0
    %1612 = vmatpush2.bf16.msra.mxu0 %v1144
    %1613 = vmatprep.subr.bf16.mxu0 0
    %1614 = vmatpush2.bf16.msra.mxu0 %v1143
    %1615 = vmatprep.subr.bf16.mxu0 0
    %1616 = vmatpush2.bf16.msra.mxu0 %v1142
    %1617 = vmatprep.subr.bf16.mxu0 0
    %1618 = vmatpush2.bf16.msra.mxu0 %v1141
    %1619 = vmatprep.mubr.bf16.mxu0 %v474
    %1620 = vmatmul.mubr.bf16.gmra.mxu0 %v473
    %v1621 = vpop.f32.mrf.mxu0
    %v1622 = vadd.f32 %v1573, %v1621
    %v1623 = vpop.f32.mrf.mxu0
    %v1624 = vpop.f32.mrf.mxu0
    %v1625 = vadd.f32 %v1576, %v1624
    %v1626 = vpop.f32.mrf.mxu0
    %1627 = vmatprep.mubr.bf16.mxu0 %v490
    %1628 = vmatmul.mubr.bf16.gmra.mxu0 %v489
    %v1629 = vpop.f32.mrf.mxu0
    %v1630 = vadd.f32 %v1581, %v1629
    %v1631 = vpop.f32.mrf.mxu0
    %v1632 = vpop.f32.mrf.mxu0
    %v1633 = vadd.f32 %v1584, %v1632
    %v1634 = vpop.f32.mrf.mxu0
    %1635 = vdwg.mxu0
    %1636 = vmatprep.subr.bf16.mxu0 0
    %1637 = vmatpush1.bf16.msra.mxu0 %v1156
    %1638 = vmatprep.subr.bf16.mxu0 0
    %1639 = vmatpush1.bf16.msra.mxu0 %v1155
    %1640 = vmatprep.subr.bf16.mxu0 0
    %1641 = vmatpush1.bf16.msra.mxu0 %v1154
    %1642 = vmatprep.subr.bf16.mxu0 0
    %1643 = vmatpush1.bf16.msra.mxu0 %v1153
    %1644 = vmatprep.subr.bf16.mxu0 0
    %1645 = vmatpush1.bf16.msra.mxu0 %v1152
    %1646 = vmatprep.subr.bf16.mxu0 0
    %1647 = vmatpush1.bf16.msra.mxu0 %v1151
    %1648 = vmatprep.subr.bf16.mxu0 0
    %1649 = vmatpush1.bf16.msra.mxu0 %v1150
    %1650 = vmatprep.subr.bf16.mxu0 0
    %1651 = vmatpush1.bf16.msra.mxu0 %v1149
    %1652 = vmatprep.subr.bf16.mxu0 0
    %1653 = vmatpush2.bf16.msra.mxu0 %v1164
    %1654 = vmatprep.subr.bf16.mxu0 0
    %1655 = vmatpush2.bf16.msra.mxu0 %v1163
    %1656 = vmatprep.subr.bf16.mxu0 0
    %1657 = vmatpush2.bf16.msra.mxu0 %v1162
    %1658 = vmatprep.subr.bf16.mxu0 0
    %1659 = vmatpush2.bf16.msra.mxu0 %v1161
    %1660 = vmatprep.subr.bf16.mxu0 0
    %1661 = vmatpush2.bf16.msra.mxu0 %v1160
    %1662 = vmatprep.subr.bf16.mxu0 0
    %1663 = vmatpush2.bf16.msra.mxu0 %v1159
    %1664 = vmatprep.subr.bf16.mxu0 0
    %1665 = vmatpush2.bf16.msra.mxu0 %v1158
    %1666 = vmatprep.subr.bf16.mxu0 0
    %1667 = vmatpush2.bf16.msra.mxu0 %v1157
    %1668 = vmatprep.mubr.bf16.mxu0 %v476
    %1669 = vmatmul.mubr.bf16.gmra.mxu0 %v475
    %v1670 = vpop.f32.mrf.mxu0
    %v1671 = vadd.f32 %v1622, %v1670
    %v1672 = vpop.f32.mrf.mxu0
    %v1673 = vpop.f32.mrf.mxu0
    %v1674 = vadd.f32 %v1625, %v1673
    %v1675 = vpop.f32.mrf.mxu0
    %1676 = vmatprep.mubr.bf16.mxu0 %v492
    %1677 = vmatmul.mubr.bf16.gmra.mxu0 %v491
    %v1678 = vpop.f32.mrf.mxu0
    %v1679 = vadd.f32 %v1630, %v1678
    %v1680 = vpop.f32.mrf.mxu0
    %v1681 = vpop.f32.mrf.mxu0
    %v1682 = vadd.f32 %v1633, %v1681
    %v1683 = vpop.f32.mrf.mxu0
    %1684 = vdwg.mxu0
    %v1685 = vadd.f32 %v1671, %v1674
    %v1686 = vadd.f32 %v1685, %v1679
    %v1687 = vadd.f32 %v1686, %v1682
    %v1688 = vrot.slane %v1687, 4
    %v1689 = vadd.f32 %v1687, %v1688
    %v1690 = vrot.slane %v1689, 2
    %v1691 = vadd.f32 %v1689, %v1690
    %v1692 = vrot.slane %v1691, 1
    %v1693 = vadd.f32 %v1691, %v1692
    %v1694 = vrcp.pop 32.0
    %v1695 = vmul.f32 %v1693, %v1694
    %v1696 = vsub.f32 %v1671, %v1695
    %v1697 = vsub.f32 %v1674, %v1695
    %v1698 = vsub.f32 %v1679, %v1695
    %v1699 = vsub.f32 %v1682, %v1695
    %v1700 = vmul.f32 %v1696, %v1696
    %v1701 = vmul.f32 %v1697, %v1697
    %v1702 = vmul.f32 %v1698, %v1698
    %v1703 = vmul.f32 %v1699, %v1699
    %v1704 = vadd.f32 %v1700, %v1701
    %v1705 = vadd.f32 %v1704, %v1702
    %v1706 = vadd.f32 %v1705, %v1703
    %v1707 = vrot.slane %v1706, 4
    %v1708 = vadd.f32 %v1706, %v1707
    %v1709 = vrot.slane %v1708, 2
    %v1710 = vadd.f32 %v1708, %v1709
    %v1711 = vrot.slane %v1710, 1
    %v1712 = vadd.f32 %v1710, %v1711
    %v1713 = vmul.f32 %v1712, %v1694
    %v1714 = vld [vmem:[#allocation6] sm:$0x1]
    %v1716 = vlaneseq
    %v1717 = vshrl.u32 %v1716, 7
    %v1718 = vsub.s32 0, %v1717
    %v1719 = vrot.slane %v1714, %v1718
    %v1721 = vmul.f32 %v1719, %v1696
    %v1722 = vmul.f32 %v1719, %v1697
    %v1723 = vmul.f32 %v1719, %v1698
    %v1724 = vmul.f32 %v1719, %v1699
    %v1725 = vadd.f32 %v1713, 1e-05
    %v1726 = vrsqrt.pop %v1725
    %v1727 = vmul.f32 %v1721, %v1726
    %v1728 = vmul.f32 %v1722, %v1726
    %v1729 = vmul.f32 %v1723, %v1726
    %v1730 = vmul.f32 %v1724, %v1726
    %v1731 = vld [vmem:[#allocation7] sm:$0x1]
    %v1733 = vlaneseq
    %v1734 = vshrl.u32 %v1733, 7
    %v1735 = vsub.s32 0, %v1734
    %v1736 = vrot.slane %v1731, %v1735
    %v1738 = vadd.f32 %v1727, %v1736
    %v1739 = vadd.f32 %v1728, %v1736
    %v1740 = vadd.f32 %v1729, %v1736
    %v1741 = vadd.f32 %v1730, %v1736
    %v1742 = vmul.f32 %v1738, 0.2
    %v1743 = vmul.f32 %v1739, 0.2
    %v1744 = vmul.f32 %v1740, 0.2
    %v1745 = vmul.f32 %v1741, 0.2
    %v1746 = vmax.f32 %v1738, %v1742
    %v1747 = vmax.f32 %v1739, %v1743
    %v1748 = vmax.f32 %v1740, %v1744
    %v1749 = vmax.f32 %v1741, %v1745
    %v1750 = vpack.c.bf16 %v1747, %v1746
    %v1751 = vpack.c.bf16 %v1749, %v1748
    %v1754 = vunpack.c.l.b16 %v1750
    %v1755 = vunpack.c.h.b16 %v1750
    %v1756 = vunpack.c.l.b16 %v1751
    %v1757 = vunpack.c.h.b16 %v1751
    %v1758 = vpack.c.b16 %v1754, %v1754
    %v1759 = vpack.c.b16 %v1755, %v1755
    %v1760 = vpack.c.b16 %v1756, %v1756
    %v1761 = vpack.c.b16 %v1757, %v1757
    %1766 = vst [vmem:[%s5] sm:$0xf] %v1758
    %1767 = vst [vmem:[%s5 + $0x4] sm:$0xf] %v1759
    %1768 = vst [vmem:[%s5 + $0x8] sm:$0xf] %v1760
    %1769 = vst [vmem:[%s5 + $0xc] sm:$0xf] %v1761
    // Predicated region
    $region38: #{discriminator_forward.4} parent=1 // pred_check
      _
    $region39: #{discriminator_forward.4} parent=1 // pred_check_branch
      %1771 = sbr.rel (0) target = $region41
    $region40: #{discriminator_forward.4} parent=1 // pred_region
      _
    $region41: #{discriminator_forward.4} parent=1 // pred_fallthru
      _
    // Predicated region
    $region42: #{discriminator_forward.4} parent=1 // pred_check
      _
    $region43: #{discriminator_forward.4} parent=1 // pred_check_branch
      %1773 = sbr.rel (0) target = $region45
    $region44: #{discriminator_forward.4} parent=1 // pred_region
      _
    $region45: #{discriminator_forward.4} parent=1 // pred_fallthru
      _
    %1774 = vsyncpa [#allocation3], 1
    %1775 = vsyncpa [#allocation5], 1
    %1776 = vsyncpa [#allocation8], 1

// kernel: discriminator_forward.5
$region0: #{discriminator_forward.5}
  #allocation0 [shape = 'u32[]', space=smem, size = 0x4, offset = 0x4, fixed_abs, tag = 'smem constant byte address 0x4 - core index']
  #allocation1 [shape = 'u32[144,128]{1,0:T(1,128)}', space=vmem, size = 0x12000, scoped, tag = 'internal scratch']
  #allocation2 [shape = 'f32[2,128]{1,0:T(2,128)}', space=vmem, size = 0x400, scoped, tag = 'scratch operand']
  %s0 = inlined_call_operand.vmem [shape: bf16[2,2048], index: 0, kind: input, shape index: {}]
  %s1 = inlined_call_operand.hbm [shape: bf16[2048,1024], index: 1, kind: input, shape index: {}]
  %s2 = inlined_call_operand.hbm [shape: f32[1,1024], index: 2, kind: input, shape index: {}]
  %s3 = inlined_call_operand.hbm [shape: f32[1,1024], index: 3, kind: input, shape index: {}]
  %s4 = inlined_call_operand.hbm [shape: f32[1,1024], index: 4, kind: input, shape index: {}]
  %s5 = inlined_call_operand.hbm [shape: bf16[1024,128], index: 5, kind: input, shape index: {}]
  %s6 = inlined_call_operand.hbm [shape: f32[1,128], index: 6, kind: input, shape index: {}]
  %s7 = inlined_call_operand.vmem [shape: f32[2,128], index: 7, kind: output, shape index: {}]
  %s8 = sld [smem:[#allocation0]]
  $region93: #{discriminator_forward.5} parent=0
    _
  %s10 = ssub.s32 1, %s8
  %s11 = scalar_select 0, %s10, %s8
  $region1: #{discriminator_forward.5} parent=0
    #allocation3 [shape = 'u8[4194304]{0}', space=vmem, size = 0x400000, scoped, tag = 'input window, operand 1']
    #allocation4 [shape = 's32[2]{0}', space=sflag, size = 0x8, scoped, tag = 'scoped memory for discriminator_forward.5']
    #allocation5 [shape = 'u8[4096]{0}', space=vmem, size = 0x1000, scoped, tag = 'input window, operand 2']
    #allocation6 [shape = 's32[2]{0}', space=sflag, size = 0x8, scoped, tag = 'scoped memory for discriminator_forward.5']
    #allocation7 [shape = 'u8[4096]{0}', space=vmem, size = 0x1000, scoped, tag = 'input window, operand 3']
    #allocation8 [shape = 'u8[4096]{0}', space=vmem, size = 0x1000, scoped, tag = 'input window, operand 4']
    #allocation9 [shape = 's32[2]{0}', space=sflag, size = 0x8, scoped, tag = 'scoped memory for discriminator_forward.5']
    #allocation10 [shape = 'u8[262144]{0}', space=vmem, size = 0x40000, scoped, tag = 'input window, operand 5']
    #allocation11 [shape = 'u8[512]{0}', space=vmem, size = 0x400, scoped, tag = 'input window, operand 6, single buffered']
    #allocation12 [shape = 's32[1]{0}', space=sflag, size = 0x4, scoped, tag = 'scoped memory for discriminator_forward.5']
    %12 = vsyncpa [#allocation4], 0
    %s13 = scalar_lea.sflag [#allocation4], 1
    %14 = vsyncpa %s13, 0
    %15 = vsyncpa [#allocation6], 0
    %s16 = scalar_lea.sflag [#allocation6], 1
    %17 = vsyncpa %s16, 0
    %18 = vsyncpa [#allocation9], 0
    %s19 = scalar_lea.sflag [#allocation9], 1
    %20 = vsyncpa %s19, 0
    %21 = vsyncpa [#allocation12], 0
    loop: start=0, step=1, limit=4
    $region2: #{discriminator_forward.5} parent=1 // loop_pre_header
      _
    $region3: #{discriminator_forward.5} parent=1 // loop_header
      %s23 = sphi 0, %s27
      %p24 = scmp.ge.s32.totalorder %s23, 4
      %s31 = sphi 0, %s31
      %s33 = sphi 0, %s31
      %s34 = sphi 0, %s33
      %s48 = sphi 0, %s34
      %s54 = sphi 0, %s56
      %s57 = sphi 0, %s54
      %s58 = sphi 0, %s57
      %s74 = sphi 0, %s58
      %s80 = sphi 0, %s82
      %s83 = sphi 0, %s80
      %s84 = sphi 0, %s83
      %s100 = sphi 0, %s84
      %s106 = sphi 0, %s108
      %s109 = sphi 0, %s106
      %s110 = sphi 0, %s109
      %s126 = sphi 0, %s110
      %s132 = sphi 0, %s134
      %s135 = sphi 0, %s132
      %s136 = sphi 0, %s135
      %s152 = sphi 0, %s136
      %s158 = sphi 0, %s160
      %s161 = sphi 0, %s158
      %s162 = sphi 0, %s161
      %s178 = sphi 0, %s162
      %s182 = sphi 0, %s182
      %s184 = sphi 0, %s182
      %s185 = sphi 0, %s184
      %s199 = sphi 0, %s185
      %s203 = sphi 0, %s203
      %s205 = sphi 0, %s203
      %s206 = sphi 0, %s205
      %s220 = sphi 0, %s206
    $region4: #{discriminator_forward.5} parent=1 // loop_header_branch
      %26 = sbr.rel (%p24) target = $region8
    $region5: #{discriminator_forward.5} parent=1 // loop_body
      %s28 = ssub.s32 %s23, 1
      %s29 = ssub.s32 %s23, 2
      %s30 = sadd.s32 %s23, 1
      %s32 = sadd.s32 %s31, 1
      %p35 = scmp.eq.s32.totalorder %s23, 1
      %p36 = scmp.ne.s32.totalorder %s31, %s33
      %p37 = scmp.eq.s32.totalorder %s23, 0
      %p38 = por %p36, %p37
      %p39 = scmp.ne.s32.totalorder %s31, %s33
      %p40 = scmp.eq.s32.totalorder %s28, 1
      %p41 = por %p39, %p40
      %p42 = scmp.ne.s32.totalorder %s33, %s34
      %p43 = scmp.eq.s32.totalorder %s28, 0
      %p44 = por %p42, %p43
      %p45 = scmp.ne.s32.totalorder %s33, %s34
      %p46 = scmp.eq.s32.totalorder %s29, 1
      %p47 = por %p45, %p46
      %p49 = scmp.ne.s32.totalorder %s34, %s48
      %p50 = scmp.eq.s32.totalorder %s29, 0
      %p51 = por %p49, %p50
      %s52 = ssub.s32 %s23, %s30
      %p53 = scmp.eq.s32.totalorder %s52, 0
      %s55 = sadd.s32 %s54, 1
      %s56 = scalar_select %p53, %s54, %s55
      %p59 = pneg %p53
      %p60 = scmp.eq.s32.totalorder %s23, 1
      %p61 = por %p59, %p60
      %p62 = scmp.ne.s32.totalorder %s54, %s57
      %p63 = scmp.eq.s32.totalorder %s23, 0
      %p64 = por %p62, %p63
      %p65 = scmp.ne.s32.totalorder %s54, %s57
      %p66 = scmp.eq.s32.totalorder %s28, 1
      %p67 = por %p65, %p66
      %p68 = scmp.ne.s32.totalorder %s57, %s58
      %p69 = scmp.eq.s32.totalorder %s28, 0
      %p70 = por %p68, %p69
      %p71 = scmp.ne.s32.totalorder %s57, %s58
      %p72 = scmp.eq.s32.totalorder %s29, 1
      %p73 = por %p71, %p72
      %p75 = scmp.ne.s32.totalorder %s58, %s74
      %p76 = scmp.eq.s32.totalorder %s29, 0
      %p77 = por %p75, %p76
      %s78 = ssub.s32 %s23, %s30
      %p79 = scmp.eq.s32.totalorder %s78, 0
      %s81 = sadd.s32 %s80, 1
      %s82 = scalar_select %p79, %s80, %s81
      %p85 = pneg %p79
      %p86 = scmp.eq.s32.totalorder %s23, 1
      %p87 = por %p85, %p86
      %p88 = scmp.ne.s32.totalorder %s80, %s83
      %p89 = scmp.eq.s32.totalorder %s23, 0
      %p90 = por %p88, %p89
      %p91 = scmp.ne.s32.totalorder %s80, %s83
      %p92 = scmp.eq.s32.totalorder %s28, 1
      %p93 = por %p91, %p92
      %p94 = scmp.ne.s32.totalorder %s83, %s84
      %p95 = scmp.eq.s32.totalorder %s28, 0
      %p96 = por %p94, %p95
      %p97 = scmp.ne.s32.totalorder %s83, %s84
      %p98 = scmp.eq.s32.totalorder %s29, 1
      %p99 = por %p97, %p98
      %p101 = scmp.ne.s32.totalorder %s84, %s100
      %p102 = scmp.eq.s32.totalorder %s29, 0
      %p103 = por %p101, %p102
      %s104 = ssub.s32 %s23, %s30
      %p105 = scmp.eq.s32.totalorder %s104, 0
      %s107 = sadd.s32 %s106, 1
      %s108 = scalar_select %p105, %s106, %s107
      %p111 = pneg %p105
      %p112 = scmp.eq.s32.totalorder %s23, 1
      %p113 = por %p111, %p112
      %p114 = scmp.ne.s32.totalorder %s106, %s109
      %p115 = scmp.eq.s32.totalorder %s23, 0
      %p116 = por %p114, %p115
      %p117 = scmp.ne.s32.totalorder %s106, %s109
      %p118 = scmp.eq.s32.totalorder %s28, 1
      %p119 = por %p117, %p118
      %p120 = scmp.ne.s32.totalorder %s109, %s110
      %p121 = scmp.eq.s32.totalorder %s28, 0
      %p122 = por %p120, %p121
      %p123 = scmp.ne.s32.totalorder %s109, %s110
      %p124 = scmp.eq.s32.totalorder %s29, 1
      %p125 = por %p123, %p124
      %p127 = scmp.ne.s32.totalorder %s110, %s126
      %p128 = scmp.eq.s32.totalorder %s29, 0
      %p129 = por %p127, %p128
      %s130 = ssub.s32 %s23, %s30
      %p131 = scmp.eq.s32.totalorder %s130, 0
      %s133 = sadd.s32 %s132, 1
      %s134 = scalar_select %p131, %s132, %s133
      %p137 = pneg %p131
      %p138 = scmp.eq.s32.totalorder %s23, 1
      %p139 = por %p137, %p138
      %p140 = scmp.ne.s32.totalorder %s132, %s135
      %p141 = scmp.eq.s32.totalorder %s23, 0
      %p142 = por %p140, %p141
      %p143 = scmp.ne.s32.totalorder %s132, %s135
      %p144 = scmp.eq.s32.totalorder %s28, 1
      %p145 = por %p143, %p144
      %p146 = scmp.ne.s32.totalorder %s135, %s136
      %p147 = scmp.eq.s32.totalorder %s28, 0
      %p148 = por %p146, %p147
      %p149 = scmp.ne.s32.totalorder %s135, %s136
      %p150 = scmp.eq.s32.totalorder %s29, 1
      %p151 = por %p149, %p150
      %p153 = scmp.ne.s32.totalorder %s136, %s152
      %p154 = scmp.eq.s32.totalorder %s29, 0
      %p155 = por %p153, %p154
      %s156 = ssub.s32 %s23, %s30
      %p157 = scmp.eq.s32.totalorder %s156, 0
      %s159 = sadd.s32 %s158, 1
      %s160 = scalar_select %p157, %s158, %s159
      %p163 = pneg %p157
      %p164 = scmp.eq.s32.totalorder %s23, 1
      %p165 = por %p163, %p164
      %p166 = scmp.ne.s32.totalorder %s158, %s161
      %p167 = scmp.eq.s32.totalorder %s23, 0
      %p168 = por %p166, %p167
      %p169 = scmp.ne.s32.totalorder %s158, %s161
      %p170 = scmp.eq.s32.totalorder %s28, 1
      %p171 = por %p169, %p170
      %p172 = scmp.ne.s32.totalorder %s161, %s162
      %p173 = scmp.eq.s32.totalorder %s28, 0
      %p174 = por %p172, %p173
      %p175 = scmp.ne.s32.totalorder %s161, %s162
      %p176 = scmp.eq.s32.totalorder %s29, 1
      %p177 = por %p175, %p176
      %p179 = scmp.ne.s32.totalorder %s162, %s178
      %p180 = scmp.eq.s32.totalorder %s29, 0
      %p181 = por %p179, %p180
      %s183 = sadd.s32 %s182, 1
      %p186 = scmp.eq.s32.totalorder %s23, 1
      %p187 = scmp.ne.s32.totalorder %s182, %s184
      %p188 = scmp.eq.s32.totalorder %s23, 0
      %p189 = por %p187, %p188
      %p190 = scmp.ne.s32.totalorder %s182, %s184
      %p191 = scmp.eq.s32.totalorder %s28, 1
      %p192 = por %p190, %p191
      %p193 = scmp.ne.s32.totalorder %s184, %s185
      %p194 = scmp.eq.s32.totalorder %s28, 0
      %p195 = por %p193, %p194
      %p196 = scmp.ne.s32.totalorder %s184, %s185
      %p197 = scmp.eq.s32.totalorder %s29, 1
      %p198 = por %p196, %p197
      %p200 = scmp.ne.s32.totalorder %s185, %s199
      %p201 = scmp.eq.s32.totalorder %s29, 0
      %p202 = por %p200, %p201
      %s204 = sadd.s32 %s203, 1
      %p207 = scmp.eq.s32.totalorder %s23, 1
      %p208 = scmp.ne.s32.totalorder %s203, %s205
      %p209 = scmp.eq.s32.totalorder %s23, 0
      %p210 = por %p208, %p209
      %p211 = scmp.ne.s32.totalorder %s203, %s205
      %p212 = scmp.eq.s32.totalorder %s28, 1
      %p213 = por %p211, %p212
      %p214 = scmp.ne.s32.totalorder %s205, %s206
      %p215 = scmp.eq.s32.totalorder %s28, 0
      %p216 = por %p214, %p215
      %p217 = scmp.ne.s32.totalorder %s205, %s206
      %p218 = scmp.eq.s32.totalorder %s29, 1
      %p219 = por %p217, %p218
      %p221 = scmp.ne.s32.totalorder %s206, %s220
      %p222 = scmp.eq.s32.totalorder %s29, 0
      %p223 = por %p221, %p222
      %p224 = scmp.le.s32.totalorder 1, %s23
      %p225 = scmp.lt.s32.totalorder %s23, 3
      %p226 = pnand %p224, %p225
      %p227 = pneg %p226
      // Predicated region
      $region9: #{discriminator_forward.5} parent=5 // pred_check
        _
      $region10: #{discriminator_forward.5} parent=5 // pred_check_branch
        %229 = sbr.rel (%p226) target = $region12
      $region11: #{discriminator_forward.5} parent=5 // pred_region
        %s230 = ssub.s32 %s23, 1
        // Predicated region
        $region13: #{discriminator_forward.5} parent=11 // pred_check
          %p231 = pneg %p44
        $region14: #{discriminator_forward.5} parent=11 // pred_check_branch
          %233 = sbr.rel (%p231) target = $region16
        $region15: #{discriminator_forward.5} parent=11 // pred_region
          _
        $region16: #{discriminator_forward.5} parent=11 // pred_fallthru
          _
        // Predicated region
        $region17: #{discriminator_forward.5} parent=11 // pred_check
          %p234 = pneg %p195
        $region18: #{discriminator_forward.5} parent=11 // pred_check_branch
          %236 = sbr.rel (%p234) target = $region20
        $region19: #{discriminator_forward.5} parent=11 // pred_region
          %s238 = ssub.s32 16, 16
          %239 = vsyncadd [#allocation12], %s238
          %s241 = sshll.u32 [#allocation11], 4
          %s242 = int_to_ptr.vmem [resolvable:$true] %s241
          %244 = dma.hbm_to_vmem [thread:$0]  %s6, 16, %s242, [#allocation12]
        $region20: #{discriminator_forward.5} parent=11 // pred_fallthru
          _
      $region12: #{discriminator_forward.5} parent=5 // pred_fallthru
        _
      %p245 = scmp.lt.s32.totalorder %s23, 2
      // Predicated region
      $region21: #{discriminator_forward.5} parent=5 // pred_check
        %p246 = pneg %p245
      $region22: #{discriminator_forward.5} parent=5 // pred_check_branch
        %248 = sbr.rel (%p246) target = $region24
      $region23: #{discriminator_forward.5} parent=5 // pred_region
        // Predicated region
        $region25: #{discriminator_forward.5} parent=23 // pred_check
          %p249 = pneg %p64
        $region26: #{discriminator_forward.5} parent=23 // pred_check_branch
          %251 = sbr.rel (%p249) target = $region28
        $region27: #{discriminator_forward.5} parent=23 // pred_region
          %s252 = sand.u32 %s54, 1
          %s253 = scalar_lea.sflag [#allocation4], %s252
          %s254 = sand.u32 %s54, 1
          %s255 = smul.addr %s254, 4096
          %s256 = scalar_lea.vmem [#allocation3], %s255
          %s257 = smul.u32 4, %s23
          %s259 = ssub.s32 65536, 65536
          %260 = vsyncadd %s253, %s259
          %s261 = smul.addr %s257, 64
          %s262 = scalar_lea.hbm %s1, %s261
          %s263 = sshll.u32 %s256, 4
          %s264 = int_to_ptr.vmem [resolvable:$true] %s263
          %269 = dma.hbm_to_vmem [thread:$0]  %s262, 65536, %s264, %s253, 512, 256, 16
        $region28: #{discriminator_forward.5} parent=23 // pred_fallthru
          _
        // Predicated region
        $region29: #{discriminator_forward.5} parent=23 // pred_check
          %p270 = pneg %p90
        $region30: #{discriminator_forward.5} parent=23 // pred_check_branch
          %272 = sbr.rel (%p270) target = $region32
        $region31: #{discriminator_forward.5} parent=23 // pred_region
          %s273 = sand.u32 %s23, 1
          %s274 = scalar_lea.sflag [#allocation6], %s273
          %s275 = sand.u32 %s80, 1
          %s276 = smul.addr %s275, 4
          %s277 = scalar_lea.vmem [#allocation5], %s276
          %s278 = smul.u32 4, %s23
          %s280 = ssub.s32 64, 64
          %281 = vsyncadd %s274, %s280
          %s282 = smul.addr %s278, 16
          %s283 = scalar_lea.hbm %s2, %s282
          %s285 = sshll.u32 %s277, 4
          %s286 = int_to_ptr.vmem [resolvable:$true] %s285
          %288 = dma.hbm_to_vmem [thread:$0]  %s283, 64, %s286, %s274
        $region32: #{discriminator_forward.5} parent=23 // pred_fallthru
          _
        // Predicated region
        $region33: #{discriminator_forward.5} parent=23 // pred_check
          %p289 = pneg %p116
        $region34: #{discriminator_forward.5} parent=23 // pred_check_branch
          %291 = sbr.rel (%p289) target = $region36
        $region35: #{discriminator_forward.5} parent=23 // pred_region
          %s292 = sand.u32 %s23, 1
          %s293 = scalar_lea.sflag [#allocation6], %s292
          %s294 = sand.u32 %s106, 1
          %s295 = smul.addr %s294, 4
          %s296 = scalar_lea.vmem [#allocation7], %s295
          %s297 = smul.u32 4, %s23
          %s299 = ssub.s32 64, 64
          %300 = vsyncadd %s293, %s299
          %s301 = smul.addr %s297, 16
          %s302 = scalar_lea.hbm %s3, %s301
          %s304 = sshll.u32 %s296, 4
          %s305 = int_to_ptr.vmem [resolvable:$true] %s304
          %307 = dma.hbm_to_vmem [thread:$0]  %s302, 64, %s305, %s293
        $region36: #{discriminator_forward.5} parent=23 // pred_fallthru
          _
        // Predicated region
        $region37: #{discriminator_forward.5} parent=23 // pred_check
          %p308 = pneg %p142
        $region38: #{discriminator_forward.5} parent=23 // pred_check_branch
          %310 = sbr.rel (%p308) target = $region40
        $region39: #{discriminator_forward.5} parent=23 // pred_region
          %s311 = sand.u32 %s23, 1
          %s312 = scalar_lea.sflag [#allocation9], %s311
          %s313 = sand.u32 %s132, 1
          %s314 = smul.addr %s313, 4
          %s315 = scalar_lea.vmem [#allocation8], %s314
          %s316 = smul.u32 4, %s23
          %s318 = ssub.s32 64, 64
          %319 = vsyncadd %s312, %s318
          %s320 = smul.addr %s316, 16
          %s321 = scalar_lea.hbm %s4, %s320
          %s323 = sshll.u32 %s315, 4
          %s324 = int_to_ptr.vmem [resolvable:$true] %s323
          %326 = dma.hbm_to_vmem [thread:$0]  %s321, 64, %s324, %s312
        $region40: #{discriminator_forward.5} parent=23 // pred_fallthru
          _
        // Predicated region
        $region41: #{discriminator_forward.5} parent=23 // pred_check
          %p327 = pneg %p168
        $region42: #{discriminator_forward.5} parent=23 // pred_check_branch
          %329 = sbr.rel (%p327) target = $region44
        $region43: #{discriminator_forward.5} parent=23 // pred_region
          %s330 = sand.u32 %s23, 1
          %s331 = scalar_lea.sflag [#allocation9], %s330
          %s332 = sand.u32 %s158, 1
          %s333 = smul.addr %s332, 256
          %s334 = scalar_lea.vmem [#allocation10], %s333
          %s335 = smul.u32 64, %s23
          %s337 = ssub.s32 4096, 4096
          %338 = vsyncadd %s331, %s337
          %s339 = smul.addr %s335, 64
          %s340 = scalar_lea.hbm %s5, %s339
          %s341 = sshll.u32 %s334, 4
          %s342 = int_to_ptr.vmem [resolvable:$true] %s341
          %347 = dma.hbm_to_vmem [thread:$0]  %s340, 4096, %s342, %s331, 64, 64, 4
        $region44: #{discriminator_forward.5} parent=23 // pred_fallthru
          _
      $region24: #{discriminator_forward.5} parent=5 // pred_fallthru
        _
      %p348 = scmp.le.s32.totalorder 1, %s23
      %p349 = scmp.lt.s32.totalorder %s23, 3
      %p350 = pnand %p348, %p349
      %p351 = pneg %p350
      // Predicated region
      $region45: #{discriminator_forward.5} parent=5 // pred_check
        _
      $region46: #{discriminator_forward.5} parent=5 // pred_check_branch
        %353 = sbr.rel (%p350) target = $region48
      $region47: #{discriminator_forward.5} parent=5 // pred_region
        %s354 = ssub.s32 %s23, 1
        %s355 = sand.u32 %s57, 1
        %s356 = scalar_lea.sflag [#allocation4], %s355
        %s357 = sand.u32 %s57, 1
        %s358 = smul.addr %s357, 4096
        %s359 = scalar_lea.vmem [#allocation3], %s358
        // Predicated region
        $region49: #{discriminator_forward.5} parent=47 // pred_check
          %p360 = pneg %p70
        $region50: #{discriminator_forward.5} parent=47 // pred_check_branch
          %362 = sbr.rel (%p360) target = $region52
        $region51: #{discriminator_forward.5} parent=47 // pred_region
          %363 = dma.done %s356, 65536
        $region52: #{discriminator_forward.5} parent=47 // pred_fallthru
          _
        %s364 = sand.u32 %s28, 1
        %s365 = scalar_lea.sflag [#allocation6], %s364
        %s366 = sand.u32 %s83, 1
        %s367 = smul.addr %s366, 4
        %s368 = scalar_lea.vmem [#allocation5], %s367
        // Predicated region
        $region53: #{discriminator_forward.5} parent=47 // pred_check
          %p369 = pneg %p96
        $region54: #{discriminator_forward.5} parent=47 // pred_check_branch
          %371 = sbr.rel (%p369) target = $region56
        $region55: #{discriminator_forward.5} parent=47 // pred_region
          %372 = dma.done %s365, 64
        $region56: #{discriminator_forward.5} parent=47 // pred_fallthru
          _
        %s373 = sand.u32 %s28, 1
        %s374 = scalar_lea.sflag [#allocation6], %s373
        %s375 = sand.u32 %s109, 1
        %s376 = smul.addr %s375, 4
        %s377 = scalar_lea.vmem [#allocation7], %s376
        // Predicated region
        $region57: #{discriminator_forward.5} parent=47 // pred_check
          %p378 = pneg %p122
        $region58: #{discriminator_forward.5} parent=47 // pred_check_branch
          %380 = sbr.rel (%p378) target = $region60
        $region59: #{discriminator_forward.5} parent=47 // pred_region
          %381 = dma.done %s374, 64
        $region60: #{discriminator_forward.5} parent=47 // pred_fallthru
          _
        %s382 = sand.u32 %s28, 1
        %s383 = scalar_lea.sflag [#allocation9], %s382
        %s384 = sand.u32 %s135, 1
        %s385 = smul.addr %s384, 4
        %s386 = scalar_lea.vmem [#allocation8], %s385
        // Predicated region
        $region61: #{discriminator_forward.5} parent=47 // pred_check
          %p387 = pneg %p148
        $region62: #{discriminator_forward.5} parent=47 // pred_check_branch
          %389 = sbr.rel (%p387) target = $region64
        $region63: #{discriminator_forward.5} parent=47 // pred_region
          %390 = dma.done %s383, 64
        $region64: #{discriminator_forward.5} parent=47 // pred_fallthru
          _
        %s391 = sand.u32 %s28, 1
        %s392 = scalar_lea.sflag [#allocation9], %s391
        %s393 = sand.u32 %s161, 1
        %s394 = smul.addr %s393, 256
        %s395 = scalar_lea.vmem [#allocation10], %s394
        // Predicated region
        $region65: #{discriminator_forward.5} parent=47 // pred_check
          %p396 = pneg %p174
        $region66: #{discriminator_forward.5} parent=47 // pred_check_branch
          %398 = sbr.rel (%p396) target = $region68
        $region67: #{discriminator_forward.5} parent=47 // pred_region
          %399 = dma.done %s392, 4096
        $region68: #{discriminator_forward.5} parent=47 // pred_fallthru
          _
        // Predicated region
        $region69: #{discriminator_forward.5} parent=47 // pred_check
          %p400 = pneg %p195
        $region70: #{discriminator_forward.5} parent=47 // pred_check_branch
          %402 = sbr.rel (%p400) target = $region72
        $region71: #{discriminator_forward.5} parent=47 // pred_region
          %403 = dma.done [#allocation12], 16
        $region72: #{discriminator_forward.5} parent=47 // pred_fallthru
          _
        %p404 = pneg %p44
        %p405 = pneg %p41
        %s406 = sand.u32 %s57, 1
        %s407 = scalar_lea.sflag [#allocation4], %s406
        %s408 = sand.u32 %s57, 1
        %s409 = smul.addr %s408, 4096
        %s410 = scalar_lea.vmem [#allocation3], %s409
        %p411 = pneg %p70
        %p412 = pneg %p67
        %s413 = sand.u32 %s28, 1
        %s414 = scalar_lea.sflag [#allocation6], %s413
        %s415 = sand.u32 %s83, 1
        %s416 = smul.addr %s415, 4
        %s417 = scalar_lea.vmem [#allocation5], %s416
        %p418 = pneg %p96
        %p419 = pneg %p93
        %s420 = sand.u32 %s28, 1
        %s421 = scalar_lea.sflag [#allocation6], %s420
        %s422 = sand.u32 %s109, 1
        %s423 = smul.addr %s422, 4
        %s424 = scalar_lea.vmem [#allocation7], %s423
        %p425 = pneg %p122
        %p426 = pneg %p119
        %s427 = sand.u32 %s28, 1
        %s428 = scalar_lea.sflag [#allocation9], %s427
        %s429 = sand.u32 %s135, 1
        %s430 = smul.addr %s429, 4
        %s431 = scalar_lea.vmem [#allocation8], %s430
        %p432 = pneg %p148
        %p433 = pneg %p145
        %s434 = sand.u32 %s28, 1
        %s435 = scalar_lea.sflag [#allocation9], %s434
        %s436 = sand.u32 %s161, 1
        %s437 = smul.addr %s436, 256
        %s438 = scalar_lea.vmem [#allocation10], %s437
        %p439 = pneg %p174
        %p440 = pneg %p171
        %p441 = pneg %p195
        %p442 = pneg %p192
        %p443 = pneg %p216
        %p444 = pneg %p213
        %s445 = smul.u32 4, %s28
        %s446 = smul.u32 4, %s28
        %s447 = smul.u32 4, %s28
        %s448 = smul.u32 4, %s28
        %s449 = smul.u32 64, %s28
        %p451 = scmp.eq.s32.totalorder %s28, 0
        // Predicated region
        $region73: #{discriminator_forward.5} parent=47 // pred_check
          %p452 = pneg %p451
        $region74: #{discriminator_forward.5} parent=47 // pred_check_branch
          %454 = sbr.rel (%p452) target = $region76
        $region75: #{discriminator_forward.5} parent=47 // pred_region
          %455 = vst [vmem:[#allocation2] sm:$0x3] 0.0
        $region76: #{discriminator_forward.5} parent=47 // pred_fallthru
          _
        %v456 = vld [vmem:[%s0] sm:$0xff]
        %v457 = vld [vmem:[%s0 + $0x8] sm:$0xff]
        %v458 = vld [vmem:[%s359] sm:$0xff]
        %v459 = vld [vmem:[%s359 + $0x8] sm:$0xff]
        %v460 = vld [vmem:[%s359 + $0x10] sm:$0xff]
        %v461 = vld [vmem:[%s359 + $0x18] sm:$0xff]
        %v462 = vld [vmem:[%s359 + $0x20] sm:$0xff]
        %v463 = vld [vmem:[%s359 + $0x28] sm:$0xff]
        %v464 = vld [vmem:[%s359 + $0x30] sm:$0xff]
        %v465 = vld [vmem:[%s359 + $0x38] sm:$0xff]
        %v466 = vld [vmem:[%s359 + $0x40] sm:$0xff]
        %v467 = vld [vmem:[%s359 + $0x48] sm:$0xff]
        %v468 = vld [vmem:[%s359 + $0x50] sm:$0xff]
        %v469 = vld [vmem:[%s359 + $0x58] sm:$0xff]
        %v470 = vld [vmem:[%s359 + $0x60] sm:$0xff]
        %v471 = vld [vmem:[%s359 + $0x68] sm:$0xff]
        %v472 = vld [vmem:[%s359 + $0x70] sm:$0xff]
        %v473 = vld [vmem:[%s359 + $0x78] sm:$0xff]
        %v474 = vld [vmem:[%s359 + $0x80] sm:$0xff]
        %v475 = vld [vmem:[%s359 + $0x88] sm:$0xff]
        %v476 = vld [vmem:[%s359 + $0x90] sm:$0xff]
        %v477 = vld [vmem:[%s359 + $0x98] sm:$0xff]
        %v478 = vld [vmem:[%s359 + $0xa0] sm:$0xff]
        %v479 = vld [vmem:[%s359 + $0xa8] sm:$0xff]
        %v480 = vld [vmem:[%s359 + $0xb0] sm:$0xff]
        %v481 = vld [vmem:[%s359 + $0xb8] sm:$0xff]
        %v482 = vld [vmem:[%s359 + $0xc0] sm:$0xff]
        %v483 = vld [vmem:[%s359 + $0xc8] sm:$0xff]
        %v484 = vld [vmem:[%s359 + $0xd0] sm:$0xff]
        %v485 = vld [vmem:[%s359 + $0xd8] sm:$0xff]
        %v486 = vld [vmem:[%s359 + $0xe0] sm:$0xff]
        %v487 = vld [vmem:[%s359 + $0xe8] sm:$0xff]
        %v488 = vld [vmem:[%s359 + $0xf0] sm:$0xff]
        %v489 = vld [vmem:[%s359 + $0xf8] sm:$0xff]
        %v490 = vld [vmem:[%s359 + $0x100] sm:$0xff]
        %v491 = vld [vmem:[%s359 + $0x108] sm:$0xff]
        %v492 = vld [vmem:[%s359 + $0x110] sm:$0xff]
        %v493 = vld [vmem:[%s359 + $0x118] sm:$0xff]
        %v494 = vld [vmem:[%s359 + $0x120] sm:$0xff]
        %v495 = vld [vmem:[%s359 + $0x128] sm:$0xff]
        %v496 = vld [vmem:[%s359 + $0x130] sm:$0xff]
        %v497 = vld [vmem:[%s359 + $0x138] sm:$0xff]
        %v498 = vld [vmem:[%s359 + $0x140] sm:$0xff]
        %v499 = vld [vmem:[%s359 + $0x148] sm:$0xff]
        %v500 = vld [vmem:[%s359 + $0x150] sm:$0xff]
        %v501 = vld [vmem:[%s359 + $0x158] sm:$0xff]
        %v502 = vld [vmem:[%s359 + $0x160] sm:$0xff]
        %v503 = vld [vmem:[%s359 + $0x168] sm:$0xff]
        %v504 = vld [vmem:[%s359 + $0x170] sm:$0xff]
        %v505 = vld [vmem:[%s359 + $0x178] sm:$0xff]
        %v506 = vld [vmem:[%s359 + $0x180] sm:$0xff]
        %v507 = vld [vmem:[%s359 + $0x188] sm:$0xff]
        %v508 = vld [vmem:[%s359 + $0x190] sm:$0xff]
        %v509 = vld [vmem:[%s359 + $0x198] sm:$0xff]
        %v510 = vld [vmem:[%s359 + $0x1a0] sm:$0xff]
        %v511 = vld [vmem:[%s359 + $0x1a8] sm:$0xff]
        %v512 = vld [vmem:[%s359 + $0x1b0] sm:$0xff]
        %v513 = vld [vmem:[%s359 + $0x1b8] sm:$0xff]
        %v514 = vld [vmem:[%s359 + $0x1c0] sm:$0xff]
        %v515 = vld [vmem:[%s359 + $0x1c8] sm:$0xff]
        %v516 = vld [vmem:[%s359 + $0x1d0] sm:$0xff]
        %v517 = vld [vmem:[%s359 + $0x1d8] sm:$0xff]
        %v518 = vld [vmem:[%s359 + $0x1e0] sm:$0xff]
        %v519 = vld [vmem:[%s359 + $0x1e8] sm:$0xff]
        %v520 = vld [vmem:[%s359 + $0x1f0] sm:$0xff]
        %v521 = vld [vmem:[%s359 + $0x1f8] sm:$0xff]
        %v522 = vld [vmem:[%s359 + $0x200] sm:$0xff]
        %v523 = vld [vmem:[%s359 + $0x208] sm:$0xff]
        %v524 = vld [vmem:[%s359 + $0x210] sm:$0xff]
        %v525 = vld [vmem:[%s359 + $0x218] sm:$0xff]
        %v526 = vld [vmem:[%s359 + $0x220] sm:$0xff]
        %v527 = vld [vmem:[%s359 + $0x228] sm:$0xff]
        %v528 = vld [vmem:[%s359 + $0x230] sm:$0xff]
        %v529 = vld [vmem:[%s359 + $0x238] sm:$0xff]
        %v530 = vld [vmem:[%s359 + $0x240] sm:$0xff]
        %v531 = vld [vmem:[%s359 + $0x248] sm:$0xff]
        %v532 = vld [vmem:[%s359 + $0x250] sm:$0xff]
        %v533 = vld [vmem:[%s359 + $0x258] sm:$0xff]
        %v534 = vld [vmem:[%s359 + $0x260] sm:$0xff]
        %v535 = vld [vmem:[%s359 + $0x268] sm:$0xff]
        %v536 = vld [vmem:[%s359 + $0x270] sm:$0xff]
        %v537 = vld [vmem:[%s359 + $0x278] sm:$0xff]
        %v538 = vld [vmem:[%s359 + $0x280] sm:$0xff]
        %v539 = vld [vmem:[%s359 + $0x288] sm:$0xff]
        %v540 = vld [vmem:[%s359 + $0x290] sm:$0xff]
        %v541 = vld [vmem:[%s359 + $0x298] sm:$0xff]
        %v542 = vld [vmem:[%s359 + $0x2a0] sm:$0xff]
        %v543 = vld [vmem:[%s359 + $0x2a8] sm:$0xff]
        %v544 = vld [vmem:[%s359 + $0x2b0] sm:$0xff]
        %v545 = vld [vmem:[%s359 + $0x2b8] sm:$0xff]
        %v546 = vld [vmem:[%s359 + $0x2c0] sm:$0xff]
        %v547 = vld [vmem:[%s359 + $0x2c8] sm:$0xff]
        %v548 = vld [vmem:[%s359 + $0x2d0] sm:$0xff]
        %v549 = vld [vmem:[%s359 + $0x2d8] sm:$0xff]
        %v550 = vld [vmem:[%s359 + $0x2e0] sm:$0xff]
        %v551 = vld [vmem:[%s359 + $0x2e8] sm:$0xff]
        %v552 = vld [vmem:[%s359 + $0x2f0] sm:$0xff]
        %v553 = vld [vmem:[%s359 + $0x2f8] sm:$0xff]
        %v554 = vld [vmem:[%s359 + $0x300] sm:$0xff]
        %v555 = vld [vmem:[%s359 + $0x308] sm:$0xff]
        %v556 = vld [vmem:[%s359 + $0x310] sm:$0xff]
        %v557 = vld [vmem:[%s359 + $0x318] sm:$0xff]
        %v558 = vld [vmem:[%s359 + $0x320] sm:$0xff]
        %v559 = vld [vmem:[%s359 + $0x328] sm:$0xff]
        %v560 = vld [vmem:[%s359 + $0x330] sm:$0xff]
        %v561 = vld [vmem:[%s359 + $0x338] sm:$0xff]
        %v562 = vld [vmem:[%s359 + $0x340] sm:$0xff]
        %v563 = vld [vmem:[%s359 + $0x348] sm:$0xff]
        %v564 = vld [vmem:[%s359 + $0x350] sm:$0xff]
        %v565 = vld [vmem:[%s359 + $0x358] sm:$0xff]
        %v566 = vld [vmem:[%s359 + $0x360] sm:$0xff]
        %v567 = vld [vmem:[%s359 + $0x368] sm:$0xff]
        %v568 = vld [vmem:[%s359 + $0x370] sm:$0xff]
        %v569 = vld [vmem:[%s359 + $0x378] sm:$0xff]
        %v570 = vld [vmem:[%s359 + $0x380] sm:$0xff]
        %v571 = vld [vmem:[%s359 + $0x388] sm:$0xff]
        %v572 = vld [vmem:[%s359 + $0x390] sm:$0xff]
        %v573 = vld [vmem:[%s359 + $0x398] sm:$0xff]
        %v574 = vld [vmem:[%s359 + $0x3a0] sm:$0xff]
        %v575 = vld [vmem:[%s359 + $0x3a8] sm:$0xff]
        %v576 = vld [vmem:[%s359 + $0x3b0] sm:$0xff]
        %v577 = vld [vmem:[%s359 + $0x3b8] sm:$0xff]
        %v578 = vld [vmem:[%s359 + $0x3c0] sm:$0xff]
        %v579 = vld [vmem:[%s359 + $0x3c8] sm:$0xff]
        %v580 = vld [vmem:[%s359 + $0x3d0] sm:$0xff]
        %v581 = vld [vmem:[%s359 + $0x3d8] sm:$0xff]
        %v582 = vld [vmem:[%s359 + $0x3e0] sm:$0xff]
        %v583 = vld [vmem:[%s359 + $0x3e8] sm:$0xff]
        %v584 = vld [vmem:[%s359 + $0x3f0] sm:$0xff]
        %v585 = vld [vmem:[%s359 + $0x3f8] sm:$0xff]
        %v586 = vld [vmem:[%s359 + $0x400] sm:$0xff]
        %v587 = vld [vmem:[%s359 + $0x408] sm:$0xff]
        %v588 = vld [vmem:[%s359 + $0x410] sm:$0xff]
        %v589 = vld [vmem:[%s359 + $0x418] sm:$0xff]
        %v590 = vld [vmem:[%s359 + $0x420] sm:$0xff]
        %v591 = vld [vmem:[%s359 + $0x428] sm:$0xff]
        %v592 = vld [vmem:[%s359 + $0x430] sm:$0xff]
        %v593 = vld [vmem:[%s359 + $0x438] sm:$0xff]
        %v594 = vld [vmem:[%s359 + $0x440] sm:$0xff]
        %v595 = vld [vmem:[%s359 + $0x448] sm:$0xff]
        %v596 = vld [vmem:[%s359 + $0x450] sm:$0xff]
        %v597 = vld [vmem:[%s359 + $0x458] sm:$0xff]
        %v598 = vld [vmem:[%s359 + $0x460] sm:$0xff]
        %v599 = vld [vmem:[%s359 + $0x468] sm:$0xff]
        %v600 = vld [vmem:[%s359 + $0x470] sm:$0xff]
        %v601 = vld [vmem:[%s359 + $0x478] sm:$0xff]
        %v602 = vld [vmem:[%s359 + $0x480] sm:$0xff]
        %v603 = vld [vmem:[%s359 + $0x488] sm:$0xff]
        %v604 = vld [vmem:[%s359 + $0x490] sm:$0xff]
        %v605 = vld [vmem:[%s359 + $0x498] sm:$0xff]
        %v606 = vld [vmem:[%s359 + $0x4a0] sm:$0xff]
        %v607 = vld [vmem:[%s359 + $0x4a8] sm:$0xff]
        %v608 = vld [vmem:[%s359 + $0x4b0] sm:$0xff]
        %v609 = vld [vmem:[%s359 + $0x4b8] sm:$0xff]
        %v610 = vld [vmem:[%s359 + $0x4c0] sm:$0xff]
        %v611 = vld [vmem:[%s359 + $0x4c8] sm:$0xff]
        %v612 = vld [vmem:[%s359 + $0x4d0] sm:$0xff]
        %v613 = vld [vmem:[%s359 + $0x4d8] sm:$0xff]
        %v614 = vld [vmem:[%s359 + $0x4e0] sm:$0xff]
        %v615 = vld [vmem:[%s359 + $0x4e8] sm:$0xff]
        %v616 = vld [vmem:[%s359 + $0x4f0] sm:$0xff]
        %v617 = vld [vmem:[%s359 + $0x4f8] sm:$0xff]
        %v618 = vld [vmem:[%s359 + $0x500] sm:$0xff]
        %v619 = vld [vmem:[%s359 + $0x508] sm:$0xff]
        %v620 = vld [vmem:[%s359 + $0x510] sm:$0xff]
        %v621 = vld [vmem:[%s359 + $0x518] sm:$0xff]
        %v622 = vld [vmem:[%s359 + $0x520] sm:$0xff]
        %v623 = vld [vmem:[%s359 + $0x528] sm:$0xff]
        %v624 = vld [vmem:[%s359 + $0x530] sm:$0xff]
        %v625 = vld [vmem:[%s359 + $0x538] sm:$0xff]
        %v626 = vld [vmem:[%s359 + $0x540] sm:$0xff]
        %v627 = vld [vmem:[%s359 + $0x548] sm:$0xff]
        %v628 = vld [vmem:[%s359 + $0x550] sm:$0xff]
        %v629 = vld [vmem:[%s359 + $0x558] sm:$0xff]
        %v630 = vld [vmem:[%s359 + $0x560] sm:$0xff]
        %v631 = vld [vmem:[%s359 + $0x568] sm:$0xff]
        %v632 = vld [vmem:[%s359 + $0x570] sm:$0xff]
        %v633 = vld [vmem:[%s359 + $0x578] sm:$0xff]
        %v634 = vld [vmem:[%s359 + $0x580] sm:$0xff]
        %v635 = vld [vmem:[%s359 + $0x588] sm:$0xff]
        %v636 = vld [vmem:[%s359 + $0x590] sm:$0xff]
        %v637 = vld [vmem:[%s359 + $0x598] sm:$0xff]
        %v638 = vld [vmem:[%s359 + $0x5a0] sm:$0xff]
        %v639 = vld [vmem:[%s359 + $0x5a8] sm:$0xff]
        %v640 = vld [vmem:[%s359 + $0x5b0] sm:$0xff]
        %v641 = vld [vmem:[%s359 + $0x5b8] sm:$0xff]
        %v642 = vld [vmem:[%s359 + $0x5c0] sm:$0xff]
        %v643 = vld [vmem:[%s359 + $0x5c8] sm:$0xff]
        %v644 = vld [vmem:[%s359 + $0x5d0] sm:$0xff]
        %v645 = vld [vmem:[%s359 + $0x5d8] sm:$0xff]
        %v646 = vld [vmem:[%s359 + $0x5e0] sm:$0xff]
        %v647 = vld [vmem:[%s359 + $0x5e8] sm:$0xff]
        %v648 = vld [vmem:[%s359 + $0x5f0] sm:$0xff]
        %v649 = vld [vmem:[%s359 + $0x5f8] sm:$0xff]
        %v650 = vld [vmem:[%s359 + $0x600] sm:$0xff]
        %v651 = vld [vmem:[%s359 + $0x608] sm:$0xff]
        %v652 = vld [vmem:[%s359 + $0x610] sm:$0xff]
        %v653 = vld [vmem:[%s359 + $0x618] sm:$0xff]
        %v654 = vld [vmem:[%s359 + $0x620] sm:$0xff]
        %v655 = vld [vmem:[%s359 + $0x628] sm:$0xff]
        %v656 = vld [vmem:[%s359 + $0x630] sm:$0xff]
        %v657 = vld [vmem:[%s359 + $0x638] sm:$0xff]
        %v658 = vld [vmem:[%s359 + $0x640] sm:$0xff]
        %v659 = vld [vmem:[%s359 + $0x648] sm:$0xff]
        %v660 = vld [vmem:[%s359 + $0x650] sm:$0xff]
        %v661 = vld [vmem:[%s359 + $0x658] sm:$0xff]
        %v662 = vld [vmem:[%s359 + $0x660] sm:$0xff]
        %v663 = vld [vmem:[%s359 + $0x668] sm:$0xff]
        %v664 = vld [vmem:[%s359 + $0x670] sm:$0xff]
        %v665 = vld [vmem:[%s359 + $0x678] sm:$0xff]
        %v666 = vld [vmem:[%s359 + $0x680] sm:$0xff]
        %v667 = vld [vmem:[%s359 + $0x688] sm:$0xff]
        %v668 = vld [vmem:[%s359 + $0x690] sm:$0xff]
        %v669 = vld [vmem:[%s359 + $0x698] sm:$0xff]
        %v670 = vld [vmem:[%s359 + $0x6a0] sm:$0xff]
        %v671 = vld [vmem:[%s359 + $0x6a8] sm:$0xff]
        %v672 = vld [vmem:[%s359 + $0x6b0] sm:$0xff]
        %v673 = vld [vmem:[%s359 + $0x6b8] sm:$0xff]
        %v674 = vld [vmem:[%s359 + $0x6c0] sm:$0xff]
        %v675 = vld [vmem:[%s359 + $0x6c8] sm:$0xff]
        %v676 = vld [vmem:[%s359 + $0x6d0] sm:$0xff]
        %v677 = vld [vmem:[%s359 + $0x6d8] sm:$0xff]
        %v678 = vld [vmem:[%s359 + $0x6e0] sm:$0xff]
        %v679 = vld [vmem:[%s359 + $0x6e8] sm:$0xff]
        %v680 = vld [vmem:[%s359 + $0x6f0] sm:$0xff]
        %v681 = vld [vmem:[%s359 + $0x6f8] sm:$0xff]
        %v682 = vld [vmem:[%s359 + $0x700] sm:$0xff]
        %v683 = vld [vmem:[%s359 + $0x708] sm:$0xff]
        %v684 = vld [vmem:[%s359 + $0x710] sm:$0xff]
        %v685 = vld [vmem:[%s359 + $0x718] sm:$0xff]
        %v686 = vld [vmem:[%s359 + $0x720] sm:$0xff]
        %v687 = vld [vmem:[%s359 + $0x728] sm:$0xff]
        %v688 = vld [vmem:[%s359 + $0x730] sm:$0xff]
        %v689 = vld [vmem:[%s359 + $0x738] sm:$0xff]
        %v690 = vld [vmem:[%s359 + $0x740] sm:$0xff]
        %v691 = vld [vmem:[%s359 + $0x748] sm:$0xff]
        %v692 = vld [vmem:[%s359 + $0x750] sm:$0xff]
        %v693 = vld [vmem:[%s359 + $0x758] sm:$0xff]
        %v694 = vld [vmem:[%s359 + $0x760] sm:$0xff]
        %v695 = vld [vmem:[%s359 + $0x768] sm:$0xff]
        %v696 = vld [vmem:[%s359 + $0x770] sm:$0xff]
        %v697 = vld [vmem:[%s359 + $0x778] sm:$0xff]
        %v698 = vld [vmem:[%s359 + $0x780] sm:$0xff]
        %v699 = vld [vmem:[%s359 + $0x788] sm:$0xff]
        %v700 = vld [vmem:[%s359 + $0x790] sm:$0xff]
        %v701 = vld [vmem:[%s359 + $0x798] sm:$0xff]
        %v702 = vld [vmem:[%s359 + $0x7a0] sm:$0xff]
        %v703 = vld [vmem:[%s359 + $0x7a8] sm:$0xff]
        %v704 = vld [vmem:[%s359 + $0x7b0] sm:$0xff]
        %v705 = vld [vmem:[%s359 + $0x7b8] sm:$0xff]
        %v706 = vld [vmem:[%s359 + $0x7c0] sm:$0xff]
        %v707 = vld [vmem:[%s359 + $0x7c8] sm:$0xff]
        %v708 = vld [vmem:[%s359 + $0x7d0] sm:$0xff]
        %v709 = vld [vmem:[%s359 + $0x7d8] sm:$0xff]
        %v710 = vld [vmem:[%s359 + $0x7e0] sm:$0xff]
        %v711 = vld [vmem:[%s359 + $0x7e8] sm:$0xff]
        %v712 = vld [vmem:[%s359 + $0x7f0] sm:$0xff]
        %v713 = vld [vmem:[%s359 + $0x7f8] sm:$0xff]
        %v714 = vld [vmem:[%s359 + $0x800] sm:$0xff]
        %v715 = vld [vmem:[%s359 + $0x808] sm:$0xff]
        %v716 = vld [vmem:[%s359 + $0x810] sm:$0xff]
        %v717 = vld [vmem:[%s359 + $0x818] sm:$0xff]
        %v718 = vld [vmem:[%s359 + $0x820] sm:$0xff]
        %v719 = vld [vmem:[%s359 + $0x828] sm:$0xff]
        %v720 = vld [vmem:[%s359 + $0x830] sm:$0xff]
        %v721 = vld [vmem:[%s359 + $0x838] sm:$0xff]
        %v722 = vld [vmem:[%s359 + $0x840] sm:$0xff]
        %v723 = vld [vmem:[%s359 + $0x848] sm:$0xff]
        %v724 = vld [vmem:[%s359 + $0x850] sm:$0xff]
        %v725 = vld [vmem:[%s359 + $0x858] sm:$0xff]
        %v726 = vld [vmem:[%s359 + $0x860] sm:$0xff]
        %v727 = vld [vmem:[%s359 + $0x868] sm:$0xff]
        %v728 = vld [vmem:[%s359 + $0x870] sm:$0xff]
        %v729 = vld [vmem:[%s359 + $0x878] sm:$0xff]
        %v730 = vld [vmem:[%s359 + $0x880] sm:$0xff]
        %v731 = vld [vmem:[%s359 + $0x888] sm:$0xff]
        %v732 = vld [vmem:[%s359 + $0x890] sm:$0xff]
        %v733 = vld [vmem:[%s359 + $0x898] sm:$0xff]
        %v734 = vld [vmem:[%s359 + $0x8a0] sm:$0xff]
        %v735 = vld [vmem:[%s359 + $0x8a8] sm:$0xff]
        %v736 = vld [vmem:[%s359 + $0x8b0] sm:$0xff]
        %v737 = vld [vmem:[%s359 + $0x8b8] sm:$0xff]
        %v738 = vld [vmem:[%s359 + $0x8c0] sm:$0xff]
        %v739 = vld [vmem:[%s359 + $0x8c8] sm:$0xff]
        %v740 = vld [vmem:[%s359 + $0x8d0] sm:$0xff]
        %v741 = vld [vmem:[%s359 + $0x8d8] sm:$0xff]
        %v742 = vld [vmem:[%s359 + $0x8e0] sm:$0xff]
        %v743 = vld [vmem:[%s359 + $0x8e8] sm:$0xff]
        %v744 = vld [vmem:[%s359 + $0x8f0] sm:$0xff]
        %v745 = vld [vmem:[%s359 + $0x8f8] sm:$0xff]
        %v746 = vld [vmem:[%s359 + $0x900] sm:$0xff]
        %v747 = vld [vmem:[%s359 + $0x908] sm:$0xff]
        %v748 = vld [vmem:[%s359 + $0x910] sm:$0xff]
        %v749 = vld [vmem:[%s359 + $0x918] sm:$0xff]
        %v750 = vld [vmem:[%s359 + $0x920] sm:$0xff]
        %v751 = vld [vmem:[%s359 + $0x928] sm:$0xff]
        %v752 = vld [vmem:[%s359 + $0x930] sm:$0xff]
        %v753 = vld [vmem:[%s359 + $0x938] sm:$0xff]
        %v754 = vld [vmem:[%s359 + $0x940] sm:$0xff]
        %v755 = vld [vmem:[%s359 + $0x948] sm:$0xff]
        %v756 = vld [vmem:[%s359 + $0x950] sm:$0xff]
        %v757 = vld [vmem:[%s359 + $0x958] sm:$0xff]
        %v758 = vld [vmem:[%s359 + $0x960] sm:$0xff]
        %v759 = vld [vmem:[%s359 + $0x968] sm:$0xff]
        %v760 = vld [vmem:[%s359 + $0x970] sm:$0xff]
        %v761 = vld [vmem:[%s359 + $0x978] sm:$0xff]
        %v762 = vld [vmem:[%s359 + $0x980] sm:$0xff]
        %v763 = vld [vmem:[%s359 + $0x988] sm:$0xff]
        %v764 = vld [vmem:[%s359 + $0x990] sm:$0xff]
        %v765 = vld [vmem:[%s359 + $0x998] sm:$0xff]
        %v766 = vld [vmem:[%s359 + $0x9a0] sm:$0xff]
        %v767 = vld [vmem:[%s359 + $0x9a8] sm:$0xff]
        %v768 = vld [vmem:[%s359 + $0x9b0] sm:$0xff]
        %v769 = vld [vmem:[%s359 + $0x9b8] sm:$0xff]
        %v770 = vld [vmem:[%s359 + $0x9c0] sm:$0xff]
        %v771 = vld [vmem:[%s359 + $0x9c8] sm:$0xff]
        %v772 = vld [vmem:[%s359 + $0x9d0] sm:$0xff]
        %v773 = vld [vmem:[%s359 + $0x9d8] sm:$0xff]
        %v774 = vld [vmem:[%s359 + $0x9e0] sm:$0xff]
        %v775 = vld [vmem:[%s359 + $0x9e8] sm:$0xff]
        %v776 = vld [vmem:[%s359 + $0x9f0] sm:$0xff]
        %v777 = vld [vmem:[%s359 + $0x9f8] sm:$0xff]
        %v778 = vld [vmem:[%s359 + $0xa00] sm:$0xff]
        %v779 = vld [vmem:[%s359 + $0xa08] sm:$0xff]
        %v780 = vld [vmem:[%s359 + $0xa10] sm:$0xff]
        %v781 = vld [vmem:[%s359 + $0xa18] sm:$0xff]
        %v782 = vld [vmem:[%s359 + $0xa20] sm:$0xff]
        %v783 = vld [vmem:[%s359 + $0xa28] sm:$0xff]
        %v784 = vld [vmem:[%s359 + $0xa30] sm:$0xff]
        %v785 = vld [vmem:[%s359 + $0xa38] sm:$0xff]
        %v786 = vld [vmem:[%s359 + $0xa40] sm:$0xff]
        %v787 = vld [vmem:[%s359 + $0xa48] sm:$0xff]
        %v788 = vld [vmem:[%s359 + $0xa50] sm:$0xff]
        %v789 = vld [vmem:[%s359 + $0xa58] sm:$0xff]
        %v790 = vld [vmem:[%s359 + $0xa60] sm:$0xff]
        %v791 = vld [vmem:[%s359 + $0xa68] sm:$0xff]
        %v792 = vld [vmem:[%s359 + $0xa70] sm:$0xff]
        %v793 = vld [vmem:[%s359 + $0xa78] sm:$0xff]
        %v794 = vld [vmem:[%s359 + $0xa80] sm:$0xff]
        %v795 = vld [vmem:[%s359 + $0xa88] sm:$0xff]
        %v796 = vld [vmem:[%s359 + $0xa90] sm:$0xff]
        %v797 = vld [vmem:[%s359 + $0xa98] sm:$0xff]
        %v798 = vld [vmem:[%s359 + $0xaa0] sm:$0xff]
        %v799 = vld [vmem:[%s359 + $0xaa8] sm:$0xff]
        %v800 = vld [vmem:[%s359 + $0xab0] sm:$0xff]
        %v801 = vld [vmem:[%s359 + $0xab8] sm:$0xff]
        %v802 = vld [vmem:[%s359 + $0xac0] sm:$0xff]
        %v803 = vld [vmem:[%s359 + $0xac8] sm:$0xff]
        %v804 = vld [vmem:[%s359 + $0xad0] sm:$0xff]
        %v805 = vld [vmem:[%s359 + $0xad8] sm:$0xff]
        %v806 = vld [vmem:[%s359 + $0xae0] sm:$0xff]
        %v807 = vld [vmem:[%s359 + $0xae8] sm:$0xff]
        %v808 = vld [vmem:[%s359 + $0xaf0] sm:$0xff]
        %v809 = vld [vmem:[%s359 + $0xaf8] sm:$0xff]
        %v810 = vld [vmem:[%s359 + $0xb00] sm:$0xff]
        %v811 = vld [vmem:[%s359 + $0xb08] sm:$0xff]
        %v812 = vld [vmem:[%s359 + $0xb10] sm:$0xff]
        %v813 = vld [vmem:[%s359 + $0xb18] sm:$0xff]
        %v814 = vld [vmem:[%s359 + $0xb20] sm:$0xff]
        %v815 = vld [vmem:[%s359 + $0xb28] sm:$0xff]
        %v816 = vld [vmem:[%s359 + $0xb30] sm:$0xff]
        %v817 = vld [vmem:[%s359 + $0xb38] sm:$0xff]
        %v818 = vld [vmem:[%s359 + $0xb40] sm:$0xff]
        %v819 = vld [vmem:[%s359 + $0xb48] sm:$0xff]
        %v820 = vld [vmem:[%s359 + $0xb50] sm:$0xff]
        %v821 = vld [vmem:[%s359 + $0xb58] sm:$0xff]
        %v822 = vld [vmem:[%s359 + $0xb60] sm:$0xff]
        %v823 = vld [vmem:[%s359 + $0xb68] sm:$0xff]
        %v824 = vld [vmem:[%s359 + $0xb70] sm:$0xff]
        %v825 = vld [vmem:[%s359 + $0xb78] sm:$0xff]
        %v826 = vld [vmem:[%s359 + $0xb80] sm:$0xff]
        %v827 = vld [vmem:[%s359 + $0xb88] sm:$0xff]
        %v828 = vld [vmem:[%s359 + $0xb90] sm:$0xff]
        %v829 = vld [vmem:[%s359 + $0xb98] sm:$0xff]
        %v830 = vld [vmem:[%s359 + $0xba0] sm:$0xff]
        %v831 = vld [vmem:[%s359 + $0xba8] sm:$0xff]
        %v832 = vld [vmem:[%s359 + $0xbb0] sm:$0xff]
        %v833 = vld [vmem:[%s359 + $0xbb8] sm:$0xff]
        %v834 = vld [vmem:[%s359 + $0xbc0] sm:$0xff]
        %v835 = vld [vmem:[%s359 + $0xbc8] sm:$0xff]
        %v836 = vld [vmem:[%s359 + $0xbd0] sm:$0xff]
        %v837 = vld [vmem:[%s359 + $0xbd8] sm:$0xff]
        %v838 = vld [vmem:[%s359 + $0xbe0] sm:$0xff]
        %v839 = vld [vmem:[%s359 + $0xbe8] sm:$0xff]
        %v840 = vld [vmem:[%s359 + $0xbf0] sm:$0xff]
        %v841 = vld [vmem:[%s359 + $0xbf8] sm:$0xff]
        %v842 = vld [vmem:[%s359 + $0xc00] sm:$0xff]
        %v843 = vld [vmem:[%s359 + $0xc08] sm:$0xff]
        %v844 = vld [vmem:[%s359 + $0xc10] sm:$0xff]
        %v845 = vld [vmem:[%s359 + $0xc18] sm:$0xff]
        %v846 = vld [vmem:[%s359 + $0xc20] sm:$0xff]
        %v847 = vld [vmem:[%s359 + $0xc28] sm:$0xff]
        %v848 = vld [vmem:[%s359 + $0xc30] sm:$0xff]
        %v849 = vld [vmem:[%s359 + $0xc38] sm:$0xff]
        %v850 = vld [vmem:[%s359 + $0xc40] sm:$0xff]
        %v851 = vld [vmem:[%s359 + $0xc48] sm:$0xff]
        %v852 = vld [vmem:[%s359 + $0xc50] sm:$0xff]
        %v853 = vld [vmem:[%s359 + $0xc58] sm:$0xff]
        %v854 = vld [vmem:[%s359 + $0xc60] sm:$0xff]
        %v855 = vld [vmem:[%s359 + $0xc68] sm:$0xff]
        %v856 = vld [vmem:[%s359 + $0xc70] sm:$0xff]
        %v857 = vld [vmem:[%s359 + $0xc78] sm:$0xff]
        %v858 = vld [vmem:[%s359 + $0xc80] sm:$0xff]
        %v859 = vld [vmem:[%s359 + $0xc88] sm:$0xff]
        %v860 = vld [vmem:[%s359 + $0xc90] sm:$0xff]
        %v861 = vld [vmem:[%s359 + $0xc98] sm:$0xff]
        %v862 = vld [vmem:[%s359 + $0xca0] sm:$0xff]
        %v863 = vld [vmem:[%s359 + $0xca8] sm:$0xff]
        %v864 = vld [vmem:[%s359 + $0xcb0] sm:$0xff]
        %v865 = vld [vmem:[%s359 + $0xcb8] sm:$0xff]
        %v866 = vld [vmem:[%s359 + $0xcc0] sm:$0xff]
        %v867 = vld [vmem:[%s359 + $0xcc8] sm:$0xff]
        %v868 = vld [vmem:[%s359 + $0xcd0] sm:$0xff]
        %v869 = vld [vmem:[%s359 + $0xcd8] sm:$0xff]
        %v870 = vld [vmem:[%s359 + $0xce0] sm:$0xff]
        %v871 = vld [vmem:[%s359 + $0xce8] sm:$0xff]
        %v872 = vld [vmem:[%s359 + $0xcf0] sm:$0xff]
        %v873 = vld [vmem:[%s359 + $0xcf8] sm:$0xff]
        %v874 = vld [vmem:[%s359 + $0xd00] sm:$0xff]
        %v875 = vld [vmem:[%s359 + $0xd08] sm:$0xff]
        %v876 = vld [vmem:[%s359 + $0xd10] sm:$0xff]
        %v877 = vld [vmem:[%s359 + $0xd18] sm:$0xff]
        %v878 = vld [vmem:[%s359 + $0xd20] sm:$0xff]
        %v879 = vld [vmem:[%s359 + $0xd28] sm:$0xff]
        %v880 = vld [vmem:[%s359 + $0xd30] sm:$0xff]
        %v881 = vld [vmem:[%s359 + $0xd38] sm:$0xff]
        %v882 = vld [vmem:[%s359 + $0xd40] sm:$0xff]
        %v883 = vld [vmem:[%s359 + $0xd48] sm:$0xff]
        %v884 = vld [vmem:[%s359 + $0xd50] sm:$0xff]
        %v885 = vld [vmem:[%s359 + $0xd58] sm:$0xff]
        %v886 = vld [vmem:[%s359 + $0xd60] sm:$0xff]
        %v887 = vld [vmem:[%s359 + $0xd68] sm:$0xff]
        %v888 = vld [vmem:[%s359 + $0xd70] sm:$0xff]
        %v889 = vld [vmem:[%s359 + $0xd78] sm:$0xff]
        %v890 = vld [vmem:[%s359 + $0xd80] sm:$0xff]
        %v891 = vld [vmem:[%s359 + $0xd88] sm:$0xff]
        %v892 = vld [vmem:[%s359 + $0xd90] sm:$0xff]
        %v893 = vld [vmem:[%s359 + $0xd98] sm:$0xff]
        %v894 = vld [vmem:[%s359 + $0xda0] sm:$0xff]
        %v895 = vld [vmem:[%s359 + $0xda8] sm:$0xff]
        %v896 = vld [vmem:[%s359 + $0xdb0] sm:$0xff]
        %v897 = vld [vmem:[%s359 + $0xdb8] sm:$0xff]
        %v898 = vld [vmem:[%s359 + $0xdc0] sm:$0xff]
        %v899 = vld [vmem:[%s359 + $0xdc8] sm:$0xff]
        %v900 = vld [vmem:[%s359 + $0xdd0] sm:$0xff]
        %v901 = vld [vmem:[%s359 + $0xdd8] sm:$0xff]
        %v902 = vld [vmem:[%s359 + $0xde0] sm:$0xff]
        %v903 = vld [vmem:[%s359 + $0xde8] sm:$0xff]
        %v904 = vld [vmem:[%s359 + $0xdf0] sm:$0xff]
        %v905 = vld [vmem:[%s359 + $0xdf8] sm:$0xff]
        %v906 = vld [vmem:[%s359 + $0xe00] sm:$0xff]
        %v907 = vld [vmem:[%s359 + $0xe08] sm:$0xff]
        %v908 = vld [vmem:[%s359 + $0xe10] sm:$0xff]
        %v909 = vld [vmem:[%s359 + $0xe18] sm:$0xff]
        %v910 = vld [vmem:[%s359 + $0xe20] sm:$0xff]
        %v911 = vld [vmem:[%s359 + $0xe28] sm:$0xff]
        %v912 = vld [vmem:[%s359 + $0xe30] sm:$0xff]
        %v913 = vld [vmem:[%s359 + $0xe38] sm:$0xff]
        %v914 = vld [vmem:[%s359 + $0xe40] sm:$0xff]
        %v915 = vld [vmem:[%s359 + $0xe48] sm:$0xff]
        %v916 = vld [vmem:[%s359 + $0xe50] sm:$0xff]
        %v917 = vld [vmem:[%s359 + $0xe58] sm:$0xff]
        %v918 = vld [vmem:[%s359 + $0xe60] sm:$0xff]
        %v919 = vld [vmem:[%s359 + $0xe68] sm:$0xff]
        %v920 = vld [vmem:[%s359 + $0xe70] sm:$0xff]
        %v921 = vld [vmem:[%s359 + $0xe78] sm:$0xff]
        %v922 = vld [vmem:[%s359 + $0xe80] sm:$0xff]
        %v923 = vld [vmem:[%s359 + $0xe88] sm:$0xff]
        %v924 = vld [vmem:[%s359 + $0xe90] sm:$0xff]
        %v925 = vld [vmem:[%s359 + $0xe98] sm:$0xff]
        %v926 = vld [vmem:[%s359 + $0xea0] sm:$0xff]
        %v927 = vld [vmem:[%s359 + $0xea8] sm:$0xff]
        %v928 = vld [vmem:[%s359 + $0xeb0] sm:$0xff]
        %v929 = vld [vmem:[%s359 + $0xeb8] sm:$0xff]
        %v930 = vld [vmem:[%s359 + $0xec0] sm:$0xff]
        %v931 = vld [vmem:[%s359 + $0xec8] sm:$0xff]
        %v932 = vld [vmem:[%s359 + $0xed0] sm:$0xff]
        %v933 = vld [vmem:[%s359 + $0xed8] sm:$0xff]
        %v934 = vld [vmem:[%s359 + $0xee0] sm:$0xff]
        %v935 = vld [vmem:[%s359 + $0xee8] sm:$0xff]
        %v936 = vld [vmem:[%s359 + $0xef0] sm:$0xff]
        %v937 = vld [vmem:[%s359 + $0xef8] sm:$0xff]
        %v938 = vld [vmem:[%s359 + $0xf00] sm:$0xff]
        %v939 = vld [vmem:[%s359 + $0xf08] sm:$0xff]
        %v940 = vld [vmem:[%s359 + $0xf10] sm:$0xff]
        %v941 = vld [vmem:[%s359 + $0xf18] sm:$0xff]
        %v942 = vld [vmem:[%s359 + $0xf20] sm:$0xff]
        %v943 = vld [vmem:[%s359 + $0xf28] sm:$0xff]
        %v944 = vld [vmem:[%s359 + $0xf30] sm:$0xff]
        %v945 = vld [vmem:[%s359 + $0xf38] sm:$0xff]
        %v946 = vld [vmem:[%s359 + $0xf40] sm:$0xff]
        %v947 = vld [vmem:[%s359 + $0xf48] sm:$0xff]
        %v948 = vld [vmem:[%s359 + $0xf50] sm:$0xff]
        %v949 = vld [vmem:[%s359 + $0xf58] sm:$0xff]
        %v950 = vld [vmem:[%s359 + $0xf60] sm:$0xff]
        %v951 = vld [vmem:[%s359 + $0xf68] sm:$0xff]
        %v952 = vld [vmem:[%s359 + $0xf70] sm:$0xff]
        %v953 = vld [vmem:[%s359 + $0xf78] sm:$0xff]
        %v954 = vld [vmem:[%s359 + $0xf80] sm:$0xff]
        %v955 = vld [vmem:[%s359 + $0xf88] sm:$0xff]
        %v956 = vld [vmem:[%s359 + $0xf90] sm:$0xff]
        %v957 = vld [vmem:[%s359 + $0xf98] sm:$0xff]
        %v958 = vld [vmem:[%s359 + $0xfa0] sm:$0xff]
        %v959 = vld [vmem:[%s359 + $0xfa8] sm:$0xff]
        %v960 = vld [vmem:[%s359 + $0xfb0] sm:$0xff]
        %v961 = vld [vmem:[%s359 + $0xfb8] sm:$0xff]
        %v962 = vld [vmem:[%s359 + $0xfc0] sm:$0xff]
        %v963 = vld [vmem:[%s359 + $0xfc8] sm:$0xff]
        %v964 = vld [vmem:[%s359 + $0xfd0] sm:$0xff]
        %v965 = vld [vmem:[%s359 + $0xfd8] sm:$0xff]
        %v966 = vld [vmem:[%s359 + $0xfe0] sm:$0xff]
        %v967 = vld [vmem:[%s359 + $0xfe8] sm:$0xff]
        %v968 = vld [vmem:[%s359 + $0xff0] sm:$0xff]
        %v969 = vld [vmem:[%s359 + $0xff8] sm:$0xff]
        %v970 = vld [vmem:[%s368] sm:$0xf]
        %v972 = vlaneseq
        %v973 = vshrl.u32 %v972, 7
        %v974 = vsub.s32 0, %v973
        %v975 = vrot.slane %v970, %v974
        %v976 = vlaneseq
        %v977 = vshrl.u32 %v976, 7
        %v978 = vsub.s32 1, %v977
        %v979 = vrot.slane %v970, %v978
        %v980 = vlaneseq
        %v981 = vshrl.u32 %v980, 7
        %v982 = vsub.s32 2, %v981
        %v983 = vrot.slane %v970, %v982
        %v984 = vlaneseq
        %v985 = vshrl.u32 %v984, 7
        %v986 = vsub.s32 3, %v985
        %v987 = vrot.slane %v970, %v986
        %v994 = vcombine.high %v456, %v456
        %v996 = vunpack.c.l.s4 1966171168
        %v997 = vunpack.c.0.s8 %v996
        %v998 = vlaneseq
        %v999 = vshrl.u32 %v998, 7
        %v1000 = vsub.s32 %v997, %v999
        %v1001 = vrot.slane %v456, %v1000
        %v1003 = vunpack.c.l.s4 1966171168
        %v1004 = vunpack.c.0.s8 %v1003
        %v1005 = vlaneseq
        %v1006 = vshrl.u32 %v1005, 7
        %v1007 = vsub.s32 %v1004, %v1006
        %v1008 = vrot.slane %v994, %v1007
        %v1009 = vcombine.high %v1001, %v1001
        %v1010 = vcombine.high %v1008, %v1008
        %v1012 = vunpack.c.l.s4 1966171168
        %v1013 = vunpack.c.0.s8 %v1012
        %v1014 = vlaneseq
        %v1015 = vshrl.u32 %v1014, 7
        %v1016 = vsub.s32 %v1013, %v1015
        %v1017 = vrot.slane %v1001, %v1016
        %v1019 = vunpack.c.l.s4 1966171168
        %v1020 = vunpack.c.0.s8 %v1019
        %v1021 = vlaneseq
        %v1022 = vshrl.u32 %v1021, 7
        %v1023 = vsub.s32 %v1020, %v1022
        %v1024 = vrot.slane %v1008, %v1023
        %v1026 = vunpack.c.l.s4 1966171168
        %v1027 = vunpack.c.0.s8 %v1026
        %v1028 = vlaneseq
        %v1029 = vshrl.u32 %v1028, 7
        %v1030 = vsub.s32 %v1027, %v1029
        %v1031 = vrot.slane %v1009, %v1030
        %v1033 = vunpack.c.l.s4 1966171168
        %v1034 = vunpack.c.0.s8 %v1033
        %v1035 = vlaneseq
        %v1036 = vshrl.u32 %v1035, 7
        %v1037 = vsub.s32 %v1034, %v1036
        %v1038 = vrot.slane %v1010, %v1037
        %v1039 = vcombine.high %v1017, %v1017
        %v1040 = vcombine.high %v1024, %v1024
        %v1041 = vcombine.high %v1031, %v1031
        %v1042 = vcombine.high %v1038, %v1038
        %v1043 = vcombine.high %v457, %v457
        %v1045 = vunpack.c.l.s4 1966171168
        %v1046 = vunpack.c.0.s8 %v1045
        %v1047 = vlaneseq
        %v1048 = vshrl.u32 %v1047, 7
        %v1049 = vsub.s32 %v1046, %v1048
        %v1050 = vrot.slane %v457, %v1049
        %v1052 = vunpack.c.l.s4 1966171168
        %v1053 = vunpack.c.0.s8 %v1052
        %v1054 = vlaneseq
        %v1055 = vshrl.u32 %v1054, 7
        %v1056 = vsub.s32 %v1053, %v1055
        %v1057 = vrot.slane %v1043, %v1056
        %v1058 = vcombine.high %v1050, %v1050
        %v1059 = vcombine.high %v1057, %v1057
        %v1061 = vunpack.c.l.s4 1966171168
        %v1062 = vunpack.c.0.s8 %v1061
        %v1063 = vlaneseq
        %v1064 = vshrl.u32 %v1063, 7
        %v1065 = vsub.s32 %v1062, %v1064
        %v1066 = vrot.slane %v1050, %v1065
        %v1068 = vunpack.c.l.s4 1966171168
        %v1069 = vunpack.c.0.s8 %v1068
        %v1070 = vlaneseq
        %v1071 = vshrl.u32 %v1070, 7
        %v1072 = vsub.s32 %v1069, %v1071
        %v1073 = vrot.slane %v1057, %v1072
        %v1075 = vunpack.c.l.s4 1966171168
        %v1076 = vunpack.c.0.s8 %v1075
        %v1077 = vlaneseq
        %v1078 = vshrl.u32 %v1077, 7
        %v1079 = vsub.s32 %v1076, %v1078
        %v1080 = vrot.slane %v1058, %v1079
        %v1082 = vunpack.c.l.s4 1966171168
        %v1083 = vunpack.c.0.s8 %v1082
        %v1084 = vlaneseq
        %v1085 = vshrl.u32 %v1084, 7
        %v1086 = vsub.s32 %v1083, %v1085
        %v1087 = vrot.slane %v1059, %v1086
        %v1088 = vcombine.high %v1066, %v1066
        %v1089 = vcombine.high %v1073, %v1073
        %v1090 = vcombine.high %v1080, %v1080
        %v1091 = vcombine.high %v1087, %v1087
        %v1620 = vunpack.c.l.b16 %v458
        %v1621 = vunpack.c.h.b16 %v458
        %v1622 = vunpack.c.l.b16 %v459
        %v1623 = vunpack.c.h.b16 %v459
        %v1624 = vunpack.c.l.b16 %v460
        %v1625 = vunpack.c.h.b16 %v460
        %v1626 = vunpack.c.l.b16 %v461
        %v1627 = vunpack.c.h.b16 %v461
        %v1628 = vunpack.c.l.b16 %v462
        %v1629 = vunpack.c.h.b16 %v462
        %v1630 = vunpack.c.l.b16 %v463
        %v1631 = vunpack.c.h.b16 %v463
        %v1632 = vunpack.c.l.b16 %v464
        %v1633 = vunpack.c.h.b16 %v464
        %v1634 = vunpack.c.l.b16 %v465
        %v1635 = vunpack.c.h.b16 %v465
        %v1636 = vunpack.c.l.b16 %v466
        %v1637 = vunpack.c.h.b16 %v466
        %v1638 = vunpack.c.l.b16 %v467
        %v1639 = vunpack.c.h.b16 %v467
        %v1640 = vunpack.c.l.b16 %v468
        %v1641 = vunpack.c.h.b16 %v468
        %v1642 = vunpack.c.l.b16 %v469
        %v1643 = vunpack.c.h.b16 %v469
        %v1644 = vunpack.c.l.b16 %v470
        %v1645 = vunpack.c.h.b16 %v470
        %v1646 = vunpack.c.l.b16 %v471
        %v1647 = vunpack.c.h.b16 %v471
        %v1648 = vunpack.c.l.b16 %v472
        %v1649 = vunpack.c.h.b16 %v472
        %v1650 = vunpack.c.l.b16 %v473
        %v1651 = vunpack.c.h.b16 %v473
        %v1652 = vunpack.c.l.b16 %v474
        %v1653 = vunpack.c.h.b16 %v474
        %v1654 = vunpack.c.l.b16 %v475
        %v1655 = vunpack.c.h.b16 %v475
        %v1656 = vunpack.c.l.b16 %v476
        %v1657 = vunpack.c.h.b16 %v476
        %v1658 = vunpack.c.l.b16 %v477
        %v1659 = vunpack.c.h.b16 %v477
        %v1660 = vunpack.c.l.b16 %v478
        %v1661 = vunpack.c.h.b16 %v478
        %v1662 = vunpack.c.l.b16 %v479
        %v1663 = vunpack.c.h.b16 %v479
        %v1664 = vunpack.c.l.b16 %v480
        %v1665 = vunpack.c.h.b16 %v480
        %v1666 = vunpack.c.l.b16 %v481
        %v1667 = vunpack.c.h.b16 %v481
        %v1668 = vunpack.c.l.b16 %v482
        %v1669 = vunpack.c.h.b16 %v482
        %v1670 = vunpack.c.l.b16 %v483
        %v1671 = vunpack.c.h.b16 %v483
        %v1672 = vunpack.c.l.b16 %v484
        %v1673 = vunpack.c.h.b16 %v484
        %v1674 = vunpack.c.l.b16 %v485
        %v1675 = vunpack.c.h.b16 %v485
        %v1676 = vunpack.c.l.b16 %v486
        %v1677 = vunpack.c.h.b16 %v486
        %v1678 = vunpack.c.l.b16 %v487
        %v1679 = vunpack.c.h.b16 %v487
        %v1680 = vunpack.c.l.b16 %v488
        %v1681 = vunpack.c.h.b16 %v488
        %v1682 = vunpack.c.l.b16 %v489
        %v1683 = vunpack.c.h.b16 %v489
        %v1684 = vunpack.c.l.b16 %v490
        %v1685 = vunpack.c.h.b16 %v490
        %v1686 = vunpack.c.l.b16 %v491
        %v1687 = vunpack.c.h.b16 %v491
        %v1688 = vunpack.c.l.b16 %v492
        %v1689 = vunpack.c.h.b16 %v492
        %v1690 = vunpack.c.l.b16 %v493
        %v1691 = vunpack.c.h.b16 %v493
        %v1692 = vunpack.c.l.b16 %v494
        %v1693 = vunpack.c.h.b16 %v494
        %v1694 = vunpack.c.l.b16 %v495
        %v1695 = vunpack.c.h.b16 %v495
        %v1696 = vunpack.c.l.b16 %v496
        %v1697 = vunpack.c.h.b16 %v496
        %v1698 = vunpack.c.l.b16 %v497
        %v1699 = vunpack.c.h.b16 %v497
        %v1700 = vunpack.c.l.b16 %v498
        %v1701 = vunpack.c.h.b16 %v498
        %v1702 = vunpack.c.l.b16 %v499
        %v1703 = vunpack.c.h.b16 %v499
        %v1704 = vunpack.c.l.b16 %v500
        %v1705 = vunpack.c.h.b16 %v500
        %v1706 = vunpack.c.l.b16 %v501
        %v1707 = vunpack.c.h.b16 %v501
        %v1708 = vunpack.c.l.b16 %v502
        %v1709 = vunpack.c.h.b16 %v502
        %v1710 = vunpack.c.l.b16 %v503
        %v1711 = vunpack.c.h.b16 %v503
        %v1712 = vunpack.c.l.b16 %v504
        %v1713 = vunpack.c.h.b16 %v504
        %v1714 = vunpack.c.l.b16 %v505
        %v1715 = vunpack.c.h.b16 %v505
        %v1716 = vunpack.c.l.b16 %v506
        %v1717 = vunpack.c.h.b16 %v506
        %v1718 = vunpack.c.l.b16 %v507
        %v1719 = vunpack.c.h.b16 %v507
        %v1720 = vunpack.c.l.b16 %v508
        %v1721 = vunpack.c.h.b16 %v508
        %v1722 = vunpack.c.l.b16 %v509
        %v1723 = vunpack.c.h.b16 %v509
        %v1724 = vunpack.c.l.b16 %v510
        %v1725 = vunpack.c.h.b16 %v510
        %v1726 = vunpack.c.l.b16 %v511
        %v1727 = vunpack.c.h.b16 %v511
        %v1728 = vunpack.c.l.b16 %v512
        %v1729 = vunpack.c.h.b16 %v512
        %v1730 = vunpack.c.l.b16 %v513
        %v1731 = vunpack.c.h.b16 %v513
        %v1732 = vunpack.c.l.b16 %v514
        %v1733 = vunpack.c.h.b16 %v514
        %v1734 = vunpack.c.l.b16 %v515
        %v1735 = vunpack.c.h.b16 %v515
        %v1736 = vunpack.c.l.b16 %v516
        %v1737 = vunpack.c.h.b16 %v516
        %v1738 = vunpack.c.l.b16 %v517
        %v1739 = vunpack.c.h.b16 %v517
        %v1740 = vunpack.c.l.b16 %v518
        %v1741 = vunpack.c.h.b16 %v518
        %v1742 = vunpack.c.l.b16 %v519
        %v1743 = vunpack.c.h.b16 %v519
        %v1744 = vunpack.c.l.b16 %v520
        %v1745 = vunpack.c.h.b16 %v520
        %v1746 = vunpack.c.l.b16 %v521
        %v1747 = vunpack.c.h.b16 %v521
        %v1748 = vunpack.c.l.b16 %v522
        %v1749 = vunpack.c.h.b16 %v522
        %v1750 = vunpack.c.l.b16 %v523
        %v1751 = vunpack.c.h.b16 %v523
        %v1752 = vunpack.c.l.b16 %v524
        %v1753 = vunpack.c.h.b16 %v524
        %v1754 = vunpack.c.l.b16 %v525
        %v1755 = vunpack.c.h.b16 %v525
        %v1756 = vunpack.c.l.b16 %v526
        %v1757 = vunpack.c.h.b16 %v526
        %v1758 = vunpack.c.l.b16 %v527
        %v1759 = vunpack.c.h.b16 %v527
        %v1760 = vunpack.c.l.b16 %v528
        %v1761 = vunpack.c.h.b16 %v528
        %v1762 = vunpack.c.l.b16 %v529
        %v1763 = vunpack.c.h.b16 %v529
        %v1764 = vunpack.c.l.b16 %v530
        %v1765 = vunpack.c.h.b16 %v530
        %v1766 = vunpack.c.l.b16 %v531
        %v1767 = vunpack.c.h.b16 %v531
        %v1768 = vunpack.c.l.b16 %v532
        %v1769 = vunpack.c.h.b16 %v532
        %v1770 = vunpack.c.l.b16 %v533
        %v1771 = vunpack.c.h.b16 %v533
        %v1772 = vunpack.c.l.b16 %v534
        %v1773 = vunpack.c.h.b16 %v534
        %v1774 = vunpack.c.l.b16 %v535
        %v1775 = vunpack.c.h.b16 %v535
        %v1776 = vunpack.c.l.b16 %v536
        %v1777 = vunpack.c.h.b16 %v536
        %v1778 = vunpack.c.l.b16 %v537
        %v1779 = vunpack.c.h.b16 %v537
        %v1780 = vunpack.c.l.b16 %v538
        %v1781 = vunpack.c.h.b16 %v538
        %v1782 = vunpack.c.l.b16 %v539
        %v1783 = vunpack.c.h.b16 %v539
        %v1784 = vunpack.c.l.b16 %v540
        %v1785 = vunpack.c.h.b16 %v540
        %v1786 = vunpack.c.l.b16 %v541
        %v1787 = vunpack.c.h.b16 %v541
        %v1788 = vunpack.c.l.b16 %v542
        %v1789 = vunpack.c.h.b16 %v542
        %v1790 = vunpack.c.l.b16 %v543
        %v1791 = vunpack.c.h.b16 %v543
        %v1792 = vunpack.c.l.b16 %v544
        %v1793 = vunpack.c.h.b16 %v544
        %v1794 = vunpack.c.l.b16 %v545
        %v1795 = vunpack.c.h.b16 %v545
        %v1796 = vunpack.c.l.b16 %v546
        %v1797 = vunpack.c.h.b16 %v546
        %v1798 = vunpack.c.l.b16 %v547
        %v1799 = vunpack.c.h.b16 %v547
        %v1800 = vunpack.c.l.b16 %v548
        %v1801 = vunpack.c.h.b16 %v548
        %v1802 = vunpack.c.l.b16 %v549
        %v1803 = vunpack.c.h.b16 %v549
        %v1804 = vunpack.c.l.b16 %v550
        %v1805 = vunpack.c.h.b16 %v550
        %v1806 = vunpack.c.l.b16 %v551
        %v1807 = vunpack.c.h.b16 %v551
        %v1808 = vunpack.c.l.b16 %v552
        %v1809 = vunpack.c.h.b16 %v552
        %v1810 = vunpack.c.l.b16 %v553
        %v1811 = vunpack.c.h.b16 %v553
        %v1812 = vunpack.c.l.b16 %v554
        %v1813 = vunpack.c.h.b16 %v554
        %v1814 = vunpack.c.l.b16 %v555
        %v1815 = vunpack.c.h.b16 %v555
        %v1816 = vunpack.c.l.b16 %v556
        %v1817 = vunpack.c.h.b16 %v556
        %v1818 = vunpack.c.l.b16 %v557
        %v1819 = vunpack.c.h.b16 %v557
        %v1820 = vunpack.c.l.b16 %v558
        %v1821 = vunpack.c.h.b16 %v558
        %v1822 = vunpack.c.l.b16 %v559
        %v1823 = vunpack.c.h.b16 %v559
        %v1824 = vunpack.c.l.b16 %v560
        %v1825 = vunpack.c.h.b16 %v560
        %v1826 = vunpack.c.l.b16 %v561
        %v1827 = vunpack.c.h.b16 %v561
        %v1828 = vunpack.c.l.b16 %v562
        %v1829 = vunpack.c.h.b16 %v562
        %v1830 = vunpack.c.l.b16 %v563
        %v1831 = vunpack.c.h.b16 %v563
        %v1832 = vunpack.c.l.b16 %v564
        %v1833 = vunpack.c.h.b16 %v564
        %v1834 = vunpack.c.l.b16 %v565
        %v1835 = vunpack.c.h.b16 %v565
        %v1836 = vunpack.c.l.b16 %v566
        %v1837 = vunpack.c.h.b16 %v566
        %v1838 = vunpack.c.l.b16 %v567
        %v1839 = vunpack.c.h.b16 %v567
        %v1840 = vunpack.c.l.b16 %v568
        %v1841 = vunpack.c.h.b16 %v568
        %v1842 = vunpack.c.l.b16 %v569
        %v1843 = vunpack.c.h.b16 %v569
        %v1844 = vunpack.c.l.b16 %v570
        %v1845 = vunpack.c.h.b16 %v570
        %v1846 = vunpack.c.l.b16 %v571
        %v1847 = vunpack.c.h.b16 %v571
        %v1848 = vunpack.c.l.b16 %v572
        %v1849 = vunpack.c.h.b16 %v572
        %v1850 = vunpack.c.l.b16 %v573
        %v1851 = vunpack.c.h.b16 %v573
        %v1852 = vunpack.c.l.b16 %v574
        %v1853 = vunpack.c.h.b16 %v574
        %v1854 = vunpack.c.l.b16 %v575
        %v1855 = vunpack.c.h.b16 %v575
        %v1856 = vunpack.c.l.b16 %v576
        %v1857 = vunpack.c.h.b16 %v576
        %v1858 = vunpack.c.l.b16 %v577
        %v1859 = vunpack.c.h.b16 %v577
        %v1860 = vunpack.c.l.b16 %v578
        %v1861 = vunpack.c.h.b16 %v578
        %v1862 = vunpack.c.l.b16 %v579
        %v1863 = vunpack.c.h.b16 %v579
        %v1864 = vunpack.c.l.b16 %v580
        %v1865 = vunpack.c.h.b16 %v580
        %v1866 = vunpack.c.l.b16 %v581
        %v1867 = vunpack.c.h.b16 %v581
        %v1868 = vunpack.c.l.b16 %v582
        %v1869 = vunpack.c.h.b16 %v582
        %v1870 = vunpack.c.l.b16 %v583
        %v1871 = vunpack.c.h.b16 %v583
        %v1872 = vunpack.c.l.b16 %v584
        %v1873 = vunpack.c.h.b16 %v584
        %v1874 = vunpack.c.l.b16 %v585
        %v1875 = vunpack.c.h.b16 %v585
        %v1876 = vunpack.c.l.b16 %v586
        %v1877 = vunpack.c.h.b16 %v586
        %v1878 = vunpack.c.l.b16 %v587
        %v1879 = vunpack.c.h.b16 %v587
        %v1880 = vunpack.c.l.b16 %v588
        %v1881 = vunpack.c.h.b16 %v588
        %v1882 = vunpack.c.l.b16 %v589
        %v1883 = vunpack.c.h.b16 %v589
        %v1884 = vunpack.c.l.b16 %v590
        %v1885 = vunpack.c.h.b16 %v590
        %v1886 = vunpack.c.l.b16 %v591
        %v1887 = vunpack.c.h.b16 %v591
        %v1888 = vunpack.c.l.b16 %v592
        %v1889 = vunpack.c.h.b16 %v592
        %v1890 = vunpack.c.l.b16 %v593
        %v1891 = vunpack.c.h.b16 %v593
        %v1892 = vunpack.c.l.b16 %v594
        %v1893 = vunpack.c.h.b16 %v594
        %v1894 = vunpack.c.l.b16 %v595
        %v1895 = vunpack.c.h.b16 %v595
        %v1896 = vunpack.c.l.b16 %v596
        %v1897 = vunpack.c.h.b16 %v596
        %v1898 = vunpack.c.l.b16 %v597
        %v1899 = vunpack.c.h.b16 %v597
        %v1900 = vunpack.c.l.b16 %v598
        %v1901 = vunpack.c.h.b16 %v598
        %v1902 = vunpack.c.l.b16 %v599
        %v1903 = vunpack.c.h.b16 %v599
        %v1904 = vunpack.c.l.b16 %v600
        %v1905 = vunpack.c.h.b16 %v600
        %v1906 = vunpack.c.l.b16 %v601
        %v1907 = vunpack.c.h.b16 %v601
        %v1908 = vunpack.c.l.b16 %v602
        %v1909 = vunpack.c.h.b16 %v602
        %v1910 = vunpack.c.l.b16 %v603
        %v1911 = vunpack.c.h.b16 %v603
        %v1912 = vunpack.c.l.b16 %v604
        %v1913 = vunpack.c.h.b16 %v604
        %v1914 = vunpack.c.l.b16 %v605
        %v1915 = vunpack.c.h.b16 %v605
        %v1916 = vunpack.c.l.b16 %v606
        %v1917 = vunpack.c.h.b16 %v606
        %v1918 = vunpack.c.l.b16 %v607
        %v1919 = vunpack.c.h.b16 %v607
        %v1920 = vunpack.c.l.b16 %v608
        %v1921 = vunpack.c.h.b16 %v608
        %v1922 = vunpack.c.l.b16 %v609
        %v1923 = vunpack.c.h.b16 %v609
        %v1924 = vunpack.c.l.b16 %v610
        %v1925 = vunpack.c.h.b16 %v610
        %v1926 = vunpack.c.l.b16 %v611
        %v1927 = vunpack.c.h.b16 %v611
        %v1928 = vunpack.c.l.b16 %v612
        %v1929 = vunpack.c.h.b16 %v612
        %v1930 = vunpack.c.l.b16 %v613
        %v1931 = vunpack.c.h.b16 %v613
        %v1932 = vunpack.c.l.b16 %v614
        %v1933 = vunpack.c.h.b16 %v614
        %v1934 = vunpack.c.l.b16 %v615
        %v1935 = vunpack.c.h.b16 %v615
        %v1936 = vunpack.c.l.b16 %v616
        %v1937 = vunpack.c.h.b16 %v616
        %v1938 = vunpack.c.l.b16 %v617
        %v1939 = vunpack.c.h.b16 %v617
        %v1940 = vunpack.c.l.b16 %v618
        %v1941 = vunpack.c.h.b16 %v618
        %v1942 = vunpack.c.l.b16 %v619
        %v1943 = vunpack.c.h.b16 %v619
        %v1944 = vunpack.c.l.b16 %v620
        %v1945 = vunpack.c.h.b16 %v620
        %v1946 = vunpack.c.l.b16 %v621
        %v1947 = vunpack.c.h.b16 %v621
        %v1948 = vunpack.c.l.b16 %v622
        %v1949 = vunpack.c.h.b16 %v622
        %v1950 = vunpack.c.l.b16 %v623
        %v1951 = vunpack.c.h.b16 %v623
        %v1952 = vunpack.c.l.b16 %v624
        %v1953 = vunpack.c.h.b16 %v624
        %v1954 = vunpack.c.l.b16 %v625
        %v1955 = vunpack.c.h.b16 %v625
        %v1956 = vunpack.c.l.b16 %v626
        %v1957 = vunpack.c.h.b16 %v626
        %v1958 = vunpack.c.l.b16 %v627
        %v1959 = vunpack.c.h.b16 %v627
        %v1960 = vunpack.c.l.b16 %v628
        %v1961 = vunpack.c.h.b16 %v628
        %v1962 = vunpack.c.l.b16 %v629
        %v1963 = vunpack.c.h.b16 %v629
        %v1964 = vunpack.c.l.b16 %v630
        %v1965 = vunpack.c.h.b16 %v630
        %v1966 = vunpack.c.l.b16 %v631
        %v1967 = vunpack.c.h.b16 %v631
        %v1968 = vunpack.c.l.b16 %v632
        %v1969 = vunpack.c.h.b16 %v632
        %v1970 = vunpack.c.l.b16 %v633
        %v1971 = vunpack.c.h.b16 %v633
        %v1972 = vunpack.c.l.b16 %v634
        %v1973 = vunpack.c.h.b16 %v634
        %v1974 = vunpack.c.l.b16 %v635
        %v1975 = vunpack.c.h.b16 %v635
        %v1976 = vunpack.c.l.b16 %v636
        %v1977 = vunpack.c.h.b16 %v636
        %v1978 = vunpack.c.l.b16 %v637
        %v1979 = vunpack.c.h.b16 %v637
        %v1980 = vunpack.c.l.b16 %v638
        %v1981 = vunpack.c.h.b16 %v638
        %v1982 = vunpack.c.l.b16 %v639
        %v1983 = vunpack.c.h.b16 %v639
        %v1984 = vunpack.c.l.b16 %v640
        %v1985 = vunpack.c.h.b16 %v640
        %v1986 = vunpack.c.l.b16 %v641
        %v1987 = vunpack.c.h.b16 %v641
        %v1988 = vunpack.c.l.b16 %v642
        %v1989 = vunpack.c.h.b16 %v642
        %v1990 = vunpack.c.l.b16 %v643
        %v1991 = vunpack.c.h.b16 %v643
        %v1992 = vunpack.c.l.b16 %v644
        %v1993 = vunpack.c.h.b16 %v644
        %v1994 = vunpack.c.l.b16 %v645
        %v1995 = vunpack.c.h.b16 %v645
        %v1996 = vunpack.c.l.b16 %v646
        %v1997 = vunpack.c.h.b16 %v646
        %v1998 = vunpack.c.l.b16 %v647
        %v1999 = vunpack.c.h.b16 %v647
        %v2000 = vunpack.c.l.b16 %v648
        %v2001 = vunpack.c.h.b16 %v648
        %v2002 = vunpack.c.l.b16 %v649
        %v2003 = vunpack.c.h.b16 %v649
        %v2004 = vunpack.c.l.b16 %v650
        %v2005 = vunpack.c.h.b16 %v650
        %v2006 = vunpack.c.l.b16 %v651
        %v2007 = vunpack.c.h.b16 %v651
        %v2008 = vunpack.c.l.b16 %v652
        %v2009 = vunpack.c.h.b16 %v652
        %v2010 = vunpack.c.l.b16 %v653
        %v2011 = vunpack.c.h.b16 %v653
        %v2012 = vunpack.c.l.b16 %v654
        %v2013 = vunpack.c.h.b16 %v654
        %v2014 = vunpack.c.l.b16 %v655
        %v2015 = vunpack.c.h.b16 %v655
        %v2016 = vunpack.c.l.b16 %v656
        %v2017 = vunpack.c.h.b16 %v656
        %v2018 = vunpack.c.l.b16 %v657
        %v2019 = vunpack.c.h.b16 %v657
        %v2020 = vunpack.c.l.b16 %v658
        %v2021 = vunpack.c.h.b16 %v658
        %v2022 = vunpack.c.l.b16 %v659
        %v2023 = vunpack.c.h.b16 %v659
        %v2024 = vunpack.c.l.b16 %v660
        %v2025 = vunpack.c.h.b16 %v660
        %v2026 = vunpack.c.l.b16 %v661
        %v2027 = vunpack.c.h.b16 %v661
        %v2028 = vunpack.c.l.b16 %v662
        %v2029 = vunpack.c.h.b16 %v662
        %v2030 = vunpack.c.l.b16 %v663
        %v2031 = vunpack.c.h.b16 %v663
        %v2032 = vunpack.c.l.b16 %v664
        %v2033 = vunpack.c.h.b16 %v664
        %v2034 = vunpack.c.l.b16 %v665
        %v2035 = vunpack.c.h.b16 %v665
        %v2036 = vunpack.c.l.b16 %v666
        %v2037 = vunpack.c.h.b16 %v666
        %v2038 = vunpack.c.l.b16 %v667
        %v2039 = vunpack.c.h.b16 %v667
        %v2040 = vunpack.c.l.b16 %v668
        %v2041 = vunpack.c.h.b16 %v668
        %v2042 = vunpack.c.l.b16 %v669
        %v2043 = vunpack.c.h.b16 %v669
        %v2044 = vunpack.c.l.b16 %v670
        %v2045 = vunpack.c.h.b16 %v670
        %v2046 = vunpack.c.l.b16 %v671
        %v2047 = vunpack.c.h.b16 %v671
        %v2048 = vunpack.c.l.b16 %v672
        %v2049 = vunpack.c.h.b16 %v672
        %v2050 = vunpack.c.l.b16 %v673
        %v2051 = vunpack.c.h.b16 %v673
        %v2052 = vunpack.c.l.b16 %v674
        %v2053 = vunpack.c.h.b16 %v674
        %v2054 = vunpack.c.l.b16 %v675
        %v2055 = vunpack.c.h.b16 %v675
        %v2056 = vunpack.c.l.b16 %v676
        %v2057 = vunpack.c.h.b16 %v676
        %v2058 = vunpack.c.l.b16 %v677
        %v2059 = vunpack.c.h.b16 %v677
        %v2060 = vunpack.c.l.b16 %v678
        %v2061 = vunpack.c.h.b16 %v678
        %v2062 = vunpack.c.l.b16 %v679
        %v2063 = vunpack.c.h.b16 %v679
        %v2064 = vunpack.c.l.b16 %v680
        %v2065 = vunpack.c.h.b16 %v680
        %v2066 = vunpack.c.l.b16 %v681
        %v2067 = vunpack.c.h.b16 %v681
        %v2068 = vunpack.c.l.b16 %v682
        %v2069 = vunpack.c.h.b16 %v682
        %v2070 = vunpack.c.l.b16 %v683
        %v2071 = vunpack.c.h.b16 %v683
        %v2072 = vunpack.c.l.b16 %v684
        %v2073 = vunpack.c.h.b16 %v684
        %v2074 = vunpack.c.l.b16 %v685
        %v2075 = vunpack.c.h.b16 %v685
        %v2076 = vunpack.c.l.b16 %v686
        %v2077 = vunpack.c.h.b16 %v686
        %v2078 = vunpack.c.l.b16 %v687
        %v2079 = vunpack.c.h.b16 %v687
        %v2080 = vunpack.c.l.b16 %v688
        %v2081 = vunpack.c.h.b16 %v688
        %v2082 = vunpack.c.l.b16 %v689
        %v2083 = vunpack.c.h.b16 %v689
        %v2084 = vunpack.c.l.b16 %v690
        %v2085 = vunpack.c.h.b16 %v690
        %v2086 = vunpack.c.l.b16 %v691
        %v2087 = vunpack.c.h.b16 %v691
        %v2088 = vunpack.c.l.b16 %v692
        %v2089 = vunpack.c.h.b16 %v692
        %v2090 = vunpack.c.l.b16 %v693
        %v2091 = vunpack.c.h.b16 %v693
        %v2092 = vunpack.c.l.b16 %v694
        %v2093 = vunpack.c.h.b16 %v694
        %v2094 = vunpack.c.l.b16 %v695
        %v2095 = vunpack.c.h.b16 %v695
        %v2096 = vunpack.c.l.b16 %v696
        %v2097 = vunpack.c.h.b16 %v696
        %v2098 = vunpack.c.l.b16 %v697
        %v2099 = vunpack.c.h.b16 %v697
        %v2100 = vunpack.c.l.b16 %v698
        %v2101 = vunpack.c.h.b16 %v698
        %v2102 = vunpack.c.l.b16 %v699
        %v2103 = vunpack.c.h.b16 %v699
        %v2104 = vunpack.c.l.b16 %v700
        %v2105 = vunpack.c.h.b16 %v700
        %v2106 = vunpack.c.l.b16 %v701
        %v2107 = vunpack.c.h.b16 %v701
        %v2108 = vunpack.c.l.b16 %v702
        %v2109 = vunpack.c.h.b16 %v702
        %v2110 = vunpack.c.l.b16 %v703
        %v2111 = vunpack.c.h.b16 %v703
        %v2112 = vunpack.c.l.b16 %v704
        %v2113 = vunpack.c.h.b16 %v704
        %v2114 = vunpack.c.l.b16 %v705
        %v2115 = vunpack.c.h.b16 %v705
        %v2116 = vunpack.c.l.b16 %v706
        %v2117 = vunpack.c.h.b16 %v706
        %v2118 = vunpack.c.l.b16 %v707
        %v2119 = vunpack.c.h.b16 %v707
        %v2120 = vunpack.c.l.b16 %v708
        %v2121 = vunpack.c.h.b16 %v708
        %v2122 = vunpack.c.l.b16 %v709
        %v2123 = vunpack.c.h.b16 %v709
        %v2124 = vunpack.c.l.b16 %v710
        %v2125 = vunpack.c.h.b16 %v710
        %v2126 = vunpack.c.l.b16 %v711
        %v2127 = vunpack.c.h.b16 %v711
        %v2128 = vunpack.c.l.b16 %v712
        %v2129 = vunpack.c.h.b16 %v712
        %v2130 = vunpack.c.l.b16 %v713
        %v2131 = vunpack.c.h.b16 %v713
        %v2132 = vunpack.c.l.b16 %v714
        %v2133 = vunpack.c.h.b16 %v714
        %v2134 = vunpack.c.l.b16 %v715
        %v2135 = vunpack.c.h.b16 %v715
        %v2136 = vunpack.c.l.b16 %v716
        %v2137 = vunpack.c.h.b16 %v716
        %v2138 = vunpack.c.l.b16 %v717
        %v2139 = vunpack.c.h.b16 %v717
        %v2140 = vunpack.c.l.b16 %v718
        %v2141 = vunpack.c.h.b16 %v718
        %v2142 = vunpack.c.l.b16 %v719
        %v2143 = vunpack.c.h.b16 %v719
        %v2144 = vunpack.c.l.b16 %v720
        %v2145 = vunpack.c.h.b16 %v720
        %v2146 = vunpack.c.l.b16 %v721
        %v2147 = vunpack.c.h.b16 %v721
        %v2148 = vunpack.c.l.b16 %v722
        %v2149 = vunpack.c.h.b16 %v722
        %v2150 = vunpack.c.l.b16 %v723
        %v2151 = vunpack.c.h.b16 %v723
        %v2152 = vunpack.c.l.b16 %v724
        %v2153 = vunpack.c.h.b16 %v724
        %v2154 = vunpack.c.l.b16 %v725
        %v2155 = vunpack.c.h.b16 %v725
        %v2156 = vunpack.c.l.b16 %v726
        %v2157 = vunpack.c.h.b16 %v726
        %v2158 = vunpack.c.l.b16 %v727
        %v2159 = vunpack.c.h.b16 %v727
        %v2160 = vunpack.c.l.b16 %v728
        %v2161 = vunpack.c.h.b16 %v728
        %v2162 = vunpack.c.l.b16 %v729
        %v2163 = vunpack.c.h.b16 %v729
        %v2164 = vunpack.c.l.b16 %v730
        %v2165 = vunpack.c.h.b16 %v730
        %v2166 = vunpack.c.l.b16 %v731
        %v2167 = vunpack.c.h.b16 %v731
        %v2168 = vunpack.c.l.b16 %v732
        %v2169 = vunpack.c.h.b16 %v732
        %v2170 = vunpack.c.l.b16 %v733
        %v2171 = vunpack.c.h.b16 %v733
        %v2172 = vunpack.c.l.b16 %v734
        %v2173 = vunpack.c.h.b16 %v734
        %v2174 = vunpack.c.l.b16 %v735
        %v2175 = vunpack.c.h.b16 %v735
        %v2176 = vunpack.c.l.b16 %v736
        %v2177 = vunpack.c.h.b16 %v736
        %v2178 = vunpack.c.l.b16 %v737
        %v2179 = vunpack.c.h.b16 %v737
        %v2180 = vunpack.c.l.b16 %v738
        %v2181 = vunpack.c.h.b16 %v738
        %v2182 = vunpack.c.l.b16 %v739
        %v2183 = vunpack.c.h.b16 %v739
        %v2184 = vunpack.c.l.b16 %v740
        %v2185 = vunpack.c.h.b16 %v740
        %v2186 = vunpack.c.l.b16 %v741
        %v2187 = vunpack.c.h.b16 %v741
        %v2188 = vunpack.c.l.b16 %v742
        %v2189 = vunpack.c.h.b16 %v742
        %v2190 = vunpack.c.l.b16 %v743
        %v2191 = vunpack.c.h.b16 %v743
        %v2192 = vunpack.c.l.b16 %v744
        %v2193 = vunpack.c.h.b16 %v744
        %v2194 = vunpack.c.l.b16 %v745
        %v2195 = vunpack.c.h.b16 %v745
        %v2196 = vunpack.c.l.b16 %v746
        %v2197 = vunpack.c.h.b16 %v746
        %v2198 = vunpack.c.l.b16 %v747
        %v2199 = vunpack.c.h.b16 %v747
        %v2200 = vunpack.c.l.b16 %v748
        %v2201 = vunpack.c.h.b16 %v748
        %v2202 = vunpack.c.l.b16 %v749
        %v2203 = vunpack.c.h.b16 %v749
        %v2204 = vunpack.c.l.b16 %v750
        %v2205 = vunpack.c.h.b16 %v750
        %v2206 = vunpack.c.l.b16 %v751
        %v2207 = vunpack.c.h.b16 %v751
        %v2208 = vunpack.c.l.b16 %v752
        %v2209 = vunpack.c.h.b16 %v752
        %v2210 = vunpack.c.l.b16 %v753
        %v2211 = vunpack.c.h.b16 %v753
        %v2212 = vunpack.c.l.b16 %v754
        %v2213 = vunpack.c.h.b16 %v754
        %v2214 = vunpack.c.l.b16 %v755
        %v2215 = vunpack.c.h.b16 %v755
        %v2216 = vunpack.c.l.b16 %v756
        %v2217 = vunpack.c.h.b16 %v756
        %v2218 = vunpack.c.l.b16 %v757
        %v2219 = vunpack.c.h.b16 %v757
        %v2220 = vunpack.c.l.b16 %v758
        %v2221 = vunpack.c.h.b16 %v758
        %v2222 = vunpack.c.l.b16 %v759
        %v2223 = vunpack.c.h.b16 %v759
        %v2224 = vunpack.c.l.b16 %v760
        %v2225 = vunpack.c.h.b16 %v760
        %v2226 = vunpack.c.l.b16 %v761
        %v2227 = vunpack.c.h.b16 %v761
        %v2228 = vunpack.c.l.b16 %v762
        %v2229 = vunpack.c.h.b16 %v762
        %v2230 = vunpack.c.l.b16 %v763
        %v2231 = vunpack.c.h.b16 %v763
        %v2232 = vunpack.c.l.b16 %v764
        %v2233 = vunpack.c.h.b16 %v764
        %v2234 = vunpack.c.l.b16 %v765
        %v2235 = vunpack.c.h.b16 %v765
        %v2236 = vunpack.c.l.b16 %v766
        %v2237 = vunpack.c.h.b16 %v766
        %v2238 = vunpack.c.l.b16 %v767
        %v2239 = vunpack.c.h.b16 %v767
        %v2240 = vunpack.c.l.b16 %v768
        %v2241 = vunpack.c.h.b16 %v768
        %v2242 = vunpack.c.l.b16 %v769
        %v2243 = vunpack.c.h.b16 %v769
        %v2244 = vunpack.c.l.b16 %v770
        %v2245 = vunpack.c.h.b16 %v770
        %v2246 = vunpack.c.l.b16 %v771
        %v2247 = vunpack.c.h.b16 %v771
        %v2248 = vunpack.c.l.b16 %v772
        %v2249 = vunpack.c.h.b16 %v772
        %v2250 = vunpack.c.l.b16 %v773
        %v2251 = vunpack.c.h.b16 %v773
        %v2252 = vunpack.c.l.b16 %v774
        %v2253 = vunpack.c.h.b16 %v774
        %v2254 = vunpack.c.l.b16 %v775
        %v2255 = vunpack.c.h.b16 %v775
        %v2256 = vunpack.c.l.b16 %v776
        %v2257 = vunpack.c.h.b16 %v776
        %v2258 = vunpack.c.l.b16 %v777
        %v2259 = vunpack.c.h.b16 %v777
        %v2260 = vunpack.c.l.b16 %v778
        %v2261 = vunpack.c.h.b16 %v778
        %v2262 = vunpack.c.l.b16 %v779
        %v2263 = vunpack.c.h.b16 %v779
        %v2264 = vunpack.c.l.b16 %v780
        %v2265 = vunpack.c.h.b16 %v780
        %v2266 = vunpack.c.l.b16 %v781
        %v2267 = vunpack.c.h.b16 %v781
        %v2268 = vunpack.c.l.b16 %v782
        %v2269 = vunpack.c.h.b16 %v782
        %v2270 = vunpack.c.l.b16 %v783
        %v2271 = vunpack.c.h.b16 %v783
        %v2272 = vunpack.c.l.b16 %v784
        %v2273 = vunpack.c.h.b16 %v784
        %v2274 = vunpack.c.l.b16 %v785
        %v2275 = vunpack.c.h.b16 %v785
        %v2276 = vunpack.c.l.b16 %v786
        %v2277 = vunpack.c.h.b16 %v786
        %v2278 = vunpack.c.l.b16 %v787
        %v2279 = vunpack.c.h.b16 %v787
        %v2280 = vunpack.c.l.b16 %v788
        %v2281 = vunpack.c.h.b16 %v788
        %v2282 = vunpack.c.l.b16 %v789
        %v2283 = vunpack.c.h.b16 %v789
        %v2284 = vunpack.c.l.b16 %v790
        %v2285 = vunpack.c.h.b16 %v790
        %v2286 = vunpack.c.l.b16 %v791
        %v2287 = vunpack.c.h.b16 %v791
        %v2288 = vunpack.c.l.b16 %v792
        %v2289 = vunpack.c.h.b16 %v792
        %v2290 = vunpack.c.l.b16 %v793
        %v2291 = vunpack.c.h.b16 %v793
        %v2292 = vunpack.c.l.b16 %v794
        %v2293 = vunpack.c.h.b16 %v794
        %v2294 = vunpack.c.l.b16 %v795
        %v2295 = vunpack.c.h.b16 %v795
        %v2296 = vunpack.c.l.b16 %v796
        %v2297 = vunpack.c.h.b16 %v796
        %v2298 = vunpack.c.l.b16 %v797
        %v2299 = vunpack.c.h.b16 %v797
        %v2300 = vunpack.c.l.b16 %v798
        %v2301 = vunpack.c.h.b16 %v798
        %v2302 = vunpack.c.l.b16 %v799
        %v2303 = vunpack.c.h.b16 %v799
        %v2304 = vunpack.c.l.b16 %v800
        %v2305 = vunpack.c.h.b16 %v800
        %v2306 = vunpack.c.l.b16 %v801
        %v2307 = vunpack.c.h.b16 %v801
        %v2308 = vunpack.c.l.b16 %v802
        %v2309 = vunpack.c.h.b16 %v802
        %v2310 = vunpack.c.l.b16 %v803
        %v2311 = vunpack.c.h.b16 %v803
        %v2312 = vunpack.c.l.b16 %v804
        %v2313 = vunpack.c.h.b16 %v804
        %v2314 = vunpack.c.l.b16 %v805
        %v2315 = vunpack.c.h.b16 %v805
        %v2316 = vunpack.c.l.b16 %v806
        %v2317 = vunpack.c.h.b16 %v806
        %v2318 = vunpack.c.l.b16 %v807
        %v2319 = vunpack.c.h.b16 %v807
        %v2320 = vunpack.c.l.b16 %v808
        %v2321 = vunpack.c.h.b16 %v808
        %v2322 = vunpack.c.l.b16 %v809
        %v2323 = vunpack.c.h.b16 %v809
        %v2324 = vunpack.c.l.b16 %v810
        %v2325 = vunpack.c.h.b16 %v810
        %v2326 = vunpack.c.l.b16 %v811
        %v2327 = vunpack.c.h.b16 %v811
        %v2328 = vunpack.c.l.b16 %v812
        %v2329 = vunpack.c.h.b16 %v812
        %v2330 = vunpack.c.l.b16 %v813
        %v2331 = vunpack.c.h.b16 %v813
        %v2332 = vunpack.c.l.b16 %v814
        %v2333 = vunpack.c.h.b16 %v814
        %v2334 = vunpack.c.l.b16 %v815
        %v2335 = vunpack.c.h.b16 %v815
        %v2336 = vunpack.c.l.b16 %v816
        %v2337 = vunpack.c.h.b16 %v816
        %v2338 = vunpack.c.l.b16 %v817
        %v2339 = vunpack.c.h.b16 %v817
        %v2340 = vunpack.c.l.b16 %v818
        %v2341 = vunpack.c.h.b16 %v818
        %v2342 = vunpack.c.l.b16 %v819
        %v2343 = vunpack.c.h.b16 %v819
        %v2344 = vunpack.c.l.b16 %v820
        %v2345 = vunpack.c.h.b16 %v820
        %v2346 = vunpack.c.l.b16 %v821
        %v2347 = vunpack.c.h.b16 %v821
        %v2348 = vunpack.c.l.b16 %v822
        %v2349 = vunpack.c.h.b16 %v822
        %v2350 = vunpack.c.l.b16 %v823
        %v2351 = vunpack.c.h.b16 %v823
        %v2352 = vunpack.c.l.b16 %v824
        %v2353 = vunpack.c.h.b16 %v824
        %v2354 = vunpack.c.l.b16 %v825
        %v2355 = vunpack.c.h.b16 %v825
        %v2356 = vunpack.c.l.b16 %v826
        %v2357 = vunpack.c.h.b16 %v826
        %v2358 = vunpack.c.l.b16 %v827
        %v2359 = vunpack.c.h.b16 %v827
        %v2360 = vunpack.c.l.b16 %v828
        %v2361 = vunpack.c.h.b16 %v828
        %v2362 = vunpack.c.l.b16 %v829
        %v2363 = vunpack.c.h.b16 %v829
        %v2364 = vunpack.c.l.b16 %v830
        %v2365 = vunpack.c.h.b16 %v830
        %v2366 = vunpack.c.l.b16 %v831
        %v2367 = vunpack.c.h.b16 %v831
        %v2368 = vunpack.c.l.b16 %v832
        %v2369 = vunpack.c.h.b16 %v832
        %v2370 = vunpack.c.l.b16 %v833
        %v2371 = vunpack.c.h.b16 %v833
        %v2372 = vunpack.c.l.b16 %v834
        %v2373 = vunpack.c.h.b16 %v834
        %v2374 = vunpack.c.l.b16 %v835
        %v2375 = vunpack.c.h.b16 %v835
        %v2376 = vunpack.c.l.b16 %v836
        %v2377 = vunpack.c.h.b16 %v836
        %v2378 = vunpack.c.l.b16 %v837
        %v2379 = vunpack.c.h.b16 %v837
        %v2380 = vunpack.c.l.b16 %v838
        %v2381 = vunpack.c.h.b16 %v838
        %v2382 = vunpack.c.l.b16 %v839
        %v2383 = vunpack.c.h.b16 %v839
        %v2384 = vunpack.c.l.b16 %v840
        %v2385 = vunpack.c.h.b16 %v840
        %v2386 = vunpack.c.l.b16 %v841
        %v2387 = vunpack.c.h.b16 %v841
        %v2388 = vunpack.c.l.b16 %v842
        %v2389 = vunpack.c.h.b16 %v842
        %v2390 = vunpack.c.l.b16 %v843
        %v2391 = vunpack.c.h.b16 %v843
        %v2392 = vunpack.c.l.b16 %v844
        %v2393 = vunpack.c.h.b16 %v844
        %v2394 = vunpack.c.l.b16 %v845
        %v2395 = vunpack.c.h.b16 %v845
        %v2396 = vunpack.c.l.b16 %v846
        %v2397 = vunpack.c.h.b16 %v846
        %v2398 = vunpack.c.l.b16 %v847
        %v2399 = vunpack.c.h.b16 %v847
        %v2400 = vunpack.c.l.b16 %v848
        %v2401 = vunpack.c.h.b16 %v848
        %v2402 = vunpack.c.l.b16 %v849
        %v2403 = vunpack.c.h.b16 %v849
        %v2404 = vunpack.c.l.b16 %v850
        %v2405 = vunpack.c.h.b16 %v850
        %v2406 = vunpack.c.l.b16 %v851
        %v2407 = vunpack.c.h.b16 %v851
        %v2408 = vunpack.c.l.b16 %v852
        %v2409 = vunpack.c.h.b16 %v852
        %v2410 = vunpack.c.l.b16 %v853
        %v2411 = vunpack.c.h.b16 %v853
        %v2412 = vunpack.c.l.b16 %v854
        %v2413 = vunpack.c.h.b16 %v854
        %v2414 = vunpack.c.l.b16 %v855
        %v2415 = vunpack.c.h.b16 %v855
        %v2416 = vunpack.c.l.b16 %v856
        %v2417 = vunpack.c.h.b16 %v856
        %v2418 = vunpack.c.l.b16 %v857
        %v2419 = vunpack.c.h.b16 %v857
        %v2420 = vunpack.c.l.b16 %v858
        %v2421 = vunpack.c.h.b16 %v858
        %v2422 = vunpack.c.l.b16 %v859
        %v2423 = vunpack.c.h.b16 %v859
        %v2424 = vunpack.c.l.b16 %v860
        %v2425 = vunpack.c.h.b16 %v860
        %v2426 = vunpack.c.l.b16 %v861
        %v2427 = vunpack.c.h.b16 %v861
        %v2428 = vunpack.c.l.b16 %v862
        %v2429 = vunpack.c.h.b16 %v862
        %v2430 = vunpack.c.l.b16 %v863
        %v2431 = vunpack.c.h.b16 %v863
        %v2432 = vunpack.c.l.b16 %v864
        %v2433 = vunpack.c.h.b16 %v864
        %v2434 = vunpack.c.l.b16 %v865
        %v2435 = vunpack.c.h.b16 %v865
        %v2436 = vunpack.c.l.b16 %v866
        %v2437 = vunpack.c.h.b16 %v866
        %v2438 = vunpack.c.l.b16 %v867
        %v2439 = vunpack.c.h.b16 %v867
        %v2440 = vunpack.c.l.b16 %v868
        %v2441 = vunpack.c.h.b16 %v868
        %v2442 = vunpack.c.l.b16 %v869
        %v2443 = vunpack.c.h.b16 %v869
        %v2444 = vunpack.c.l.b16 %v870
        %v2445 = vunpack.c.h.b16 %v870
        %v2446 = vunpack.c.l.b16 %v871
        %v2447 = vunpack.c.h.b16 %v871
        %v2448 = vunpack.c.l.b16 %v872
        %v2449 = vunpack.c.h.b16 %v872
        %v2450 = vunpack.c.l.b16 %v873
        %v2451 = vunpack.c.h.b16 %v873
        %v2452 = vunpack.c.l.b16 %v874
        %v2453 = vunpack.c.h.b16 %v874
        %v2454 = vunpack.c.l.b16 %v875
        %v2455 = vunpack.c.h.b16 %v875
        %v2456 = vunpack.c.l.b16 %v876
        %v2457 = vunpack.c.h.b16 %v876
        %v2458 = vunpack.c.l.b16 %v877
        %v2459 = vunpack.c.h.b16 %v877
        %v2460 = vunpack.c.l.b16 %v878
        %v2461 = vunpack.c.h.b16 %v878
        %v2462 = vunpack.c.l.b16 %v879
        %v2463 = vunpack.c.h.b16 %v879
        %v2464 = vunpack.c.l.b16 %v880
        %v2465 = vunpack.c.h.b16 %v880
        %v2466 = vunpack.c.l.b16 %v881
        %v2467 = vunpack.c.h.b16 %v881
        %v2468 = vunpack.c.l.b16 %v882
        %v2469 = vunpack.c.h.b16 %v882
        %v2470 = vunpack.c.l.b16 %v883
        %v2471 = vunpack.c.h.b16 %v883
        %v2472 = vunpack.c.l.b16 %v884
        %v2473 = vunpack.c.h.b16 %v884
        %v2474 = vunpack.c.l.b16 %v885
        %v2475 = vunpack.c.h.b16 %v885
        %v2476 = vunpack.c.l.b16 %v886
        %v2477 = vunpack.c.h.b16 %v886
        %v2478 = vunpack.c.l.b16 %v887
        %v2479 = vunpack.c.h.b16 %v887
        %v2480 = vunpack.c.l.b16 %v888
        %v2481 = vunpack.c.h.b16 %v888
        %v2482 = vunpack.c.l.b16 %v889
        %v2483 = vunpack.c.h.b16 %v889
        %v2484 = vunpack.c.l.b16 %v890
        %v2485 = vunpack.c.h.b16 %v890
        %v2486 = vunpack.c.l.b16 %v891
        %v2487 = vunpack.c.h.b16 %v891
        %v2488 = vunpack.c.l.b16 %v892
        %v2489 = vunpack.c.h.b16 %v892
        %v2490 = vunpack.c.l.b16 %v893
        %v2491 = vunpack.c.h.b16 %v893
        %v2492 = vunpack.c.l.b16 %v894
        %v2493 = vunpack.c.h.b16 %v894
        %v2494 = vunpack.c.l.b16 %v895
        %v2495 = vunpack.c.h.b16 %v895
        %v2496 = vunpack.c.l.b16 %v896
        %v2497 = vunpack.c.h.b16 %v896
        %v2498 = vunpack.c.l.b16 %v897
        %v2499 = vunpack.c.h.b16 %v897
        %v2500 = vunpack.c.l.b16 %v898
        %v2501 = vunpack.c.h.b16 %v898
        %v2502 = vunpack.c.l.b16 %v899
        %v2503 = vunpack.c.h.b16 %v899
        %v2504 = vunpack.c.l.b16 %v900
        %v2505 = vunpack.c.h.b16 %v900
        %v2506 = vunpack.c.l.b16 %v901
        %v2507 = vunpack.c.h.b16 %v901
        %v2508 = vunpack.c.l.b16 %v902
        %v2509 = vunpack.c.h.b16 %v902
        %v2510 = vunpack.c.l.b16 %v903
        %v2511 = vunpack.c.h.b16 %v903
        %v2512 = vunpack.c.l.b16 %v904
        %v2513 = vunpack.c.h.b16 %v904
        %v2514 = vunpack.c.l.b16 %v905
        %v2515 = vunpack.c.h.b16 %v905
        %v2516 = vunpack.c.l.b16 %v906
        %v2517 = vunpack.c.h.b16 %v906
        %v2518 = vunpack.c.l.b16 %v907
        %v2519 = vunpack.c.h.b16 %v907
        %v2520 = vunpack.c.l.b16 %v908
        %v2521 = vunpack.c.h.b16 %v908
        %v2522 = vunpack.c.l.b16 %v909
        %v2523 = vunpack.c.h.b16 %v909
        %v2524 = vunpack.c.l.b16 %v910
        %v2525 = vunpack.c.h.b16 %v910
        %v2526 = vunpack.c.l.b16 %v911
        %v2527 = vunpack.c.h.b16 %v911
        %v2528 = vunpack.c.l.b16 %v912
        %v2529 = vunpack.c.h.b16 %v912
        %v2530 = vunpack.c.l.b16 %v913
        %v2531 = vunpack.c.h.b16 %v913
        %v2532 = vunpack.c.l.b16 %v914
        %v2533 = vunpack.c.h.b16 %v914
        %v2534 = vunpack.c.l.b16 %v915
        %v2535 = vunpack.c.h.b16 %v915
        %v2536 = vunpack.c.l.b16 %v916
        %v2537 = vunpack.c.h.b16 %v916
        %v2538 = vunpack.c.l.b16 %v917
        %v2539 = vunpack.c.h.b16 %v917
        %v2540 = vunpack.c.l.b16 %v918
        %v2541 = vunpack.c.h.b16 %v918
        %v2542 = vunpack.c.l.b16 %v919
        %v2543 = vunpack.c.h.b16 %v919
        %v2544 = vunpack.c.l.b16 %v920
        %v2545 = vunpack.c.h.b16 %v920
        %v2546 = vunpack.c.l.b16 %v921
        %v2547 = vunpack.c.h.b16 %v921
        %v2548 = vunpack.c.l.b16 %v922
        %v2549 = vunpack.c.h.b16 %v922
        %v2550 = vunpack.c.l.b16 %v923
        %v2551 = vunpack.c.h.b16 %v923
        %v2552 = vunpack.c.l.b16 %v924
        %v2553 = vunpack.c.h.b16 %v924
        %v2554 = vunpack.c.l.b16 %v925
        %v2555 = vunpack.c.h.b16 %v925
        %v2556 = vunpack.c.l.b16 %v926
        %v2557 = vunpack.c.h.b16 %v926
        %v2558 = vunpack.c.l.b16 %v927
        %v2559 = vunpack.c.h.b16 %v927
        %v2560 = vunpack.c.l.b16 %v928
        %v2561 = vunpack.c.h.b16 %v928
        %v2562 = vunpack.c.l.b16 %v929
        %v2563 = vunpack.c.h.b16 %v929
        %v2564 = vunpack.c.l.b16 %v930
        %v2565 = vunpack.c.h.b16 %v930
        %v2566 = vunpack.c.l.b16 %v931
        %v2567 = vunpack.c.h.b16 %v931
        %v2568 = vunpack.c.l.b16 %v932
        %v2569 = vunpack.c.h.b16 %v932
        %v2570 = vunpack.c.l.b16 %v933
        %v2571 = vunpack.c.h.b16 %v933
        %v2572 = vunpack.c.l.b16 %v934
        %v2573 = vunpack.c.h.b16 %v934
        %v2574 = vunpack.c.l.b16 %v935
        %v2575 = vunpack.c.h.b16 %v935
        %v2576 = vunpack.c.l.b16 %v936
        %v2577 = vunpack.c.h.b16 %v936
        %v2578 = vunpack.c.l.b16 %v937
        %v2579 = vunpack.c.h.b16 %v937
        %v2580 = vunpack.c.l.b16 %v938
        %v2581 = vunpack.c.h.b16 %v938
        %v2582 = vunpack.c.l.b16 %v939
        %v2583 = vunpack.c.h.b16 %v939
        %v2584 = vunpack.c.l.b16 %v940
        %v2585 = vunpack.c.h.b16 %v940
        %v2586 = vunpack.c.l.b16 %v941
        %v2587 = vunpack.c.h.b16 %v941
        %v2588 = vunpack.c.l.b16 %v942
        %v2589 = vunpack.c.h.b16 %v942
        %v2590 = vunpack.c.l.b16 %v943
        %v2591 = vunpack.c.h.b16 %v943
        %v2592 = vunpack.c.l.b16 %v944
        %v2593 = vunpack.c.h.b16 %v944
        %v2594 = vunpack.c.l.b16 %v945
        %v2595 = vunpack.c.h.b16 %v945
        %v2596 = vunpack.c.l.b16 %v946
        %v2597 = vunpack.c.h.b16 %v946
        %v2598 = vunpack.c.l.b16 %v947
        %v2599 = vunpack.c.h.b16 %v947
        %v2600 = vunpack.c.l.b16 %v948
        %v2601 = vunpack.c.h.b16 %v948
        %v2602 = vunpack.c.l.b16 %v949
        %v2603 = vunpack.c.h.b16 %v949
        %v2604 = vunpack.c.l.b16 %v950
        %v2605 = vunpack.c.h.b16 %v950
        %v2606 = vunpack.c.l.b16 %v951
        %v2607 = vunpack.c.h.b16 %v951
        %v2608 = vunpack.c.l.b16 %v952
        %v2609 = vunpack.c.h.b16 %v952
        %v2610 = vunpack.c.l.b16 %v953
        %v2611 = vunpack.c.h.b16 %v953
        %v2612 = vunpack.c.l.b16 %v954
        %v2613 = vunpack.c.h.b16 %v954
        %v2614 = vunpack.c.l.b16 %v955
        %v2615 = vunpack.c.h.b16 %v955
        %v2616 = vunpack.c.l.b16 %v956
        %v2617 = vunpack.c.h.b16 %v956
        %v2618 = vunpack.c.l.b16 %v957
        %v2619 = vunpack.c.h.b16 %v957
        %v2620 = vunpack.c.l.b16 %v958
        %v2621 = vunpack.c.h.b16 %v958
        %v2622 = vunpack.c.l.b16 %v959
        %v2623 = vunpack.c.h.b16 %v959
        %v2624 = vunpack.c.l.b16 %v960
        %v2625 = vunpack.c.h.b16 %v960
        %v2626 = vunpack.c.l.b16 %v961
        %v2627 = vunpack.c.h.b16 %v961
        %v2628 = vunpack.c.l.b16 %v962
        %v2629 = vunpack.c.h.b16 %v962
        %v2630 = vunpack.c.l.b16 %v963
        %v2631 = vunpack.c.h.b16 %v963
        %v2632 = vunpack.c.l.b16 %v964
        %v2633 = vunpack.c.h.b16 %v964
        %v2634 = vunpack.c.l.b16 %v965
        %v2635 = vunpack.c.h.b16 %v965
        %v2636 = vunpack.c.l.b16 %v966
        %v2637 = vunpack.c.h.b16 %v966
        %v2638 = vunpack.c.l.b16 %v967
        %v2639 = vunpack.c.h.b16 %v967
        %v2640 = vunpack.c.l.b16 %v968
        %v2641 = vunpack.c.h.b16 %v968
        %v2642 = vunpack.c.l.b16 %v969
        %v2643 = vunpack.c.h.b16 %v969
        %v2644 = vpack.c.b16 %v1624, %v1620
        %v2645 = vpack.c.b16 %v1625, %v1621
        %v2646 = vpack.c.b16 %v1626, %v1622
        %v2647 = vpack.c.b16 %v1627, %v1623
        %v2648 = vpack.c.b16 %v1632, %v1628
        %v2649 = vpack.c.b16 %v1633, %v1629
        %v2650 = vpack.c.b16 %v1634, %v1630
        %v2651 = vpack.c.b16 %v1635, %v1631
        %v2652 = vpack.c.b16 %v1640, %v1636
        %v2653 = vpack.c.b16 %v1641, %v1637
        %v2654 = vpack.c.b16 %v1642, %v1638
        %v2655 = vpack.c.b16 %v1643, %v1639
        %v2656 = vpack.c.b16 %v1648, %v1644
        %v2657 = vpack.c.b16 %v1649, %v1645
        %v2658 = vpack.c.b16 %v1650, %v1646
        %v2659 = vpack.c.b16 %v1651, %v1647
        %v2660 = vpack.c.b16 %v1656, %v1652
        %v2661 = vpack.c.b16 %v1657, %v1653
        %v2662 = vpack.c.b16 %v1658, %v1654
        %v2663 = vpack.c.b16 %v1659, %v1655
        %v2664 = vpack.c.b16 %v1664, %v1660
        %v2665 = vpack.c.b16 %v1665, %v1661
        %v2666 = vpack.c.b16 %v1666, %v1662
        %v2667 = vpack.c.b16 %v1667, %v1663
        %v2668 = vpack.c.b16 %v1672, %v1668
        %v2669 = vpack.c.b16 %v1673, %v1669
        %v2670 = vpack.c.b16 %v1674, %v1670
        %v2671 = vpack.c.b16 %v1675, %v1671
        %v2672 = vpack.c.b16 %v1680, %v1676
        %v2673 = vpack.c.b16 %v1681, %v1677
        %v2674 = vpack.c.b16 %v1682, %v1678
        %v2675 = vpack.c.b16 %v1683, %v1679
        %v2676 = vpack.c.b16 %v1688, %v1684
        %v2677 = vpack.c.b16 %v1689, %v1685
        %v2678 = vpack.c.b16 %v1690, %v1686
        %v2679 = vpack.c.b16 %v1691, %v1687
        %v2680 = vpack.c.b16 %v1696, %v1692
        %v2681 = vpack.c.b16 %v1697, %v1693
        %v2682 = vpack.c.b16 %v1698, %v1694
        %v2683 = vpack.c.b16 %v1699, %v1695
        %v2684 = vpack.c.b16 %v1704, %v1700
        %v2685 = vpack.c.b16 %v1705, %v1701
        %v2686 = vpack.c.b16 %v1706, %v1702
        %v2687 = vpack.c.b16 %v1707, %v1703
        %v2688 = vpack.c.b16 %v1712, %v1708
        %v2689 = vpack.c.b16 %v1713, %v1709
        %v2690 = vpack.c.b16 %v1714, %v1710
        %v2691 = vpack.c.b16 %v1715, %v1711
        %v2692 = vpack.c.b16 %v1720, %v1716
        %v2693 = vpack.c.b16 %v1721, %v1717
        %v2694 = vpack.c.b16 %v1722, %v1718
        %v2695 = vpack.c.b16 %v1723, %v1719
        %v2696 = vpack.c.b16 %v1728, %v1724
        %v2697 = vpack.c.b16 %v1729, %v1725
        %v2698 = vpack.c.b16 %v1730, %v1726
        %v2699 = vpack.c.b16 %v1731, %v1727
        %v2700 = vpack.c.b16 %v1736, %v1732
        %v2701 = vpack.c.b16 %v1737, %v1733
        %v2702 = vpack.c.b16 %v1738, %v1734
        %v2703 = vpack.c.b16 %v1739, %v1735
        %v2704 = vpack.c.b16 %v1744, %v1740
        %v2705 = vpack.c.b16 %v1745, %v1741
        %v2706 = vpack.c.b16 %v1746, %v1742
        %v2707 = vpack.c.b16 %v1747, %v1743
        %v2708 = vpack.c.b16 %v1752, %v1748
        %v2709 = vpack.c.b16 %v1753, %v1749
        %v2710 = vpack.c.b16 %v1754, %v1750
        %v2711 = vpack.c.b16 %v1755, %v1751
        %v2712 = vpack.c.b16 %v1760, %v1756
        %v2713 = vpack.c.b16 %v1761, %v1757
        %v2714 = vpack.c.b16 %v1762, %v1758
        %v2715 = vpack.c.b16 %v1763, %v1759
        %v2716 = vpack.c.b16 %v1768, %v1764
        %v2717 = vpack.c.b16 %v1769, %v1765
        %v2718 = vpack.c.b16 %v1770, %v1766
        %v2719 = vpack.c.b16 %v1771, %v1767
        %v2720 = vpack.c.b16 %v1776, %v1772
        %v2721 = vpack.c.b16 %v1777, %v1773
        %v2722 = vpack.c.b16 %v1778, %v1774
        %v2723 = vpack.c.b16 %v1779, %v1775
        %v2724 = vpack.c.b16 %v1784, %v1780
        %v2725 = vpack.c.b16 %v1785, %v1781
        %v2726 = vpack.c.b16 %v1786, %v1782
        %v2727 = vpack.c.b16 %v1787, %v1783
        %v2728 = vpack.c.b16 %v1792, %v1788
        %v2729 = vpack.c.b16 %v1793, %v1789
        %v2730 = vpack.c.b16 %v1794, %v1790
        %v2731 = vpack.c.b16 %v1795, %v1791
        %v2732 = vpack.c.b16 %v1800, %v1796
        %v2733 = vpack.c.b16 %v1801, %v1797
        %v2734 = vpack.c.b16 %v1802, %v1798
        %v2735 = vpack.c.b16 %v1803, %v1799
        %v2736 = vpack.c.b16 %v1808, %v1804
        %v2737 = vpack.c.b16 %v1809, %v1805
        %v2738 = vpack.c.b16 %v1810, %v1806
        %v2739 = vpack.c.b16 %v1811, %v1807
        %v2740 = vpack.c.b16 %v1816, %v1812
        %v2741 = vpack.c.b16 %v1817, %v1813
        %v2742 = vpack.c.b16 %v1818, %v1814
        %v2743 = vpack.c.b16 %v1819, %v1815
        %v2744 = vpack.c.b16 %v1824, %v1820
        %v2745 = vpack.c.b16 %v1825, %v1821
        %v2746 = vpack.c.b16 %v1826, %v1822
        %v2747 = vpack.c.b16 %v1827, %v1823
        %v2748 = vpack.c.b16 %v1832, %v1828
        %v2749 = vpack.c.b16 %v1833, %v1829
        %v2750 = vpack.c.b16 %v1834, %v1830
        %v2751 = vpack.c.b16 %v1835, %v1831
        %v2752 = vpack.c.b16 %v1840, %v1836
        %v2753 = vpack.c.b16 %v1841, %v1837
        %v2754 = vpack.c.b16 %v1842, %v1838
        %v2755 = vpack.c.b16 %v1843, %v1839
        %v2756 = vpack.c.b16 %v1848, %v1844
        %v2757 = vpack.c.b16 %v1849, %v1845
        %v2758 = vpack.c.b16 %v1850, %v1846
        %v2759 = vpack.c.b16 %v1851, %v1847
        %v2760 = vpack.c.b16 %v1856, %v1852
        %v2761 = vpack.c.b16 %v1857, %v1853
        %v2762 = vpack.c.b16 %v1858, %v1854
        %v2763 = vpack.c.b16 %v1859, %v1855
        %v2764 = vpack.c.b16 %v1864, %v1860
        %v2765 = vpack.c.b16 %v1865, %v1861
        %v2766 = vpack.c.b16 %v1866, %v1862
        %v2767 = vpack.c.b16 %v1867, %v1863
        %v2768 = vpack.c.b16 %v1872, %v1868
        %v2769 = vpack.c.b16 %v1873, %v1869
        %v2770 = vpack.c.b16 %v1874, %v1870
        %v2771 = vpack.c.b16 %v1875, %v1871
        %v2772 = vpack.c.b16 %v1880, %v1876
        %v2773 = vpack.c.b16 %v1881, %v1877
        %v2774 = vpack.c.b16 %v1882, %v1878
        %v2775 = vpack.c.b16 %v1883, %v1879
        %v2776 = vpack.c.b16 %v1888, %v1884
        %v2777 = vpack.c.b16 %v1889, %v1885
        %v2778 = vpack.c.b16 %v1890, %v1886
        %v2779 = vpack.c.b16 %v1891, %v1887
        %v2780 = vpack.c.b16 %v1896, %v1892
        %v2781 = vpack.c.b16 %v1897, %v1893
        %v2782 = vpack.c.b16 %v1898, %v1894
        %v2783 = vpack.c.b16 %v1899, %v1895
        %v2784 = vpack.c.b16 %v1904, %v1900
        %v2785 = vpack.c.b16 %v1905, %v1901
        %v2786 = vpack.c.b16 %v1906, %v1902
        %v2787 = vpack.c.b16 %v1907, %v1903
        %v2788 = vpack.c.b16 %v1912, %v1908
        %v2789 = vpack.c.b16 %v1913, %v1909
        %v2790 = vpack.c.b16 %v1914, %v1910
        %v2791 = vpack.c.b16 %v1915, %v1911
        %v2792 = vpack.c.b16 %v1920, %v1916
        %v2793 = vpack.c.b16 %v1921, %v1917
        %v2794 = vpack.c.b16 %v1922, %v1918
        %v2795 = vpack.c.b16 %v1923, %v1919
        %v2796 = vpack.c.b16 %v1928, %v1924
        %v2797 = vpack.c.b16 %v1929, %v1925
        %v2798 = vpack.c.b16 %v1930, %v1926
        %v2799 = vpack.c.b16 %v1931, %v1927
        %v2800 = vpack.c.b16 %v1936, %v1932
        %v2801 = vpack.c.b16 %v1937, %v1933
        %v2802 = vpack.c.b16 %v1938, %v1934
        %v2803 = vpack.c.b16 %v1939, %v1935
        %v2804 = vpack.c.b16 %v1944, %v1940
        %v2805 = vpack.c.b16 %v1945, %v1941
        %v2806 = vpack.c.b16 %v1946, %v1942
        %v2807 = vpack.c.b16 %v1947, %v1943
        %v2808 = vpack.c.b16 %v1952, %v1948
        %v2809 = vpack.c.b16 %v1953, %v1949
        %v2810 = vpack.c.b16 %v1954, %v1950
        %v2811 = vpack.c.b16 %v1955, %v1951
        %v2812 = vpack.c.b16 %v1960, %v1956
        %v2813 = vpack.c.b16 %v1961, %v1957
        %v2814 = vpack.c.b16 %v1962, %v1958
        %v2815 = vpack.c.b16 %v1963, %v1959
        %v2816 = vpack.c.b16 %v1968, %v1964
        %v2817 = vpack.c.b16 %v1969, %v1965
        %v2818 = vpack.c.b16 %v1970, %v1966
        %v2819 = vpack.c.b16 %v1971, %v1967
        %v2820 = vpack.c.b16 %v1976, %v1972
        %v2821 = vpack.c.b16 %v1977, %v1973
        %v2822 = vpack.c.b16 %v1978, %v1974
        %v2823 = vpack.c.b16 %v1979, %v1975
        %v2824 = vpack.c.b16 %v1984, %v1980
        %v2825 = vpack.c.b16 %v1985, %v1981
        %v2826 = vpack.c.b16 %v1986, %v1982
        %v2827 = vpack.c.b16 %v1987, %v1983
        %v2828 = vpack.c.b16 %v1992, %v1988
        %v2829 = vpack.c.b16 %v1993, %v1989
        %v2830 = vpack.c.b16 %v1994, %v1990
        %v2831 = vpack.c.b16 %v1995, %v1991
        %v2832 = vpack.c.b16 %v2000, %v1996
        %v2833 = vpack.c.b16 %v2001, %v1997
        %v2834 = vpack.c.b16 %v2002, %v1998
        %v2835 = vpack.c.b16 %v2003, %v1999
        %v2836 = vpack.c.b16 %v2008, %v2004
        %v2837 = vpack.c.b16 %v2009, %v2005
        %v2838 = vpack.c.b16 %v2010, %v2006
        %v2839 = vpack.c.b16 %v2011, %v2007
        %v2840 = vpack.c.b16 %v2016, %v2012
        %v2841 = vpack.c.b16 %v2017, %v2013
        %v2842 = vpack.c.b16 %v2018, %v2014
        %v2843 = vpack.c.b16 %v2019, %v2015
        %v2844 = vpack.c.b16 %v2024, %v2020
        %v2845 = vpack.c.b16 %v2025, %v2021
        %v2846 = vpack.c.b16 %v2026, %v2022
        %v2847 = vpack.c.b16 %v2027, %v2023
        %v2848 = vpack.c.b16 %v2032, %v2028
        %v2849 = vpack.c.b16 %v2033, %v2029
        %v2850 = vpack.c.b16 %v2034, %v2030
        %v2851 = vpack.c.b16 %v2035, %v2031
        %v2852 = vpack.c.b16 %v2040, %v2036
        %v2853 = vpack.c.b16 %v2041, %v2037
        %v2854 = vpack.c.b16 %v2042, %v2038
        %v2855 = vpack.c.b16 %v2043, %v2039
        %v2856 = vpack.c.b16 %v2048, %v2044
        %v2857 = vpack.c.b16 %v2049, %v2045
        %v2858 = vpack.c.b16 %v2050, %v2046
        %v2859 = vpack.c.b16 %v2051, %v2047
        %v2860 = vpack.c.b16 %v2056, %v2052
        %v2861 = vpack.c.b16 %v2057, %v2053
        %v2862 = vpack.c.b16 %v2058, %v2054
        %v2863 = vpack.c.b16 %v2059, %v2055
        %v2864 = vpack.c.b16 %v2064, %v2060
        %v2865 = vpack.c.b16 %v2065, %v2061
        %v2866 = vpack.c.b16 %v2066, %v2062
        %v2867 = vpack.c.b16 %v2067, %v2063
        %v2868 = vpack.c.b16 %v2072, %v2068
        %v2869 = vpack.c.b16 %v2073, %v2069
        %v2870 = vpack.c.b16 %v2074, %v2070
        %v2871 = vpack.c.b16 %v2075, %v2071
        %v2872 = vpack.c.b16 %v2080, %v2076
        %v2873 = vpack.c.b16 %v2081, %v2077
        %v2874 = vpack.c.b16 %v2082, %v2078
        %v2875 = vpack.c.b16 %v2083, %v2079
        %v2876 = vpack.c.b16 %v2088, %v2084
        %v2877 = vpack.c.b16 %v2089, %v2085
        %v2878 = vpack.c.b16 %v2090, %v2086
        %v2879 = vpack.c.b16 %v2091, %v2087
        %v2880 = vpack.c.b16 %v2096, %v2092
        %v2881 = vpack.c.b16 %v2097, %v2093
        %v2882 = vpack.c.b16 %v2098, %v2094
        %v2883 = vpack.c.b16 %v2099, %v2095
        %v2884 = vpack.c.b16 %v2104, %v2100
        %v2885 = vpack.c.b16 %v2105, %v2101
        %v2886 = vpack.c.b16 %v2106, %v2102
        %v2887 = vpack.c.b16 %v2107, %v2103
        %v2888 = vpack.c.b16 %v2112, %v2108
        %v2889 = vpack.c.b16 %v2113, %v2109
        %v2890 = vpack.c.b16 %v2114, %v2110
        %v2891 = vpack.c.b16 %v2115, %v2111
        %v2892 = vpack.c.b16 %v2120, %v2116
        %v2893 = vpack.c.b16 %v2121, %v2117
        %v2894 = vpack.c.b16 %v2122, %v2118
        %v2895 = vpack.c.b16 %v2123, %v2119
        %v2896 = vpack.c.b16 %v2128, %v2124
        %v2897 = vpack.c.b16 %v2129, %v2125
        %v2898 = vpack.c.b16 %v2130, %v2126
        %v2899 = vpack.c.b16 %v2131, %v2127
        %v2900 = vpack.c.b16 %v2136, %v2132
        %v2901 = vpack.c.b16 %v2137, %v2133
        %v2902 = vpack.c.b16 %v2138, %v2134
        %v2903 = vpack.c.b16 %v2139, %v2135
        %v2904 = vpack.c.b16 %v2144, %v2140
        %v2905 = vpack.c.b16 %v2145, %v2141
        %v2906 = vpack.c.b16 %v2146, %v2142
        %v2907 = vpack.c.b16 %v2147, %v2143
        %v2908 = vpack.c.b16 %v2152, %v2148
        %v2909 = vpack.c.b16 %v2153, %v2149
        %v2910 = vpack.c.b16 %v2154, %v2150
        %v2911 = vpack.c.b16 %v2155, %v2151
        %v2912 = vpack.c.b16 %v2160, %v2156
        %v2913 = vpack.c.b16 %v2161, %v2157
        %v2914 = vpack.c.b16 %v2162, %v2158
        %v2915 = vpack.c.b16 %v2163, %v2159
        %v2916 = vpack.c.b16 %v2168, %v2164
        %v2917 = vpack.c.b16 %v2169, %v2165
        %v2918 = vpack.c.b16 %v2170, %v2166
        %v2919 = vpack.c.b16 %v2171, %v2167
        %v2920 = vpack.c.b16 %v2176, %v2172
        %v2921 = vpack.c.b16 %v2177, %v2173
        %v2922 = vpack.c.b16 %v2178, %v2174
        %v2923 = vpack.c.b16 %v2179, %v2175
        %v2924 = vpack.c.b16 %v2184, %v2180
        %v2925 = vpack.c.b16 %v2185, %v2181
        %v2926 = vpack.c.b16 %v2186, %v2182
        %v2927 = vpack.c.b16 %v2187, %v2183
        %v2928 = vpack.c.b16 %v2192, %v2188
        %v2929 = vpack.c.b16 %v2193, %v2189
        %v2930 = vpack.c.b16 %v2194, %v2190
        %v2931 = vpack.c.b16 %v2195, %v2191
        %v2932 = vpack.c.b16 %v2200, %v2196
        %v2933 = vpack.c.b16 %v2201, %v2197
        %v2934 = vpack.c.b16 %v2202, %v2198
        %v2935 = vpack.c.b16 %v2203, %v2199
        %v2936 = vpack.c.b16 %v2208, %v2204
        %v2937 = vpack.c.b16 %v2209, %v2205
        %v2938 = vpack.c.b16 %v2210, %v2206
        %v2939 = vpack.c.b16 %v2211, %v2207
        %v2940 = vpack.c.b16 %v2216, %v2212
        %v2941 = vpack.c.b16 %v2217, %v2213
        %v2942 = vpack.c.b16 %v2218, %v2214
        %v2943 = vpack.c.b16 %v2219, %v2215
        %v2944 = vpack.c.b16 %v2224, %v2220
        %v2945 = vpack.c.b16 %v2225, %v2221
        %v2946 = vpack.c.b16 %v2226, %v2222
        %v2947 = vpack.c.b16 %v2227, %v2223
        %v2948 = vpack.c.b16 %v2232, %v2228
        %v2949 = vpack.c.b16 %v2233, %v2229
        %v2950 = vpack.c.b16 %v2234, %v2230
        %v2951 = vpack.c.b16 %v2235, %v2231
        %v2952 = vpack.c.b16 %v2240, %v2236
        %v2953 = vpack.c.b16 %v2241, %v2237
        %v2954 = vpack.c.b16 %v2242, %v2238
        %v2955 = vpack.c.b16 %v2243, %v2239
        %v2956 = vpack.c.b16 %v2248, %v2244
        %v2957 = vpack.c.b16 %v2249, %v2245
        %v2958 = vpack.c.b16 %v2250, %v2246
        %v2959 = vpack.c.b16 %v2251, %v2247
        %v2960 = vpack.c.b16 %v2256, %v2252
        %v2961 = vpack.c.b16 %v2257, %v2253
        %v2962 = vpack.c.b16 %v2258, %v2254
        %v2963 = vpack.c.b16 %v2259, %v2255
        %v2964 = vpack.c.b16 %v2264, %v2260
        %v2965 = vpack.c.b16 %v2265, %v2261
        %v2966 = vpack.c.b16 %v2266, %v2262
        %v2967 = vpack.c.b16 %v2267, %v2263
        %v2968 = vpack.c.b16 %v2272, %v2268
        %v2969 = vpack.c.b16 %v2273, %v2269
        %v2970 = vpack.c.b16 %v2274, %v2270
        %v2971 = vpack.c.b16 %v2275, %v2271
        %v2972 = vpack.c.b16 %v2280, %v2276
        %v2973 = vpack.c.b16 %v2281, %v2277
        %v2974 = vpack.c.b16 %v2282, %v2278
        %v2975 = vpack.c.b16 %v2283, %v2279
        %v2976 = vpack.c.b16 %v2288, %v2284
        %v2977 = vpack.c.b16 %v2289, %v2285
        %v2978 = vpack.c.b16 %v2290, %v2286
        %v2979 = vpack.c.b16 %v2291, %v2287
        %v2980 = vpack.c.b16 %v2296, %v2292
        %v2981 = vpack.c.b16 %v2297, %v2293
        %v2982 = vpack.c.b16 %v2298, %v2294
        %v2983 = vpack.c.b16 %v2299, %v2295
        %v2984 = vpack.c.b16 %v2304, %v2300
        %v2985 = vpack.c.b16 %v2305, %v2301
        %v2986 = vpack.c.b16 %v2306, %v2302
        %v2987 = vpack.c.b16 %v2307, %v2303
        %v2988 = vpack.c.b16 %v2312, %v2308
        %v2989 = vpack.c.b16 %v2313, %v2309
        %v2990 = vpack.c.b16 %v2314, %v2310
        %v2991 = vpack.c.b16 %v2315, %v2311
        %v2992 = vpack.c.b16 %v2320, %v2316
        %v2993 = vpack.c.b16 %v2321, %v2317
        %v2994 = vpack.c.b16 %v2322, %v2318
        %v2995 = vpack.c.b16 %v2323, %v2319
        %v2996 = vpack.c.b16 %v2328, %v2324
        %v2997 = vpack.c.b16 %v2329, %v2325
        %v2998 = vpack.c.b16 %v2330, %v2326
        %v2999 = vpack.c.b16 %v2331, %v2327
        %v3000 = vpack.c.b16 %v2336, %v2332
        %v3001 = vpack.c.b16 %v2337, %v2333
        %v3002 = vpack.c.b16 %v2338, %v2334
        %v3003 = vpack.c.b16 %v2339, %v2335
        %v3004 = vpack.c.b16 %v2344, %v2340
        %v3005 = vpack.c.b16 %v2345, %v2341
        %v3006 = vpack.c.b16 %v2346, %v2342
        %v3007 = vpack.c.b16 %v2347, %v2343
        %v3008 = vpack.c.b16 %v2352, %v2348
        %v3009 = vpack.c.b16 %v2353, %v2349
        %v3010 = vpack.c.b16 %v2354, %v2350
        %v3011 = vpack.c.b16 %v2355, %v2351
        %v3012 = vpack.c.b16 %v2360, %v2356
        %v3013 = vpack.c.b16 %v2361, %v2357
        %v3014 = vpack.c.b16 %v2362, %v2358
        %v3015 = vpack.c.b16 %v2363, %v2359
        %v3016 = vpack.c.b16 %v2368, %v2364
        %v3017 = vpack.c.b16 %v2369, %v2365
        %v3018 = vpack.c.b16 %v2370, %v2366
        %v3019 = vpack.c.b16 %v2371, %v2367
        %v3020 = vpack.c.b16 %v2376, %v2372
        %v3021 = vpack.c.b16 %v2377, %v2373
        %v3022 = vpack.c.b16 %v2378, %v2374
        %v3023 = vpack.c.b16 %v2379, %v2375
        %v3024 = vpack.c.b16 %v2384, %v2380
        %v3025 = vpack.c.b16 %v2385, %v2381
        %v3026 = vpack.c.b16 %v2386, %v2382
        %v3027 = vpack.c.b16 %v2387, %v2383
        %v3028 = vpack.c.b16 %v2392, %v2388
        %v3029 = vpack.c.b16 %v2393, %v2389
        %v3030 = vpack.c.b16 %v2394, %v2390
        %v3031 = vpack.c.b16 %v2395, %v2391
        %v3032 = vpack.c.b16 %v2400, %v2396
        %v3033 = vpack.c.b16 %v2401, %v2397
        %v3034 = vpack.c.b16 %v2402, %v2398
        %v3035 = vpack.c.b16 %v2403, %v2399
        %v3036 = vpack.c.b16 %v2408, %v2404
        %v3037 = vpack.c.b16 %v2409, %v2405
        %v3038 = vpack.c.b16 %v2410, %v2406
        %v3039 = vpack.c.b16 %v2411, %v2407
        %v3040 = vpack.c.b16 %v2416, %v2412
        %v3041 = vpack.c.b16 %v2417, %v2413
        %v3042 = vpack.c.b16 %v2418, %v2414
        %v3043 = vpack.c.b16 %v2419, %v2415
        %v3044 = vpack.c.b16 %v2424, %v2420
        %v3045 = vpack.c.b16 %v2425, %v2421
        %v3046 = vpack.c.b16 %v2426, %v2422
        %v3047 = vpack.c.b16 %v2427, %v2423
        %v3048 = vpack.c.b16 %v2432, %v2428
        %v3049 = vpack.c.b16 %v2433, %v2429
        %v3050 = vpack.c.b16 %v2434, %v2430
        %v3051 = vpack.c.b16 %v2435, %v2431
        %v3052 = vpack.c.b16 %v2440, %v2436
        %v3053 = vpack.c.b16 %v2441, %v2437
        %v3054 = vpack.c.b16 %v2442, %v2438
        %v3055 = vpack.c.b16 %v2443, %v2439
        %v3056 = vpack.c.b16 %v2448, %v2444
        %v3057 = vpack.c.b16 %v2449, %v2445
        %v3058 = vpack.c.b16 %v2450, %v2446
        %v3059 = vpack.c.b16 %v2451, %v2447
        %v3060 = vpack.c.b16 %v2456, %v2452
        %v3061 = vpack.c.b16 %v2457, %v2453
        %v3062 = vpack.c.b16 %v2458, %v2454
        %v3063 = vpack.c.b16 %v2459, %v2455
        %v3064 = vpack.c.b16 %v2464, %v2460
        %v3065 = vpack.c.b16 %v2465, %v2461
        %v3066 = vpack.c.b16 %v2466, %v2462
        %v3067 = vpack.c.b16 %v2467, %v2463
        %v3068 = vpack.c.b16 %v2472, %v2468
        %v3069 = vpack.c.b16 %v2473, %v2469
        %v3070 = vpack.c.b16 %v2474, %v2470
        %v3071 = vpack.c.b16 %v2475, %v2471
        %v3072 = vpack.c.b16 %v2480, %v2476
        %v3073 = vpack.c.b16 %v2481, %v2477
        %v3074 = vpack.c.b16 %v2482, %v2478
        %v3075 = vpack.c.b16 %v2483, %v2479
        %v3076 = vpack.c.b16 %v2488, %v2484
        %v3077 = vpack.c.b16 %v2489, %v2485
        %v3078 = vpack.c.b16 %v2490, %v2486
        %v3079 = vpack.c.b16 %v2491, %v2487
        %v3080 = vpack.c.b16 %v2496, %v2492
        %v3081 = vpack.c.b16 %v2497, %v2493
        %v3082 = vpack.c.b16 %v2498, %v2494
        %v3083 = vpack.c.b16 %v2499, %v2495
        %v3084 = vpack.c.b16 %v2504, %v2500
        %v3085 = vpack.c.b16 %v2505, %v2501
        %v3086 = vpack.c.b16 %v2506, %v2502
        %v3087 = vpack.c.b16 %v2507, %v2503
        %v3088 = vpack.c.b16 %v2512, %v2508
        %v3089 = vpack.c.b16 %v2513, %v2509
        %v3090 = vpack.c.b16 %v2514, %v2510
        %v3091 = vpack.c.b16 %v2515, %v2511
        %v3092 = vpack.c.b16 %v2520, %v2516
        %v3093 = vpack.c.b16 %v2521, %v2517
        %v3094 = vpack.c.b16 %v2522, %v2518
        %v3095 = vpack.c.b16 %v2523, %v2519
        %v3096 = vpack.c.b16 %v2528, %v2524
        %v3097 = vpack.c.b16 %v2529, %v2525
        %v3098 = vpack.c.b16 %v2530, %v2526
        %v3099 = vpack.c.b16 %v2531, %v2527
        %v3100 = vpack.c.b16 %v2536, %v2532
        %v3101 = vpack.c.b16 %v2537, %v2533
        %v3102 = vpack.c.b16 %v2538, %v2534
        %v3103 = vpack.c.b16 %v2539, %v2535
        %v3104 = vpack.c.b16 %v2544, %v2540
        %v3105 = vpack.c.b16 %v2545, %v2541
        %v3106 = vpack.c.b16 %v2546, %v2542
        %v3107 = vpack.c.b16 %v2547, %v2543
        %v3108 = vpack.c.b16 %v2552, %v2548
        %v3109 = vpack.c.b16 %v2553, %v2549
        %v3110 = vpack.c.b16 %v2554, %v2550
        %v3111 = vpack.c.b16 %v2555, %v2551
        %v3112 = vpack.c.b16 %v2560, %v2556
        %v3113 = vpack.c.b16 %v2561, %v2557
        %v3114 = vpack.c.b16 %v2562, %v2558
        %v3115 = vpack.c.b16 %v2563, %v2559
        %v3116 = vpack.c.b16 %v2568, %v2564
        %v3117 = vpack.c.b16 %v2569, %v2565
        %v3118 = vpack.c.b16 %v2570, %v2566
        %v3119 = vpack.c.b16 %v2571, %v2567
        %v3120 = vpack.c.b16 %v2576, %v2572
        %v3121 = vpack.c.b16 %v2577, %v2573
        %v3122 = vpack.c.b16 %v2578, %v2574
        %v3123 = vpack.c.b16 %v2579, %v2575
        %v3124 = vpack.c.b16 %v2584, %v2580
        %v3125 = vpack.c.b16 %v2585, %v2581
        %v3126 = vpack.c.b16 %v2586, %v2582
        %v3127 = vpack.c.b16 %v2587, %v2583
        %v3128 = vpack.c.b16 %v2592, %v2588
        %v3129 = vpack.c.b16 %v2593, %v2589
        %v3130 = vpack.c.b16 %v2594, %v2590
        %v3131 = vpack.c.b16 %v2595, %v2591
        %v3132 = vpack.c.b16 %v2600, %v2596
        %v3133 = vpack.c.b16 %v2601, %v2597
        %v3134 = vpack.c.b16 %v2602, %v2598
        %v3135 = vpack.c.b16 %v2603, %v2599
        %v3136 = vpack.c.b16 %v2608, %v2604
        %v3137 = vpack.c.b16 %v2609, %v2605
        %v3138 = vpack.c.b16 %v2610, %v2606
        %v3139 = vpack.c.b16 %v2611, %v2607
        %v3140 = vpack.c.b16 %v2616, %v2612
        %v3141 = vpack.c.b16 %v2617, %v2613
        %v3142 = vpack.c.b16 %v2618, %v2614
        %v3143 = vpack.c.b16 %v2619, %v2615
        %v3144 = vpack.c.b16 %v2624, %v2620
        %v3145 = vpack.c.b16 %v2625, %v2621
        %v3146 = vpack.c.b16 %v2626, %v2622
        %v3147 = vpack.c.b16 %v2627, %v2623
        %v3148 = vpack.c.b16 %v2632, %v2628
        %v3149 = vpack.c.b16 %v2633, %v2629
        %v3150 = vpack.c.b16 %v2634, %v2630
        %v3151 = vpack.c.b16 %v2635, %v2631
        %v3152 = vpack.c.b16 %v2640, %v2636
        %v3153 = vpack.c.b16 %v2641, %v2637
        %v3154 = vpack.c.b16 %v2642, %v2638
        %v3155 = vpack.c.b16 %v2643, %v2639
        %3668 = vmatprep.subr.bf16.mxu0 %v2673
        %3669 = vmatpush1.bf16.msra.mxu0 %v2672
        %3670 = vmatprep.subr.bf16.mxu0 %v2669
        %3671 = vmatpush1.bf16.msra.mxu0 %v2668
        %3672 = vmatprep.subr.bf16.mxu0 %v2665
        %3673 = vmatpush1.bf16.msra.mxu0 %v2664
        %3674 = vmatprep.subr.bf16.mxu0 %v2661
        %3675 = vmatpush1.bf16.msra.mxu0 %v2660
        %3676 = vmatprep.subr.bf16.mxu0 %v2657
        %3677 = vmatpush1.bf16.msra.mxu0 %v2656
        %3678 = vmatprep.subr.bf16.mxu0 %v2653
        %3679 = vmatpush1.bf16.msra.mxu0 %v2652
        %3680 = vmatprep.subr.bf16.mxu0 %v2649
        %3681 = vmatpush1.bf16.msra.mxu0 %v2648
        %3682 = vmatprep.subr.bf16.mxu0 %v2645
        %3683 = vmatpush1.bf16.msra.mxu0 %v2644
        %3684 = vmatprep.subr.bf16.mxu0 %v2705
        %3685 = vmatpush2.bf16.msra.mxu0 %v2704
        %3686 = vmatprep.subr.bf16.mxu0 %v2701
        %3687 = vmatpush2.bf16.msra.mxu0 %v2700
        %3688 = vmatprep.subr.bf16.mxu0 %v2697
        %3689 = vmatpush2.bf16.msra.mxu0 %v2696
        %3690 = vmatprep.subr.bf16.mxu0 %v2693
        %3691 = vmatpush2.bf16.msra.mxu0 %v2692
        %3692 = vmatprep.subr.bf16.mxu0 %v2689
        %3693 = vmatpush2.bf16.msra.mxu0 %v2688
        %3694 = vmatprep.subr.bf16.mxu0 %v2685
        %3695 = vmatpush2.bf16.msra.mxu0 %v2684
        %3696 = vmatprep.subr.bf16.mxu0 %v2681
        %3697 = vmatpush2.bf16.msra.mxu0 %v2680
        %3698 = vmatprep.subr.bf16.mxu0 %v2677
        %3699 = vmatpush2.bf16.msra.mxu0 %v2676
        %3700 = vmatprep.mubr.bf16.mxu0 %v1031
        %3701 = vmatmul.mubr.bf16.gmra.mxu0 %v1017
        %v3702 = vpop.f32.mrf.mxu0
        %v3703 = vadd.f32 %v975, %v3702
        %v3704 = vpop.f32.mrf.mxu0
        %v3705 = vadd.f32 %v979, %v3704
        %v3706 = vpop.f32.mrf.mxu0
        %v3707 = vpop.f32.mrf.mxu0
        %3708 = vdwg.mxu0
        %3709 = vmatprep.subr.bf16.mxu0 %v2737
        %3710 = vmatpush1.bf16.msra.mxu0 %v2736
        %3711 = vmatprep.subr.bf16.mxu0 %v2733
        %3712 = vmatpush1.bf16.msra.mxu0 %v2732
        %3713 = vmatprep.subr.bf16.mxu0 %v2729
        %3714 = vmatpush1.bf16.msra.mxu0 %v2728
        %3715 = vmatprep.subr.bf16.mxu0 %v2725
        %3716 = vmatpush1.bf16.msra.mxu0 %v2724
        %3717 = vmatprep.subr.bf16.mxu0 %v2721
        %3718 = vmatpush1.bf16.msra.mxu0 %v2720
        %3719 = vmatprep.subr.bf16.mxu0 %v2717
        %3720 = vmatpush1.bf16.msra.mxu0 %v2716
        %3721 = vmatprep.subr.bf16.mxu0 %v2713
        %3722 = vmatpush1.bf16.msra.mxu0 %v2712
        %3723 = vmatprep.subr.bf16.mxu0 %v2709
        %3724 = vmatpush1.bf16.msra.mxu0 %v2708
        %3725 = vmatprep.subr.bf16.mxu0 %v2769
        %3726 = vmatpush2.bf16.msra.mxu0 %v2768
        %3727 = vmatprep.subr.bf16.mxu0 %v2765
        %3728 = vmatpush2.bf16.msra.mxu0 %v2764
        %3729 = vmatprep.subr.bf16.mxu0 %v2761
        %3730 = vmatpush2.bf16.msra.mxu0 %v2760
        %3731 = vmatprep.subr.bf16.mxu0 %v2757
        %3732 = vmatpush2.bf16.msra.mxu0 %v2756
        %3733 = vmatprep.subr.bf16.mxu0 %v2753
        %3734 = vmatpush2.bf16.msra.mxu0 %v2752
        %3735 = vmatprep.subr.bf16.mxu0 %v2749
        %3736 = vmatpush2.bf16.msra.mxu0 %v2748
        %3737 = vmatprep.subr.bf16.mxu0 %v2745
        %3738 = vmatpush2.bf16.msra.mxu0 %v2744
        %3739 = vmatprep.subr.bf16.mxu0 %v2741
        %3740 = vmatpush2.bf16.msra.mxu0 %v2740
        %3741 = vmatprep.mubr.bf16.mxu0 %v1041
        %3742 = vmatmul.mubr.bf16.gmra.mxu0 %v1039
        %v3743 = vpop.f32.mrf.mxu0
        %v3744 = vadd.f32 %v3703, %v3743
        %v3745 = vpop.f32.mrf.mxu0
        %v3746 = vadd.f32 %v3705, %v3745
        %v3747 = vpop.f32.mrf.mxu0
        %v3748 = vpop.f32.mrf.mxu0
        %3749 = vdwg.mxu0
        %3750 = vmatprep.subr.bf16.mxu0 %v2801
        %3751 = vmatpush1.bf16.msra.mxu0 %v2800
        %3752 = vmatprep.subr.bf16.mxu0 %v2797
        %3753 = vmatpush1.bf16.msra.mxu0 %v2796
        %3754 = vmatprep.subr.bf16.mxu0 %v2793
        %3755 = vmatpush1.bf16.msra.mxu0 %v2792
        %3756 = vmatprep.subr.bf16.mxu0 %v2789
        %3757 = vmatpush1.bf16.msra.mxu0 %v2788
        %3758 = vmatprep.subr.bf16.mxu0 %v2785
        %3759 = vmatpush1.bf16.msra.mxu0 %v2784
        %3760 = vmatprep.subr.bf16.mxu0 %v2781
        %3761 = vmatpush1.bf16.msra.mxu0 %v2780
        %3762 = vmatprep.subr.bf16.mxu0 %v2777
        %3763 = vmatpush1.bf16.msra.mxu0 %v2776
        %3764 = vmatprep.subr.bf16.mxu0 %v2773
        %3765 = vmatpush1.bf16.msra.mxu0 %v2772
        %3766 = vmatprep.subr.bf16.mxu0 %v2833
        %3767 = vmatpush2.bf16.msra.mxu0 %v2832
        %3768 = vmatprep.subr.bf16.mxu0 %v2829
        %3769 = vmatpush2.bf16.msra.mxu0 %v2828
        %3770 = vmatprep.subr.bf16.mxu0 %v2825
        %3771 = vmatpush2.bf16.msra.mxu0 %v2824
        %3772 = vmatprep.subr.bf16.mxu0 %v2821
        %3773 = vmatpush2.bf16.msra.mxu0 %v2820
        %3774 = vmatprep.subr.bf16.mxu0 %v2817
        %3775 = vmatpush2.bf16.msra.mxu0 %v2816
        %3776 = vmatprep.subr.bf16.mxu0 %v2813
        %3777 = vmatpush2.bf16.msra.mxu0 %v2812
        %3778 = vmatprep.subr.bf16.mxu0 %v2809
        %3779 = vmatpush2.bf16.msra.mxu0 %v2808
        %3780 = vmatprep.subr.bf16.mxu0 %v2805
        %3781 = vmatpush2.bf16.msra.mxu0 %v2804
        %3782 = vmatprep.mubr.bf16.mxu0 %v1038
        %3783 = vmatmul.mubr.bf16.gmra.mxu0 %v1024
        %v3784 = vpop.f32.mrf.mxu0
        %v3785 = vadd.f32 %v3744, %v3784
        %v3786 = vpop.f32.mrf.mxu0
        %v3787 = vadd.f32 %v3746, %v3786
        %v3788 = vpop.f32.mrf.mxu0
        %v3789 = vpop.f32.mrf.mxu0
        %3790 = vdwg.mxu0
        %3791 = vmatprep.subr.bf16.mxu0 %v2865
        %3792 = vmatpush1.bf16.msra.mxu0 %v2864
        %3793 = vmatprep.subr.bf16.mxu0 %v2861
        %3794 = vmatpush1.bf16.msra.mxu0 %v2860
        %3795 = vmatprep.subr.bf16.mxu0 %v2857
        %3796 = vmatpush1.bf16.msra.mxu0 %v2856
        %3797 = vmatprep.subr.bf16.mxu0 %v2853
        %3798 = vmatpush1.bf16.msra.mxu0 %v2852
        %3799 = vmatprep.subr.bf16.mxu0 %v2849
        %3800 = vmatpush1.bf16.msra.mxu0 %v2848
        %3801 = vmatprep.subr.bf16.mxu0 %v2845
        %3802 = vmatpush1.bf16.msra.mxu0 %v2844
        %3803 = vmatprep.subr.bf16.mxu0 %v2841
        %3804 = vmatpush1.bf16.msra.mxu0 %v2840
        %3805 = vmatprep.subr.bf16.mxu0 %v2837
        %3806 = vmatpush1.bf16.msra.mxu0 %v2836
        %3807 = vmatprep.subr.bf16.mxu0 %v2897
        %3808 = vmatpush2.bf16.msra.mxu0 %v2896
        %3809 = vmatprep.subr.bf16.mxu0 %v2893
        %3810 = vmatpush2.bf16.msra.mxu0 %v2892
        %3811 = vmatprep.subr.bf16.mxu0 %v2889
        %3812 = vmatpush2.bf16.msra.mxu0 %v2888
        %3813 = vmatprep.subr.bf16.mxu0 %v2885
        %3814 = vmatpush2.bf16.msra.mxu0 %v2884
        %3815 = vmatprep.subr.bf16.mxu0 %v2881
        %3816 = vmatpush2.bf16.msra.mxu0 %v2880
        %3817 = vmatprep.subr.bf16.mxu0 %v2877
        %3818 = vmatpush2.bf16.msra.mxu0 %v2876
        %3819 = vmatprep.subr.bf16.mxu0 %v2873
        %3820 = vmatpush2.bf16.msra.mxu0 %v2872
        %3821 = vmatprep.subr.bf16.mxu0 %v2869
        %3822 = vmatpush2.bf16.msra.mxu0 %v2868
        %3823 = vmatprep.mubr.bf16.mxu0 %v1042
        %3824 = vmatmul.mubr.bf16.gmra.mxu0 %v1040
        %v3825 = vpop.f32.mrf.mxu0
        %v3826 = vadd.f32 %v3785, %v3825
        %v3827 = vpop.f32.mrf.mxu0
        %v3828 = vadd.f32 %v3787, %v3827
        %v3829 = vpop.f32.mrf.mxu0
        %v3830 = vpop.f32.mrf.mxu0
        %3831 = vdwg.mxu0
        %3832 = vmatprep.subr.bf16.mxu0 %v2929
        %3833 = vmatpush1.bf16.msra.mxu0 %v2928
        %3834 = vmatprep.subr.bf16.mxu0 %v2925
        %3835 = vmatpush1.bf16.msra.mxu0 %v2924
        %3836 = vmatprep.subr.bf16.mxu0 %v2921
        %3837 = vmatpush1.bf16.msra.mxu0 %v2920
        %3838 = vmatprep.subr.bf16.mxu0 %v2917
        %3839 = vmatpush1.bf16.msra.mxu0 %v2916
        %3840 = vmatprep.subr.bf16.mxu0 %v2913
        %3841 = vmatpush1.bf16.msra.mxu0 %v2912
        %3842 = vmatprep.subr.bf16.mxu0 %v2909
        %3843 = vmatpush1.bf16.msra.mxu0 %v2908
        %3844 = vmatprep.subr.bf16.mxu0 %v2905
        %3845 = vmatpush1.bf16.msra.mxu0 %v2904
        %3846 = vmatprep.subr.bf16.mxu0 %v2901
        %3847 = vmatpush1.bf16.msra.mxu0 %v2900
        %3848 = vmatprep.subr.bf16.mxu0 %v2961
        %3849 = vmatpush2.bf16.msra.mxu0 %v2960
        %3850 = vmatprep.subr.bf16.mxu0 %v2957
        %3851 = vmatpush2.bf16.msra.mxu0 %v2956
        %3852 = vmatprep.subr.bf16.mxu0 %v2953
        %3853 = vmatpush2.bf16.msra.mxu0 %v2952
        %3854 = vmatprep.subr.bf16.mxu0 %v2949
        %3855 = vmatpush2.bf16.msra.mxu0 %v2948
        %3856 = vmatprep.subr.bf16.mxu0 %v2945
        %3857 = vmatpush2.bf16.msra.mxu0 %v2944
        %3858 = vmatprep.subr.bf16.mxu0 %v2941
        %3859 = vmatpush2.bf16.msra.mxu0 %v2940
        %3860 = vmatprep.subr.bf16.mxu0 %v2937
        %3861 = vmatpush2.bf16.msra.mxu0 %v2936
        %3862 = vmatprep.subr.bf16.mxu0 %v2933
        %3863 = vmatpush2.bf16.msra.mxu0 %v2932
        %3864 = vmatprep.mubr.bf16.mxu0 %v1080
        %3865 = vmatmul.mubr.bf16.gmra.mxu0 %v1066
        %v3866 = vpop.f32.mrf.mxu0
        %v3867 = vadd.f32 %v3826, %v3866
        %v3868 = vpop.f32.mrf.mxu0
        %v3869 = vadd.f32 %v3828, %v3868
        %v3870 = vpop.f32.mrf.mxu0
        %v3871 = vpop.f32.mrf.mxu0
        %3872 = vdwg.mxu0
        %3873 = vmatprep.subr.bf16.mxu0 %v2993
        %3874 = vmatpush1.bf16.msra.mxu0 %v2992
        %3875 = vmatprep.subr.bf16.mxu0 %v2989
        %3876 = vmatpush1.bf16.msra.mxu0 %v2988
        %3877 = vmatprep.subr.bf16.mxu0 %v2985
        %3878 = vmatpush1.bf16.msra.mxu0 %v2984
        %3879 = vmatprep.subr.bf16.mxu0 %v2981
        %3880 = vmatpush1.bf16.msra.mxu0 %v2980
        %3881 = vmatprep.subr.bf16.mxu0 %v2977
        %3882 = vmatpush1.bf16.msra.mxu0 %v2976
        %3883 = vmatprep.subr.bf16.mxu0 %v2973
        %3884 = vmatpush1.bf16.msra.mxu0 %v2972
        %3885 = vmatprep.subr.bf16.mxu0 %v2969
        %3886 = vmatpush1.bf16.msra.mxu0 %v2968
        %3887 = vmatprep.subr.bf16.mxu0 %v2965
        %3888 = vmatpush1.bf16.msra.mxu0 %v2964
        %3889 = vmatprep.subr.bf16.mxu0 %v3025
        %3890 = vmatpush2.bf16.msra.mxu0 %v3024
        %3891 = vmatprep.subr.bf16.mxu0 %v3021
        %3892 = vmatpush2.bf16.msra.mxu0 %v3020
        %3893 = vmatprep.subr.bf16.mxu0 %v3017
        %3894 = vmatpush2.bf16.msra.mxu0 %v3016
        %3895 = vmatprep.subr.bf16.mxu0 %v3013
        %3896 = vmatpush2.bf16.msra.mxu0 %v3012
        %3897 = vmatprep.subr.bf16.mxu0 %v3009
        %3898 = vmatpush2.bf16.msra.mxu0 %v3008
        %3899 = vmatprep.subr.bf16.mxu0 %v3005
        %3900 = vmatpush2.bf16.msra.mxu0 %v3004
        %3901 = vmatprep.subr.bf16.mxu0 %v3001
        %3902 = vmatpush2.bf16.msra.mxu0 %v3000
        %3903 = vmatprep.subr.bf16.mxu0 %v2997
        %3904 = vmatpush2.bf16.msra.mxu0 %v2996
        %3905 = vmatprep.mubr.bf16.mxu0 %v1090
        %3906 = vmatmul.mubr.bf16.gmra.mxu0 %v1088
        %v3907 = vpop.f32.mrf.mxu0
        %v3908 = vadd.f32 %v3867, %v3907
        %v3909 = vpop.f32.mrf.mxu0
        %v3910 = vadd.f32 %v3869, %v3909
        %v3911 = vpop.f32.mrf.mxu0
        %v3912 = vpop.f32.mrf.mxu0
        %3913 = vdwg.mxu0
        %3914 = vmatprep.subr.bf16.mxu0 %v3057
        %3915 = vmatpush1.bf16.msra.mxu0 %v3056
        %3916 = vmatprep.subr.bf16.mxu0 %v3053
        %3917 = vmatpush1.bf16.msra.mxu0 %v3052
        %3918 = vmatprep.subr.bf16.mxu0 %v3049
        %3919 = vmatpush1.bf16.msra.mxu0 %v3048
        %3920 = vmatprep.subr.bf16.mxu0 %v3045
        %3921 = vmatpush1.bf16.msra.mxu0 %v3044
        %3922 = vmatprep.subr.bf16.mxu0 %v3041
        %3923 = vmatpush1.bf16.msra.mxu0 %v3040
        %3924 = vmatprep.subr.bf16.mxu0 %v3037
        %3925 = vmatpush1.bf16.msra.mxu0 %v3036
        %3926 = vmatprep.subr.bf16.mxu0 %v3033
        %3927 = vmatpush1.bf16.msra.mxu0 %v3032
        %3928 = vmatprep.subr.bf16.mxu0 %v3029
        %3929 = vmatpush1.bf16.msra.mxu0 %v3028
        %3930 = vmatprep.subr.bf16.mxu0 %v3089
        %3931 = vmatpush2.bf16.msra.mxu0 %v3088
        %3932 = vmatprep.subr.bf16.mxu0 %v3085
        %3933 = vmatpush2.bf16.msra.mxu0 %v3084
        %3934 = vmatprep.subr.bf16.mxu0 %v3081
        %3935 = vmatpush2.bf16.msra.mxu0 %v3080
        %3936 = vmatprep.subr.bf16.mxu0 %v3077
        %3937 = vmatpush2.bf16.msra.mxu0 %v3076
        %3938 = vmatprep.subr.bf16.mxu0 %v3073
        %3939 = vmatpush2.bf16.msra.mxu0 %v3072
        %3940 = vmatprep.subr.bf16.mxu0 %v3069
        %3941 = vmatpush2.bf16.msra.mxu0 %v3068
        %3942 = vmatprep.subr.bf16.mxu0 %v3065
        %3943 = vmatpush2.bf16.msra.mxu0 %v3064
        %3944 = vmatprep.subr.bf16.mxu0 %v3061
        %3945 = vmatpush2.bf16.msra.mxu0 %v3060
        %3946 = vmatprep.mubr.bf16.mxu0 %v1087
        %3947 = vmatmul.mubr.bf16.gmra.mxu0 %v1073
        %v3948 = vpop.f32.mrf.mxu0
        %v3949 = vadd.f32 %v3908, %v3948
        %v3950 = vpop.f32.mrf.mxu0
        %v3951 = vadd.f32 %v3910, %v3950
        %v3952 = vpop.f32.mrf.mxu0
        %v3953 = vpop.f32.mrf.mxu0
        %3954 = vdwg.mxu0
        %3955 = vmatprep.subr.bf16.mxu0 %v3121
        %3956 = vmatpush1.bf16.msra.mxu0 %v3120
        %3957 = vmatprep.subr.bf16.mxu0 %v3117
        %3958 = vmatpush1.bf16.msra.mxu0 %v3116
        %3959 = vmatprep.subr.bf16.mxu0 %v3113
        %3960 = vmatpush1.bf16.msra.mxu0 %v3112
        %3961 = vmatprep.subr.bf16.mxu0 %v3109
        %3962 = vmatpush1.bf16.msra.mxu0 %v3108
        %3963 = vmatprep.subr.bf16.mxu0 %v3105
        %3964 = vmatpush1.bf16.msra.mxu0 %v3104
        %3965 = vmatprep.subr.bf16.mxu0 %v3101
        %3966 = vmatpush1.bf16.msra.mxu0 %v3100
        %3967 = vmatprep.subr.bf16.mxu0 %v3097
        %3968 = vmatpush1.bf16.msra.mxu0 %v3096
        %3969 = vmatprep.subr.bf16.mxu0 %v3093
        %3970 = vmatpush1.bf16.msra.mxu0 %v3092
        %3971 = vmatprep.subr.bf16.mxu0 %v3153
        %3972 = vmatpush2.bf16.msra.mxu0 %v3152
        %3973 = vmatprep.subr.bf16.mxu0 %v3149
        %3974 = vmatpush2.bf16.msra.mxu0 %v3148
        %3975 = vmatprep.subr.bf16.mxu0 %v3145
        %3976 = vmatpush2.bf16.msra.mxu0 %v3144
        %3977 = vmatprep.subr.bf16.mxu0 %v3141
        %3978 = vmatpush2.bf16.msra.mxu0 %v3140
        %3979 = vmatprep.subr.bf16.mxu0 %v3137
        %3980 = vmatpush2.bf16.msra.mxu0 %v3136
        %3981 = vmatprep.subr.bf16.mxu0 %v3133
        %3982 = vmatpush2.bf16.msra.mxu0 %v3132
        %3983 = vmatprep.subr.bf16.mxu0 %v3129
        %3984 = vmatpush2.bf16.msra.mxu0 %v3128
        %3985 = vmatprep.subr.bf16.mxu0 %v3125
        %3986 = vmatpush2.bf16.msra.mxu0 %v3124
        %3987 = vmatprep.mubr.bf16.mxu0 %v1091
        %3988 = vmatmul.mubr.bf16.gmra.mxu0 %v1089
        %v3989 = vpop.f32.mrf.mxu0
        %v3990 = vadd.f32 %v3949, %v3989
        %v3991 = vpop.f32.mrf.mxu0
        %v3992 = vadd.f32 %v3951, %v3991
        %v3993 = vpop.f32.mrf.mxu0
        %v3994 = vpop.f32.mrf.mxu0
        %3995 = vdwg.mxu0
        %3996 = vmatprep.subr.bf16.mxu0 %v2675
        %3997 = vmatpush1.bf16.msra.mxu0 %v2674
        %3998 = vmatprep.subr.bf16.mxu0 %v2671
        %3999 = vmatpush1.bf16.msra.mxu0 %v2670
        %4000 = vmatprep.subr.bf16.mxu0 %v2667
        %4001 = vmatpush1.bf16.msra.mxu0 %v2666
        %4002 = vmatprep.subr.bf16.mxu0 %v2663
        %4003 = vmatpush1.bf16.msra.mxu0 %v2662
        %4004 = vmatprep.subr.bf16.mxu0 %v2659
        %4005 = vmatpush1.bf16.msra.mxu0 %v2658
        %4006 = vmatprep.subr.bf16.mxu0 %v2655
        %4007 = vmatpush1.bf16.msra.mxu0 %v2654
        %4008 = vmatprep.subr.bf16.mxu0 %v2651
        %4009 = vmatpush1.bf16.msra.mxu0 %v2650
        %4010 = vmatprep.subr.bf16.mxu0 %v2647
        %4011 = vmatpush1.bf16.msra.mxu0 %v2646
        %4012 = vmatprep.subr.bf16.mxu0 %v2707
        %4013 = vmatpush2.bf16.msra.mxu0 %v2706
        %4014 = vmatprep.subr.bf16.mxu0 %v2703
        %4015 = vmatpush2.bf16.msra.mxu0 %v2702
        %4016 = vmatprep.subr.bf16.mxu0 %v2699
        %4017 = vmatpush2.bf16.msra.mxu0 %v2698
        %4018 = vmatprep.subr.bf16.mxu0 %v2695
        %4019 = vmatpush2.bf16.msra.mxu0 %v2694
        %4020 = vmatprep.subr.bf16.mxu0 %v2691
        %4021 = vmatpush2.bf16.msra.mxu0 %v2690
        %4022 = vmatprep.subr.bf16.mxu0 %v2687
        %4023 = vmatpush2.bf16.msra.mxu0 %v2686
        %4024 = vmatprep.subr.bf16.mxu0 %v2683
        %4025 = vmatpush2.bf16.msra.mxu0 %v2682
        %4026 = vmatprep.subr.bf16.mxu0 %v2679
        %4027 = vmatpush2.bf16.msra.mxu0 %v2678
        %4028 = vmatprep.mubr.bf16.mxu0 %v1031
        %4029 = vmatmul.mubr.bf16.gmra.mxu0 %v1017
        %v4030 = vpop.f32.mrf.mxu0
        %v4031 = vadd.f32 %v983, %v4030
        %v4032 = vpop.f32.mrf.mxu0
        %v4033 = vadd.f32 %v987, %v4032
        %v4034 = vpop.f32.mrf.mxu0
        %v4035 = vpop.f32.mrf.mxu0
        %4036 = vdwg.mxu0
        %4037 = vmatprep.subr.bf16.mxu0 %v2739
        %4038 = vmatpush1.bf16.msra.mxu0 %v2738
        %4039 = vmatprep.subr.bf16.mxu0 %v2735
        %4040 = vmatpush1.bf16.msra.mxu0 %v2734
        %4041 = vmatprep.subr.bf16.mxu0 %v2731
        %4042 = vmatpush1.bf16.msra.mxu0 %v2730
        %4043 = vmatprep.subr.bf16.mxu0 %v2727
        %4044 = vmatpush1.bf16.msra.mxu0 %v2726
        %4045 = vmatprep.subr.bf16.mxu0 %v2723
        %4046 = vmatpush1.bf16.msra.mxu0 %v2722
        %4047 = vmatprep.subr.bf16.mxu0 %v2719
        %4048 = vmatpush1.bf16.msra.mxu0 %v2718
        %4049 = vmatprep.subr.bf16.mxu0 %v2715
        %4050 = vmatpush1.bf16.msra.mxu0 %v2714
        %4051 = vmatprep.subr.bf16.mxu0 %v2711
        %4052 = vmatpush1.bf16.msra.mxu0 %v2710
        %4053 = vmatprep.subr.bf16.mxu0 %v2771
        %4054 = vmatpush2.bf16.msra.mxu0 %v2770
        %4055 = vmatprep.subr.bf16.mxu0 %v2767
        %4056 = vmatpush2.bf16.msra.mxu0 %v2766
        %4057 = vmatprep.subr.bf16.mxu0 %v2763
        %4058 = vmatpush2.bf16.msra.mxu0 %v2762
        %4059 = vmatprep.subr.bf16.mxu0 %v2759
        %4060 = vmatpush2.bf16.msra.mxu0 %v2758
        %4061 = vmatprep.subr.bf16.mxu0 %v2755
        %4062 = vmatpush2.bf16.msra.mxu0 %v2754
        %4063 = vmatprep.subr.bf16.mxu0 %v2751
        %4064 = vmatpush2.bf16.msra.mxu0 %v2750
        %4065 = vmatprep.subr.bf16.mxu0 %v2747
        %4066 = vmatpush2.bf16.msra.mxu0 %v2746
        %4067 = vmatprep.subr.bf16.mxu0 %v2743
        %4068 = vmatpush2.bf16.msra.mxu0 %v2742
        %4069 = vmatprep.mubr.bf16.mxu0 %v1041
        %4070 = vmatmul.mubr.bf16.gmra.mxu0 %v1039
        %v4071 = vpop.f32.mrf.mxu0
        %v4072 = vadd.f32 %v4031, %v4071
        %v4073 = vpop.f32.mrf.mxu0
        %v4074 = vadd.f32 %v4033, %v4073
        %v4075 = vpop.f32.mrf.mxu0
        %v4076 = vpop.f32.mrf.mxu0
        %4077 = vdwg.mxu0
        %4078 = vmatprep.subr.bf16.mxu0 %v2803
        %4079 = vmatpush1.bf16.msra.mxu0 %v2802
        %4080 = vmatprep.subr.bf16.mxu0 %v2799
        %4081 = vmatpush1.bf16.msra.mxu0 %v2798
        %4082 = vmatprep.subr.bf16.mxu0 %v2795
        %4083 = vmatpush1.bf16.msra.mxu0 %v2794
        %4084 = vmatprep.subr.bf16.mxu0 %v2791
        %4085 = vmatpush1.bf16.msra.mxu0 %v2790
        %4086 = vmatprep.subr.bf16.mxu0 %v2787
        %4087 = vmatpush1.bf16.msra.mxu0 %v2786
        %4088 = vmatprep.subr.bf16.mxu0 %v2783
        %4089 = vmatpush1.bf16.msra.mxu0 %v2782
        %4090 = vmatprep.subr.bf16.mxu0 %v2779
        %4091 = vmatpush1.bf16.msra.mxu0 %v2778
        %4092 = vmatprep.subr.bf16.mxu0 %v2775
        %4093 = vmatpush1.bf16.msra.mxu0 %v2774
        %4094 = vmatprep.subr.bf16.mxu0 %v2835
        %4095 = vmatpush2.bf16.msra.mxu0 %v2834
        %4096 = vmatprep.subr.bf16.mxu0 %v2831
        %4097 = vmatpush2.bf16.msra.mxu0 %v2830
        %4098 = vmatprep.subr.bf16.mxu0 %v2827
        %4099 = vmatpush2.bf16.msra.mxu0 %v2826
        %4100 = vmatprep.subr.bf16.mxu0 %v2823
        %4101 = vmatpush2.bf16.msra.mxu0 %v2822
        %4102 = vmatprep.subr.bf16.mxu0 %v2819
        %4103 = vmatpush2.bf16.msra.mxu0 %v2818
        %4104 = vmatprep.subr.bf16.mxu0 %v2815
        %4105 = vmatpush2.bf16.msra.mxu0 %v2814
        %4106 = vmatprep.subr.bf16.mxu0 %v2811
        %4107 = vmatpush2.bf16.msra.mxu0 %v2810
        %4108 = vmatprep.subr.bf16.mxu0 %v2807
        %4109 = vmatpush2.bf16.msra.mxu0 %v2806
        %4110 = vmatprep.mubr.bf16.mxu0 %v1038
        %4111 = vmatmul.mubr.bf16.gmra.mxu0 %v1024
        %v4112 = vpop.f32.mrf.mxu0
        %v4113 = vadd.f32 %v4072, %v4112
        %v4114 = vpop.f32.mrf.mxu0
        %v4115 = vadd.f32 %v4074, %v4114
        %v4116 = vpop.f32.mrf.mxu0
        %v4117 = vpop.f32.mrf.mxu0
        %4118 = vdwg.mxu0
        %4119 = vmatprep.subr.bf16.mxu0 %v2867
        %4120 = vmatpush1.bf16.msra.mxu0 %v2866
        %4121 = vmatprep.subr.bf16.mxu0 %v2863
        %4122 = vmatpush1.bf16.msra.mxu0 %v2862
        %4123 = vmatprep.subr.bf16.mxu0 %v2859
        %4124 = vmatpush1.bf16.msra.mxu0 %v2858
        %4125 = vmatprep.subr.bf16.mxu0 %v2855
        %4126 = vmatpush1.bf16.msra.mxu0 %v2854
        %4127 = vmatprep.subr.bf16.mxu0 %v2851
        %4128 = vmatpush1.bf16.msra.mxu0 %v2850
        %4129 = vmatprep.subr.bf16.mxu0 %v2847
        %4130 = vmatpush1.bf16.msra.mxu0 %v2846
        %4131 = vmatprep.subr.bf16.mxu0 %v2843
        %4132 = vmatpush1.bf16.msra.mxu0 %v2842
        %4133 = vmatprep.subr.bf16.mxu0 %v2839
        %4134 = vmatpush1.bf16.msra.mxu0 %v2838
        %4135 = vmatprep.subr.bf16.mxu0 %v2899
        %4136 = vmatpush2.bf16.msra.mxu0 %v2898
        %4137 = vmatprep.subr.bf16.mxu0 %v2895
        %4138 = vmatpush2.bf16.msra.mxu0 %v2894
        %4139 = vmatprep.subr.bf16.mxu0 %v2891
        %4140 = vmatpush2.bf16.msra.mxu0 %v2890
        %4141 = vmatprep.subr.bf16.mxu0 %v2887
        %4142 = vmatpush2.bf16.msra.mxu0 %v2886
        %4143 = vmatprep.subr.bf16.mxu0 %v2883
        %4144 = vmatpush2.bf16.msra.mxu0 %v2882
        %4145 = vmatprep.subr.bf16.mxu0 %v2879
        %4146 = vmatpush2.bf16.msra.mxu0 %v2878
        %4147 = vmatprep.subr.bf16.mxu0 %v2875
        %4148 = vmatpush2.bf16.msra.mxu0 %v2874
        %4149 = vmatprep.subr.bf16.mxu0 %v2871
        %4150 = vmatpush2.bf16.msra.mxu0 %v2870
        %4151 = vmatprep.mubr.bf16.mxu0 %v1042
        %4152 = vmatmul.mubr.bf16.gmra.mxu0 %v1040
        %v4153 = vpop.f32.mrf.mxu0
        %v4154 = vadd.f32 %v4113, %v4153
        %v4155 = vpop.f32.mrf.mxu0
        %v4156 = vadd.f32 %v4115, %v4155
        %v4157 = vpop.f32.mrf.mxu0
        %v4158 = vpop.f32.mrf.mxu0
        %4159 = vdwg.mxu0
        %4160 = vmatprep.subr.bf16.mxu0 %v2931
        %4161 = vmatpush1.bf16.msra.mxu0 %v2930
        %4162 = vmatprep.subr.bf16.mxu0 %v2927
        %4163 = vmatpush1.bf16.msra.mxu0 %v2926
        %4164 = vmatprep.subr.bf16.mxu0 %v2923
        %4165 = vmatpush1.bf16.msra.mxu0 %v2922
        %4166 = vmatprep.subr.bf16.mxu0 %v2919
        %4167 = vmatpush1.bf16.msra.mxu0 %v2918
        %4168 = vmatprep.subr.bf16.mxu0 %v2915
        %4169 = vmatpush1.bf16.msra.mxu0 %v2914
        %4170 = vmatprep.subr.bf16.mxu0 %v2911
        %4171 = vmatpush1.bf16.msra.mxu0 %v2910
        %4172 = vmatprep.subr.bf16.mxu0 %v2907
        %4173 = vmatpush1.bf16.msra.mxu0 %v2906
        %4174 = vmatprep.subr.bf16.mxu0 %v2903
        %4175 = vmatpush1.bf16.msra.mxu0 %v2902
        %4176 = vmatprep.subr.bf16.mxu0 %v2963
        %4177 = vmatpush2.bf16.msra.mxu0 %v2962
        %4178 = vmatprep.subr.bf16.mxu0 %v2959
        %4179 = vmatpush2.bf16.msra.mxu0 %v2958
        %4180 = vmatprep.subr.bf16.mxu0 %v2955
        %4181 = vmatpush2.bf16.msra.mxu0 %v2954
        %4182 = vmatprep.subr.bf16.mxu0 %v2951
        %4183 = vmatpush2.bf16.msra.mxu0 %v2950
        %4184 = vmatprep.subr.bf16.mxu0 %v2947
        %4185 = vmatpush2.bf16.msra.mxu0 %v2946
        %4186 = vmatprep.subr.bf16.mxu0 %v2943
        %4187 = vmatpush2.bf16.msra.mxu0 %v2942
        %4188 = vmatprep.subr.bf16.mxu0 %v2939
        %4189 = vmatpush2.bf16.msra.mxu0 %v2938
        %4190 = vmatprep.subr.bf16.mxu0 %v2935
        %4191 = vmatpush2.bf16.msra.mxu0 %v2934
        %4192 = vmatprep.mubr.bf16.mxu0 %v1080
        %4193 = vmatmul.mubr.bf16.gmra.mxu0 %v1066
        %v4194 = vpop.f32.mrf.mxu0
        %v4195 = vadd.f32 %v4154, %v4194
        %v4196 = vpop.f32.mrf.mxu0
        %v4197 = vadd.f32 %v4156, %v4196
        %v4198 = vpop.f32.mrf.mxu0
        %v4199 = vpop.f32.mrf.mxu0
        %4200 = vdwg.mxu0
        %4201 = vmatprep.subr.bf16.mxu0 %v2995
        %4202 = vmatpush1.bf16.msra.mxu0 %v2994
        %4203 = vmatprep.subr.bf16.mxu0 %v2991
        %4204 = vmatpush1.bf16.msra.mxu0 %v2990
        %4205 = vmatprep.subr.bf16.mxu0 %v2987
        %4206 = vmatpush1.bf16.msra.mxu0 %v2986
        %4207 = vmatprep.subr.bf16.mxu0 %v2983
        %4208 = vmatpush1.bf16.msra.mxu0 %v2982
        %4209 = vmatprep.subr.bf16.mxu0 %v2979
        %4210 = vmatpush1.bf16.msra.mxu0 %v2978
        %4211 = vmatprep.subr.bf16.mxu0 %v2975
        %4212 = vmatpush1.bf16.msra.mxu0 %v2974
        %4213 = vmatprep.subr.bf16.mxu0 %v2971
        %4214 = vmatpush1.bf16.msra.mxu0 %v2970
        %4215 = vmatprep.subr.bf16.mxu0 %v2967
        %4216 = vmatpush1.bf16.msra.mxu0 %v2966
        %4217 = vmatprep.subr.bf16.mxu0 %v3027
        %4218 = vmatpush2.bf16.msra.mxu0 %v3026
        %4219 = vmatprep.subr.bf16.mxu0 %v3023
        %4220 = vmatpush2.bf16.msra.mxu0 %v3022
        %4221 = vmatprep.subr.bf16.mxu0 %v3019
        %4222 = vmatpush2.bf16.msra.mxu0 %v3018
        %4223 = vmatprep.subr.bf16.mxu0 %v3015
        %4224 = vmatpush2.bf16.msra.mxu0 %v3014
        %4225 = vmatprep.subr.bf16.mxu0 %v3011
        %4226 = vmatpush2.bf16.msra.mxu0 %v3010
        %4227 = vmatprep.subr.bf16.mxu0 %v3007
        %4228 = vmatpush2.bf16.msra.mxu0 %v3006
        %4229 = vmatprep.subr.bf16.mxu0 %v3003
        %4230 = vmatpush2.bf16.msra.mxu0 %v3002
        %4231 = vmatprep.subr.bf16.mxu0 %v2999
        %4232 = vmatpush2.bf16.msra.mxu0 %v2998
        %4233 = vmatprep.mubr.bf16.mxu0 %v1090
        %4234 = vmatmul.mubr.bf16.gmra.mxu0 %v1088
        %v4235 = vpop.f32.mrf.mxu0
        %v4236 = vadd.f32 %v4195, %v4235
        %v4237 = vpop.f32.mrf.mxu0
        %v4238 = vadd.f32 %v4197, %v4237
        %v4239 = vpop.f32.mrf.mxu0
        %v4240 = vpop.f32.mrf.mxu0
        %4241 = vdwg.mxu0
        %4242 = vmatprep.subr.bf16.mxu0 %v3059
        %4243 = vmatpush1.bf16.msra.mxu0 %v3058
        %4244 = vmatprep.subr.bf16.mxu0 %v3055
        %4245 = vmatpush1.bf16.msra.mxu0 %v3054
        %4246 = vmatprep.subr.bf16.mxu0 %v3051
        %4247 = vmatpush1.bf16.msra.mxu0 %v3050
        %4248 = vmatprep.subr.bf16.mxu0 %v3047
        %4249 = vmatpush1.bf16.msra.mxu0 %v3046
        %4250 = vmatprep.subr.bf16.mxu0 %v3043
        %4251 = vmatpush1.bf16.msra.mxu0 %v3042
        %4252 = vmatprep.subr.bf16.mxu0 %v3039
        %4253 = vmatpush1.bf16.msra.mxu0 %v3038
        %4254 = vmatprep.subr.bf16.mxu0 %v3035
        %4255 = vmatpush1.bf16.msra.mxu0 %v3034
        %4256 = vmatprep.subr.bf16.mxu0 %v3031
        %4257 = vmatpush1.bf16.msra.mxu0 %v3030
        %4258 = vmatprep.subr.bf16.mxu0 %v3091
        %4259 = vmatpush2.bf16.msra.mxu0 %v3090
        %4260 = vmatprep.subr.bf16.mxu0 %v3087
        %4261 = vmatpush2.bf16.msra.mxu0 %v3086
        %4262 = vmatprep.subr.bf16.mxu0 %v3083
        %4263 = vmatpush2.bf16.msra.mxu0 %v3082
        %4264 = vmatprep.subr.bf16.mxu0 %v3079
        %4265 = vmatpush2.bf16.msra.mxu0 %v3078
        %4266 = vmatprep.subr.bf16.mxu0 %v3075
        %4267 = vmatpush2.bf16.msra.mxu0 %v3074
        %4268 = vmatprep.subr.bf16.mxu0 %v3071
        %4269 = vmatpush2.bf16.msra.mxu0 %v3070
        %4270 = vmatprep.subr.bf16.mxu0 %v3067
        %4271 = vmatpush2.bf16.msra.mxu0 %v3066
        %4272 = vmatprep.subr.bf16.mxu0 %v3063
        %4273 = vmatpush2.bf16.msra.mxu0 %v3062
        %4274 = vmatprep.mubr.bf16.mxu0 %v1087
        %4275 = vmatmul.mubr.bf16.gmra.mxu0 %v1073
        %v4276 = vpop.f32.mrf.mxu0
        %v4277 = vadd.f32 %v4236, %v4276
        %v4278 = vpop.f32.mrf.mxu0
        %v4279 = vadd.f32 %v4238, %v4278
        %v4280 = vpop.f32.mrf.mxu0
        %v4281 = vpop.f32.mrf.mxu0
        %4282 = vdwg.mxu0
        %4283 = vmatprep.subr.bf16.mxu0 %v3123
        %4284 = vmatpush1.bf16.msra.mxu0 %v3122
        %4285 = vmatprep.subr.bf16.mxu0 %v3119
        %4286 = vmatpush1.bf16.msra.mxu0 %v3118
        %4287 = vmatprep.subr.bf16.mxu0 %v3115
        %4288 = vmatpush1.bf16.msra.mxu0 %v3114
        %4289 = vmatprep.subr.bf16.mxu0 %v3111
        %4290 = vmatpush1.bf16.msra.mxu0 %v3110
        %4291 = vmatprep.subr.bf16.mxu0 %v3107
        %4292 = vmatpush1.bf16.msra.mxu0 %v3106
        %4293 = vmatprep.subr.bf16.mxu0 %v3103
        %4294 = vmatpush1.bf16.msra.mxu0 %v3102
        %4295 = vmatprep.subr.bf16.mxu0 %v3099
        %4296 = vmatpush1.bf16.msra.mxu0 %v3098
        %4297 = vmatprep.subr.bf16.mxu0 %v3095
        %4298 = vmatpush1.bf16.msra.mxu0 %v3094
        %4299 = vmatprep.subr.bf16.mxu0 %v3155
        %4300 = vmatpush2.bf16.msra.mxu0 %v3154
        %4301 = vmatprep.subr.bf16.mxu0 %v3151
        %4302 = vmatpush2.bf16.msra.mxu0 %v3150
        %4303 = vmatprep.subr.bf16.mxu0 %v3147
        %4304 = vmatpush2.bf16.msra.mxu0 %v3146
        %4305 = vmatprep.subr.bf16.mxu0 %v3143
        %4306 = vmatpush2.bf16.msra.mxu0 %v3142
        %4307 = vmatprep.subr.bf16.mxu0 %v3139
        %4308 = vmatpush2.bf16.msra.mxu0 %v3138
        %4309 = vmatprep.subr.bf16.mxu0 %v3135
        %4310 = vmatpush2.bf16.msra.mxu0 %v3134
        %4311 = vmatprep.subr.bf16.mxu0 %v3131
        %4312 = vmatpush2.bf16.msra.mxu0 %v3130
        %4313 = vmatprep.subr.bf16.mxu0 %v3127
        %4314 = vmatpush2.bf16.msra.mxu0 %v3126
        %4315 = vmatprep.mubr.bf16.mxu0 %v1091
        %4316 = vmatmul.mubr.bf16.gmra.mxu0 %v1089
        %v4317 = vpop.f32.mrf.mxu0
        %v4318 = vadd.f32 %v4277, %v4317
        %v4319 = vpop.f32.mrf.mxu0
        %v4320 = vadd.f32 %v4279, %v4319
        %v4321 = vpop.f32.mrf.mxu0
        %v4322 = vpop.f32.mrf.mxu0
        %4323 = vdwg.mxu0
        %vm4324 = vcmask 1041408
        %v4325 = vsel %vm4324, %v3990, 0.0
        %v4326 = vrot.slane %v4325, 4
        %v4327 = vadd.f32 %v4325, %v4326
        %v4328 = vrot.slane %v4327, 2
        %v4329 = vadd.f32 %v4327, %v4328
        %v4330 = vrot.slane %v4329, 1
        %v4331 = vadd.f32 %v4329, %v4330
        %v4332 = vsel %vm4324, %v3992, 0.0
        %v4333 = vrot.slane %v4332, 4
        %v4334 = vadd.f32 %v4332, %v4333
        %v4335 = vrot.slane %v4334, 2
        %v4336 = vadd.f32 %v4334, %v4335
        %v4337 = vrot.slane %v4336, 1
        %v4338 = vadd.f32 %v4336, %v4337
        %v4339 = vsel %vm4324, %v4318, 0.0
        %v4340 = vrot.slane %v4339, 4
        %v4341 = vadd.f32 %v4339, %v4340
        %v4342 = vrot.slane %v4341, 2
        %v4343 = vadd.f32 %v4341, %v4342
        %v4344 = vrot.slane %v4343, 1
        %v4345 = vadd.f32 %v4343, %v4344
        %v4346 = vsel %vm4324, %v4320, 0.0
        %v4347 = vrot.slane %v4346, 4
        %v4348 = vadd.f32 %v4346, %v4347
        %v4349 = vrot.slane %v4348, 2
        %v4350 = vadd.f32 %v4348, %v4349
        %v4351 = vrot.slane %v4350, 1
        %v4352 = vadd.f32 %v4350, %v4351
        %v4353 = vrcp.pop 2.0
        %v4354 = vmul.f32 %v4331, %v4353
        %v4355 = vmul.f32 %v4338, %v4353
        %v4356 = vmul.f32 %v4345, %v4353
        %v4357 = vmul.f32 %v4352, %v4353
        %v4358 = vsub.f32 %v3990, %v4354
        %v4359 = vsub.f32 %v3992, %v4355
        %v4360 = vsub.f32 %v4318, %v4356
        %v4361 = vsub.f32 %v4320, %v4357
        %v4362 = vmul.f32 %v4358, %v4358
        %v4363 = vmul.f32 %v4359, %v4359
        %v4364 = vmul.f32 %v4360, %v4360
        %v4365 = vmul.f32 %v4361, %v4361
        %v4366 = vsel %vm4324, %v4362, 0.0
        %v4367 = vrot.slane %v4366, 4
        %v4368 = vadd.f32 %v4366, %v4367
        %v4369 = vrot.slane %v4368, 2
        %v4370 = vadd.f32 %v4368, %v4369
        %v4371 = vrot.slane %v4370, 1
        %v4372 = vadd.f32 %v4370, %v4371
        %v4373 = vsel %vm4324, %v4363, 0.0
        %v4374 = vrot.slane %v4373, 4
        %v4375 = vadd.f32 %v4373, %v4374
        %v4376 = vrot.slane %v4375, 2
        %v4377 = vadd.f32 %v4375, %v4376
        %v4378 = vrot.slane %v4377, 1
        %v4379 = vadd.f32 %v4377, %v4378
        %v4380 = vsel %vm4324, %v4364, 0.0
        %v4381 = vrot.slane %v4380, 4
        %v4382 = vadd.f32 %v4380, %v4381
        %v4383 = vrot.slane %v4382, 2
        %v4384 = vadd.f32 %v4382, %v4383
        %v4385 = vrot.slane %v4384, 1
        %v4386 = vadd.f32 %v4384, %v4385
        %v4387 = vsel %vm4324, %v4365, 0.0
        %v4388 = vrot.slane %v4387, 4
        %v4389 = vadd.f32 %v4387, %v4388
        %v4390 = vrot.slane %v4389, 2
        %v4391 = vadd.f32 %v4389, %v4390
        %v4392 = vrot.slane %v4391, 1
        %v4393 = vadd.f32 %v4391, %v4392
        %v4394 = vmul.f32 %v4372, %v4353
        %v4395 = vmul.f32 %v4379, %v4353
        %v4396 = vmul.f32 %v4386, %v4353
        %v4397 = vmul.f32 %v4393, %v4353
        %v4398 = vld [vmem:[%s377] sm:$0xf]
        %v4400 = vlaneseq
        %v4401 = vshrl.u32 %v4400, 7
        %v4402 = vsub.s32 0, %v4401
        %v4403 = vrot.slane %v4398, %v4402
        %v4404 = vlaneseq
        %v4405 = vshrl.u32 %v4404, 7
        %v4406 = vsub.s32 1, %v4405
        %v4407 = vrot.slane %v4398, %v4406
        %v4408 = vlaneseq
        %v4409 = vshrl.u32 %v4408, 7
        %v4410 = vsub.s32 2, %v4409
        %v4411 = vrot.slane %v4398, %v4410
        %v4412 = vlaneseq
        %v4413 = vshrl.u32 %v4412, 7
        %v4414 = vsub.s32 3, %v4413
        %v4415 = vrot.slane %v4398, %v4414
        %v4420 = vmul.f32 %v4403, %v4358
        %v4421 = vmul.f32 %v4407, %v4359
        %v4422 = vmul.f32 %v4411, %v4360
        %v4423 = vmul.f32 %v4415, %v4361
        %v4424 = vadd.f32 %v4394, 1e-05
        %v4425 = vadd.f32 %v4395, 1e-05
        %v4426 = vadd.f32 %v4396, 1e-05
        %v4427 = vadd.f32 %v4397, 1e-05
        %v4428 = vrsqrt.pop %v4424
        %v4429 = vrsqrt.pop %v4425
        %v4430 = vrsqrt.pop %v4426
        %v4431 = vrsqrt.pop %v4427
        %v4432 = vmul.f32 %v4420, %v4428
        %v4433 = vmul.f32 %v4421, %v4429
        %v4434 = vmul.f32 %v4422, %v4430
        %v4435 = vmul.f32 %v4423, %v4431
        %v4436 = vld [vmem:[%s386] sm:$0xf]
        %v4438 = vlaneseq
        %v4439 = vshrl.u32 %v4438, 7
        %v4440 = vsub.s32 0, %v4439
        %v4441 = vrot.slane %v4436, %v4440
        %v4442 = vlaneseq
        %v4443 = vshrl.u32 %v4442, 7
        %v4444 = vsub.s32 1, %v4443
        %v4445 = vrot.slane %v4436, %v4444
        %v4446 = vlaneseq
        %v4447 = vshrl.u32 %v4446, 7
        %v4448 = vsub.s32 2, %v4447
        %v4449 = vrot.slane %v4436, %v4448
        %v4450 = vlaneseq
        %v4451 = vshrl.u32 %v4450, 7
        %v4452 = vsub.s32 3, %v4451
        %v4453 = vrot.slane %v4436, %v4452
        %v4458 = vadd.f32 %v4432, %v4441
        %v4459 = vadd.f32 %v4433, %v4445
        %v4460 = vadd.f32 %v4434, %v4449
        %v4461 = vadd.f32 %v4435, %v4453
        %v4462 = vmul.f32 %v4458, 0.2
        %v4463 = vmul.f32 %v4459, 0.2
        %v4464 = vmul.f32 %v4460, 0.2
        %v4465 = vmul.f32 %v4461, 0.2
        %v4466 = vmax.f32 %v4458, %v4462
        %v4467 = vmax.f32 %v4459, %v4463
        %v4468 = vmax.f32 %v4460, %v4464
        %v4469 = vmax.f32 %v4461, %v4465
        %v4470 = vld [vmem:[#allocation2] sm:$0x3]
        %v4471 = vpack.c.bf16 %v4466, %v4466
        %v4472 = vpack.c.bf16 %v4467, %v4467
        %v4473 = vpack.c.bf16 %v4468, %v4468
        %v4474 = vpack.c.bf16 %v4469, %v4469
        %v4475 = vld [vmem:[%s395] sm:$0xf]
        %v4476 = vld [vmem:[%s395 + $0x4] sm:$0xf]
        %v4477 = vld [vmem:[%s395 + $0x8] sm:$0xf]
        %v4478 = vld [vmem:[%s395 + $0xc] sm:$0xf]
        %v4479 = vld [vmem:[%s395 + $0x10] sm:$0xf]
        %v4480 = vld [vmem:[%s395 + $0x14] sm:$0xf]
        %v4481 = vld [vmem:[%s395 + $0x18] sm:$0xf]
        %v4482 = vld [vmem:[%s395 + $0x1c] sm:$0xf]
        %v4483 = vld [vmem:[%s395 + $0x20] sm:$0xf]
        %v4484 = vld [vmem:[%s395 + $0x24] sm:$0xf]
        %v4485 = vld [vmem:[%s395 + $0x28] sm:$0xf]
        %v4486 = vld [vmem:[%s395 + $0x2c] sm:$0xf]
        %v4487 = vld [vmem:[%s395 + $0x30] sm:$0xf]
        %v4488 = vld [vmem:[%s395 + $0x34] sm:$0xf]
        %v4489 = vld [vmem:[%s395 + $0x38] sm:$0xf]
        %v4490 = vld [vmem:[%s395 + $0x3c] sm:$0xf]
        %v4491 = vld [vmem:[%s395 + $0x40] sm:$0xf]
        %v4492 = vld [vmem:[%s395 + $0x44] sm:$0xf]
        %v4493 = vld [vmem:[%s395 + $0x48] sm:$0xf]
        %v4494 = vld [vmem:[%s395 + $0x4c] sm:$0xf]
        %v4495 = vld [vmem:[%s395 + $0x50] sm:$0xf]
        %v4496 = vld [vmem:[%s395 + $0x54] sm:$0xf]
        %v4497 = vld [vmem:[%s395 + $0x58] sm:$0xf]
        %v4498 = vld [vmem:[%s395 + $0x5c] sm:$0xf]
        %v4499 = vld [vmem:[%s395 + $0x60] sm:$0xf]
        %v4500 = vld [vmem:[%s395 + $0x64] sm:$0xf]
        %v4501 = vld [vmem:[%s395 + $0x68] sm:$0xf]
        %v4502 = vld [vmem:[%s395 + $0x6c] sm:$0xf]
        %v4503 = vld [vmem:[%s395 + $0x70] sm:$0xf]
        %v4504 = vld [vmem:[%s395 + $0x74] sm:$0xf]
        %v4505 = vld [vmem:[%s395 + $0x78] sm:$0xf]
        %v4506 = vld [vmem:[%s395 + $0x7c] sm:$0xf]
        %v4507 = vld [vmem:[%s395 + $0x80] sm:$0xf]
        %v4508 = vld [vmem:[%s395 + $0x84] sm:$0xf]
        %v4509 = vld [vmem:[%s395 + $0x88] sm:$0xf]
        %v4510 = vld [vmem:[%s395 + $0x8c] sm:$0xf]
        %v4511 = vld [vmem:[%s395 + $0x90] sm:$0xf]
        %v4512 = vld [vmem:[%s395 + $0x94] sm:$0xf]
        %v4513 = vld [vmem:[%s395 + $0x98] sm:$0xf]
        %v4514 = vld [vmem:[%s395 + $0x9c] sm:$0xf]
        %v4515 = vld [vmem:[%s395 + $0xa0] sm:$0xf]
        %v4516 = vld [vmem:[%s395 + $0xa4] sm:$0xf]
        %v4517 = vld [vmem:[%s395 + $0xa8] sm:$0xf]
        %v4518 = vld [vmem:[%s395 + $0xac] sm:$0xf]
        %v4519 = vld [vmem:[%s395 + $0xb0] sm:$0xf]
        %v4520 = vld [vmem:[%s395 + $0xb4] sm:$0xf]
        %v4521 = vld [vmem:[%s395 + $0xb8] sm:$0xf]
        %v4522 = vld [vmem:[%s395 + $0xbc] sm:$0xf]
        %v4523 = vld [vmem:[%s395 + $0xc0] sm:$0xf]
        %v4524 = vld [vmem:[%s395 + $0xc4] sm:$0xf]
        %v4525 = vld [vmem:[%s395 + $0xc8] sm:$0xf]
        %v4526 = vld [vmem:[%s395 + $0xcc] sm:$0xf]
        %v4527 = vld [vmem:[%s395 + $0xd0] sm:$0xf]
        %v4528 = vld [vmem:[%s395 + $0xd4] sm:$0xf]
        %v4529 = vld [vmem:[%s395 + $0xd8] sm:$0xf]
        %v4530 = vld [vmem:[%s395 + $0xdc] sm:$0xf]
        %v4531 = vld [vmem:[%s395 + $0xe0] sm:$0xf]
        %v4532 = vld [vmem:[%s395 + $0xe4] sm:$0xf]
        %v4533 = vld [vmem:[%s395 + $0xe8] sm:$0xf]
        %v4534 = vld [vmem:[%s395 + $0xec] sm:$0xf]
        %v4535 = vld [vmem:[%s395 + $0xf0] sm:$0xf]
        %v4536 = vld [vmem:[%s395 + $0xf4] sm:$0xf]
        %v4537 = vld [vmem:[%s395 + $0xf8] sm:$0xf]
        %v4538 = vld [vmem:[%s395 + $0xfc] sm:$0xf]
        %v4603 = vunpack.c.l.b16 %v4475
        %v4604 = vunpack.c.l.b16 %v4476
        %v4605 = vunpack.c.l.b16 %v4477
        %v4606 = vunpack.c.l.b16 %v4478
        %v4607 = vunpack.c.l.b16 %v4479
        %v4608 = vunpack.c.l.b16 %v4480
        %v4609 = vunpack.c.l.b16 %v4481
        %v4610 = vunpack.c.l.b16 %v4482
        %v4611 = vunpack.c.l.b16 %v4483
        %v4612 = vunpack.c.l.b16 %v4484
        %v4613 = vunpack.c.l.b16 %v4485
        %v4614 = vunpack.c.l.b16 %v4486
        %v4615 = vunpack.c.l.b16 %v4487
        %v4616 = vunpack.c.l.b16 %v4488
        %v4617 = vunpack.c.l.b16 %v4489
        %v4618 = vunpack.c.l.b16 %v4490
        %v4619 = vunpack.c.l.b16 %v4491
        %v4620 = vunpack.c.l.b16 %v4492
        %v4621 = vunpack.c.l.b16 %v4493
        %v4622 = vunpack.c.l.b16 %v4494
        %v4623 = vunpack.c.l.b16 %v4495
        %v4624 = vunpack.c.l.b16 %v4496
        %v4625 = vunpack.c.l.b16 %v4497
        %v4626 = vunpack.c.l.b16 %v4498
        %v4627 = vunpack.c.l.b16 %v4499
        %v4628 = vunpack.c.l.b16 %v4500
        %v4629 = vunpack.c.l.b16 %v4501
        %v4630 = vunpack.c.l.b16 %v4502
        %v4631 = vunpack.c.l.b16 %v4503
        %v4632 = vunpack.c.l.b16 %v4504
        %v4633 = vunpack.c.l.b16 %v4505
        %v4634 = vunpack.c.l.b16 %v4506
        %v4635 = vunpack.c.l.b16 %v4507
        %v4636 = vunpack.c.l.b16 %v4508
        %v4637 = vunpack.c.l.b16 %v4509
        %v4638 = vunpack.c.l.b16 %v4510
        %v4639 = vunpack.c.l.b16 %v4511
        %v4640 = vunpack.c.l.b16 %v4512
        %v4641 = vunpack.c.l.b16 %v4513
        %v4642 = vunpack.c.l.b16 %v4514
        %v4643 = vunpack.c.l.b16 %v4515
        %v4644 = vunpack.c.l.b16 %v4516
        %v4645 = vunpack.c.l.b16 %v4517
        %v4646 = vunpack.c.l.b16 %v4518
        %v4647 = vunpack.c.l.b16 %v4519
        %v4648 = vunpack.c.l.b16 %v4520
        %v4649 = vunpack.c.l.b16 %v4521
        %v4650 = vunpack.c.l.b16 %v4522
        %v4651 = vunpack.c.l.b16 %v4523
        %v4652 = vunpack.c.l.b16 %v4524
        %v4653 = vunpack.c.l.b16 %v4525
        %v4654 = vunpack.c.l.b16 %v4526
        %v4655 = vunpack.c.l.b16 %v4527
        %v4656 = vunpack.c.l.b16 %v4528
        %v4657 = vunpack.c.l.b16 %v4529
        %v4658 = vunpack.c.l.b16 %v4530
        %v4659 = vunpack.c.l.b16 %v4531
        %v4660 = vunpack.c.l.b16 %v4532
        %v4661 = vunpack.c.l.b16 %v4533
        %v4662 = vunpack.c.l.b16 %v4534
        %v4663 = vunpack.c.l.b16 %v4535
        %v4664 = vunpack.c.l.b16 %v4536
        %v4665 = vunpack.c.l.b16 %v4537
        %v4666 = vunpack.c.l.b16 %v4538
        %v4667 = vpack.c.b16 %v4604, %v4603
        %v4668 = vpack.c.b16 %v4606, %v4605
        %v4669 = vpack.c.b16 %v4608, %v4607
        %v4670 = vpack.c.b16 %v4610, %v4609
        %v4671 = vpack.c.b16 %v4612, %v4611
        %v4672 = vpack.c.b16 %v4614, %v4613
        %v4673 = vpack.c.b16 %v4616, %v4615
        %v4674 = vpack.c.b16 %v4618, %v4617
        %v4675 = vpack.c.b16 %v4620, %v4619
        %v4676 = vpack.c.b16 %v4622, %v4621
        %v4677 = vpack.c.b16 %v4624, %v4623
        %v4678 = vpack.c.b16 %v4626, %v4625
        %v4679 = vpack.c.b16 %v4628, %v4627
        %v4680 = vpack.c.b16 %v4630, %v4629
        %v4681 = vpack.c.b16 %v4632, %v4631
        %v4682 = vpack.c.b16 %v4634, %v4633
        %v4683 = vpack.c.b16 %v4636, %v4635
        %v4684 = vpack.c.b16 %v4638, %v4637
        %v4685 = vpack.c.b16 %v4640, %v4639
        %v4686 = vpack.c.b16 %v4642, %v4641
        %v4687 = vpack.c.b16 %v4644, %v4643
        %v4688 = vpack.c.b16 %v4646, %v4645
        %v4689 = vpack.c.b16 %v4648, %v4647
        %v4690 = vpack.c.b16 %v4650, %v4649
        %v4691 = vpack.c.b16 %v4652, %v4651
        %v4692 = vpack.c.b16 %v4654, %v4653
        %v4693 = vpack.c.b16 %v4656, %v4655
        %v4694 = vpack.c.b16 %v4658, %v4657
        %v4695 = vpack.c.b16 %v4660, %v4659
        %v4696 = vpack.c.b16 %v4662, %v4661
        %v4697 = vpack.c.b16 %v4664, %v4663
        %v4698 = vpack.c.b16 %v4666, %v4665
        %4731 = vmatprep.subr.bf16.mxu0 0
        %4732 = vmatpush1.bf16.msra.mxu0 %v4674
        %4733 = vmatprep.subr.bf16.mxu0 0
        %4734 = vmatpush1.bf16.msra.mxu0 %v4673
        %4735 = vmatprep.subr.bf16.mxu0 0
        %4736 = vmatpush1.bf16.msra.mxu0 %v4672
        %4737 = vmatprep.subr.bf16.mxu0 0
        %4738 = vmatpush1.bf16.msra.mxu0 %v4671
        %4739 = vmatprep.subr.bf16.mxu0 0
        %4740 = vmatpush1.bf16.msra.mxu0 %v4670
        %4741 = vmatprep.subr.bf16.mxu0 0
        %4742 = vmatpush1.bf16.msra.mxu0 %v4669
        %4743 = vmatprep.subr.bf16.mxu0 0
        %4744 = vmatpush1.bf16.msra.mxu0 %v4668
        %4745 = vmatprep.subr.bf16.mxu0 0
        %4746 = vmatpush1.bf16.msra.mxu0 %v4667
        %4747 = vmatprep.subr.bf16.mxu0 0
        %4748 = vmatpush2.bf16.msra.mxu0 %v4682
        %4749 = vmatprep.subr.bf16.mxu0 0
        %4750 = vmatpush2.bf16.msra.mxu0 %v4681
        %4751 = vmatprep.subr.bf16.mxu0 0
        %4752 = vmatpush2.bf16.msra.mxu0 %v4680
        %4753 = vmatprep.subr.bf16.mxu0 0
        %4754 = vmatpush2.bf16.msra.mxu0 %v4679
        %4755 = vmatprep.subr.bf16.mxu0 0
        %4756 = vmatpush2.bf16.msra.mxu0 %v4678
        %4757 = vmatprep.subr.bf16.mxu0 0
        %4758 = vmatpush2.bf16.msra.mxu0 %v4677
        %4759 = vmatprep.subr.bf16.mxu0 0
        %4760 = vmatpush2.bf16.msra.mxu0 %v4676
        %4761 = vmatprep.subr.bf16.mxu0 0
        %4762 = vmatpush2.bf16.msra.mxu0 %v4675
        %4763 = vmatprep.mubr.bf16.mxu0 %v4472
        %4764 = vmatmul.mubr.bf16.gmra.mxu0 %v4471
        %v4765 = vpop.f32.mrf.mxu0
        %v4766 = vadd.f32 0.0, %v4765
        %v4767 = vpop.f32.mrf.mxu0
        %v4768 = vpop.f32.mrf.mxu0
        %v4769 = vpop.f32.mrf.mxu0
        %4770 = vdwg.mxu0
        %4771 = vmatprep.subr.bf16.mxu0 0
        %4772 = vmatpush1.bf16.msra.mxu0 %v4690
        %4773 = vmatprep.subr.bf16.mxu0 0
        %4774 = vmatpush1.bf16.msra.mxu0 %v4689
        %4775 = vmatprep.subr.bf16.mxu0 0
        %4776 = vmatpush1.bf16.msra.mxu0 %v4688
        %4777 = vmatprep.subr.bf16.mxu0 0
        %4778 = vmatpush1.bf16.msra.mxu0 %v4687
        %4779 = vmatprep.subr.bf16.mxu0 0
        %4780 = vmatpush1.bf16.msra.mxu0 %v4686
        %4781 = vmatprep.subr.bf16.mxu0 0
        %4782 = vmatpush1.bf16.msra.mxu0 %v4685
        %4783 = vmatprep.subr.bf16.mxu0 0
        %4784 = vmatpush1.bf16.msra.mxu0 %v4684
        %4785 = vmatprep.subr.bf16.mxu0 0
        %4786 = vmatpush1.bf16.msra.mxu0 %v4683
        %4787 = vmatprep.subr.bf16.mxu0 0
        %4788 = vmatpush2.bf16.msra.mxu0 %v4698
        %4789 = vmatprep.subr.bf16.mxu0 0
        %4790 = vmatpush2.bf16.msra.mxu0 %v4697
        %4791 = vmatprep.subr.bf16.mxu0 0
        %4792 = vmatpush2.bf16.msra.mxu0 %v4696
        %4793 = vmatprep.subr.bf16.mxu0 0
        %4794 = vmatpush2.bf16.msra.mxu0 %v4695
        %4795 = vmatprep.subr.bf16.mxu0 0
        %4796 = vmatpush2.bf16.msra.mxu0 %v4694
        %4797 = vmatprep.subr.bf16.mxu0 0
        %4798 = vmatpush2.bf16.msra.mxu0 %v4693
        %4799 = vmatprep.subr.bf16.mxu0 0
        %4800 = vmatpush2.bf16.msra.mxu0 %v4692
        %4801 = vmatprep.subr.bf16.mxu0 0
        %4802 = vmatpush2.bf16.msra.mxu0 %v4691
        %4803 = vmatprep.mubr.bf16.mxu0 %v4474
        %4804 = vmatmul.mubr.bf16.gmra.mxu0 %v4473
        %v4805 = vpop.f32.mrf.mxu0
        %v4806 = vadd.f32 %v4766, %v4805
        %v4807 = vpop.f32.mrf.mxu0
        %v4808 = vpop.f32.mrf.mxu0
        %v4809 = vpop.f32.mrf.mxu0
        %4810 = vdwg.mxu0
        %v4811 = vadd.f32 %v4470, %v4806
        %4812 = vst [vmem:[#allocation2] sm:$0x3] %v4811
        %p4813 = scmp.eq.s32.totalorder %s28, 1
        // Predicated region
        $region77: #{discriminator_forward.5} parent=47 // pred_check
          %p4814 = pneg %p4813
        $region78: #{discriminator_forward.5} parent=47 // pred_check_branch
          %4816 = sbr.rel (%p4814) target = $region80
        $region79: #{discriminator_forward.5} parent=47 // pred_region
          %v4817 = vld [vmem:[#allocation2] sm:$0x3]
          %v4818 = vld [vmem:[#allocation11] sm:$0x1]
          %v4820 = vlaneseq
          %v4821 = vshrl.u32 %v4820, 7
          %v4822 = vsub.s32 0, %v4821
          %v4823 = vrot.slane %v4818, %v4822
          %v4825 = vadd.f32 %v4817, %v4823
          %4826 = vst [vmem:[%s7] sm:$0x3] %v4825
        $region80: #{discriminator_forward.5} parent=47 // pred_fallthru
          _
        // Predicated region
        $region81: #{discriminator_forward.5} parent=47 // pred_check
          %p4827 = pneg %p213
        $region82: #{discriminator_forward.5} parent=47 // pred_check_branch
          %4829 = sbr.rel (%p4827) target = $region84
        $region83: #{discriminator_forward.5} parent=47 // pred_region
          _
        $region84: #{discriminator_forward.5} parent=47 // pred_fallthru
          _
        // Predicated region
        $region85: #{discriminator_forward.5} parent=47 // pred_check
          %p4830 = pneg %p213
        $region86: #{discriminator_forward.5} parent=47 // pred_check_branch
          %4832 = sbr.rel (%p4830) target = $region88
        $region87: #{discriminator_forward.5} parent=47 // pred_region
          _
        $region88: #{discriminator_forward.5} parent=47 // pred_fallthru
          _
      $region48: #{discriminator_forward.5} parent=5 // pred_fallthru
        _
      %p4833 = scmp.le.s32.totalorder 2, %s23
      // Predicated region
      $region89: #{discriminator_forward.5} parent=5 // pred_check
        %p4834 = pneg %p4833
      $region90: #{discriminator_forward.5} parent=5 // pred_check_branch
        %4836 = sbr.rel (%p4834) target = $region92
      $region91: #{discriminator_forward.5} parent=5 // pred_region
        %s4837 = ssub.s32 %s23, 2
      $region92: #{discriminator_forward.5} parent=5 // pred_fallthru
        _
    $region6: #{discriminator_forward.5} parent=1 // loop_footer
      %s27 = sadd.s32 1, %s23
    $region7: #{discriminator_forward.5} parent=1 // loop_footer_branch
      %22 = sbr.rel target = $region3
    $region8: #{discriminator_forward.5} parent=1 // loop_exit
      _
    %4838 = vsyncpa [#allocation4], 1
    %s4839 = scalar_lea.sflag [#allocation4], 1
    %4840 = vsyncpa %s4839, 1
    %4841 = vsyncpa [#allocation6], 1
    %s4842 = scalar_lea.sflag [#allocation6], 1
    %4843 = vsyncpa %s4842, 1
    %4844 = vsyncpa [#allocation9], 1
    %s4845 = scalar_lea.sflag [#allocation9], 1
    %4846 = vsyncpa %s4845, 1
    %4847 = vsyncpa [#allocation12], 1

</llo_original>
